<compile_context>
chip_gen: v5e
topology: v5e:2x2
jax: 0.10.0
libtpu: 0.0.40
codegen_flags: <defaults>
</compile_context>

<pallas_src>
import functools

import jax
import jax.numpy as jnp
import numpy as np
from jax.experimental import pallas as pl
from jax.experimental.pallas import tpu as pltpu

_LANE_BLK = 128  # lane-aligned column block width for the packed projection weights


# --------------------------- fused forward kernel ----------------------------

def _fused_transformer_kernel(*refs, S, D, H, eps):
    (src_ref, tgt_ref,
     mask_k_ref, bd_ref, mask_v_ref,
     w_sa_ref, b_sa_ref,
     e_wo, e_bo, e_g1, e_beta1,
     e_w1, e_b1, e_w2, e_b2, e_g2, e_beta2,
     ds_wo, ds_bo,
     dc_w, dc_b, dc_wo, dc_bo,
     d_g1, d_beta1, d_g2, d_beta2, d_g3, d_beta3,
     d_w1, d_b1, d_w2, d_b2,
     fc_w, fc_b,
     out_ref) = refs

    BLK = _LANE_BLK
    mask_k = mask_k_ref[...]   # [D, H*S]  0 / Dh**-0.5 : per-head key mask, scale folded in
    bd = bd_ref[...]           # [H*S, H*S] block-diagonal "sum within head & broadcast"
    mask_v = mask_v_ref[...]   # [H*S, D]  0/1 per-head value mask

    def linear(x, w_ref, b_ref, relu=False):
        y = jnp.dot(x, w_ref[...], preferred_element_type=jnp.float32) + b_ref[...]
        return jnp.maximum(y, 0.0) if relu else y

    def add_layernorm(x, y, g_ref, b_ref):
        z = x + y
        mu = jnp.mean(z, axis=-1, keepdims=True)
        var = jnp.mean(jnp.square(z - mu), axis=-1, keepdims=True)
        return (z - mu) * jax.lax.rsqrt(var + eps) * g_ref[...] + b_ref[...]

    def attention(q, k, v):
        # Lane-dense masked-matmul MHA: Dh = D/H is tiny (4), so head grouping is
        # done with constant 0/1 matrices instead of head-split 3-D relayouts.
        k_masked = jnp.concatenate([k.T] * H, axis=1) * mask_k              # [D, H*S]
        s = jnp.dot(q, k_masked, preferred_element_type=jnp.float32)        # [S, H*S]
        m = jnp.max(s, axis=-1, keepdims=True)   # shared across heads: softmax unchanged
        p = jnp.exp(s - m)
        denom = jnp.dot(p, bd, preferred_element_type=jnp.float32)          # per-head sums
        p = p * pl.reciprocal(denom, approx=False)   # exact: approx borderline for 1e-3 tol
        v_blk = jnp.concatenate([v] * H, axis=0) * mask_v                   # [H*S, D]
        return jnp.dot(p, v_blk, preferred_element_type=jnp.float32)        # [S, D]

    src = src_ref[0].astype(jnp.float32)   # [S, D] — one batch per grid step
    tgt = tgt_ref[0].astype(jnp.float32)

    # Fused encoder-self + decoder-self QKV projection: ONE MXU dot. Weight
    # blocks are padded to 128 lanes, so every slice below is vreg-aligned.
    x_stack = jnp.concatenate([src, tgt], axis=0)                           # [2S, D]
    qkv = jnp.dot(x_stack, w_sa_ref[...], preferred_element_type=jnp.float32) + b_sa_ref[...]
    e_q = qkv[0:S, 0:D]
    e_k = qkv[0:S, BLK:BLK + D]
    e_v = qkv[0:S, 2 * BLK:2 * BLK + D]
    d_q = qkv[S:2 * S, 3 * BLK:3 * BLK + D]
    d_k = qkv[S:2 * S, 4 * BLK:4 * BLK + D]
    d_v = qkv[S:2 * S, 5 * BLK:5 * BLK + D]

    # ------------------ encoder layer (post-norm) ------------------
    sa = linear(attention(e_q, e_k, e_v), e_wo, e_bo)
    x = add_layernorm(src, sa, e_g1, e_beta1)
    ff = linear(linear(x, e_w1, e_b1, relu=True), e_w2, e_b2)
    mem = add_layernorm(x, ff, e_g2, e_beta2)

    # ------------------ decoder layer (post-norm) ------------------
    sa = linear(attention(d_q, d_k, d_v), ds_wo, ds_bo)
    y = add_layernorm(tgt, sa, d_g1, d_beta1)

    # Fused cross-attention Q (from y) and K/V (from mem) projection: ONE dot.
    x_ca = jnp.concatenate([y, mem], axis=0)                                # [2S, D]
    qkv_c = jnp.dot(x_ca, dc_w[...], preferred_element_type=jnp.float32) + dc_b[...]
    c_q = qkv_c[0:S, 0:D]
    c_k = qkv_c[S:2 * S, BLK:BLK + D]
    c_v = qkv_c[S:2 * S, 2 * BLK:2 * BLK + D]

    ca = linear(attention(c_q, c_k, c_v), dc_wo, dc_bo)
    y = add_layernorm(y, ca, d_g2, d_beta2)
    ff = linear(linear(y, d_w1, d_b1, relu=True), d_w2, d_b2)
    y = add_layernorm(y, ff, d_g3, d_beta3)

    # ------------------ final projection ---------------------------
    # TODO(synk): O=16 < 128 -> masked partial store; pad fc columns in the
    # wrapper if output_size ever grows (lane-dense stores are the big lever).
    out_ref[0] = linear(y, fc_w, fc_b).astype(out_ref.dtype)


# --------------------------- one-time parameter prep --------------------------

def prepare_params(params, nhead, seq_len):
    """One-time prep (outside jit): transpose weights, pack + 128-lane-pad the
    fused QKV projections, reshape biases to rows, and build the constant
    per-head grouping masks consumed by the kernel."""
    enc, dec = params['encoder'], params['decoder']
    D = params['fc_w'].shape[1]
    H, S = nhead, seq_len
    assert D % H == 0 and D <= _LANE_BLK
    Dh = D // H

    def split_qkv(p):
        w, b = p['in_w'], p['in_b']            # torch layout: [3D, D], [3D]
        return ((w[:D].T, w[D:2 * D].T, w[2 * D:].T),
                (b[:D], b[D:2 * D], b[2 * D:]))

    def pad_w(w):                              # [D, D] -> [D, 128]
        return jnp.pad(w, ((0, 0), (0, _LANE_BLK - w.shape[1])))

    def pad_b(b):                              # [D] -> [1, 128]
        return jnp.pad(b.reshape(1, -1), ((0, 0), (0, _LANE_BLK - b.shape[0])))

    (e_wq, e_wk, e_wv), (e_bq, e_bk, e_bv) = split_qkv(enc['self_attn'])
    (s_wq, s_wk, s_wv), (s_bq, s_bk, s_bv) = split_qkv(dec['self_attn'])
    (c_wq, c_wk, c_wv), (c_bq, c_bk, c_bv) = split_qkv(dec['cross_attn'])

    w_sa = jnp.concatenate([pad_w(e_wq), pad_w(e_wk), pad_w(e_wv),
                            pad_w(s_wq), pad_w(s_wk), pad_w(s_wv)], axis=1)   # [D, 768]
    b_sa = jnp.concatenate([pad_b(e_bq), pad_b(e_bk), pad_b(e_bv),
                            pad_b(s_bq), pad_b(s_bk), pad_b(s_bv)], axis=1)   # [1, 768]
    w_ca = jnp.concatenate([pad_w(c_wq), pad_w(c_wk), pad_w(c_wv)], axis=1)   # [D, 384]
    b_ca = jnp.concatenate([pad_b(c_bq), pad_b(c_bk), pad_b(c_bv)], axis=1)   # [1, 384]

    # Constant head-grouping masks (hoisted out of the kernel).
    d_idx = np.arange(D)
    col_head = np.repeat(np.arange(H), S)      # head owning each of the H*S key columns
    mask_k = jnp.asarray(((d_idx[:, None] // Dh) == col_head[None, :]).astype(np.float32)
                         * (Dh ** -0.5))                                       # [D, H*S]
    bd = jnp.asarray((col_head[:, None] == col_head[None, :]).astype(np.float32))       # [H*S, H*S]
    mask_v = jnp.asarray((col_head[:, None] == (d_idx[None, :] // Dh)).astype(np.float32))  # [H*S, D]

    row = lambda a: a.reshape(1, -1)
    return (
        mask_k, bd, mask_v,
        w_sa, b_sa,
        enc['self_attn']['out_w'].T, row(enc['self_attn']['out_b']),
        row(enc['norm1_g']), row(enc['norm1_b']),
        enc['lin1_w'].T, row(enc['lin1_b']),
        enc['lin2_w'].T, row(enc['lin2_b']),
        row(enc['norm2_g']), row(enc['norm2_b']),
        dec['self_attn']['out_w'].T, row(dec['self_attn']['out_b']),
        w_ca, b_ca,
        dec['cross_attn']['out_w'].T, row(dec['cross_attn']['out_b']),
        row(dec['norm1_g']), row(dec['norm1_b']),
        row(dec['norm2_g']), row(dec['norm2_b']),
        row(dec['norm3_g']), row(dec['norm3_b']),
        dec['lin1_w'].T, row(dec['lin1_b']),
        dec['lin2_w'].T, row(dec['lin2_b']),
        params['fc_w'].T, row(params['fc_b']),
    )


# --------------------------- wrapper ------------------------------------------

@functools.partial(jax.jit, static_argnames=("nhead",))
def transformer_forward_pallas(src, tgt, prep, nhead):
    S, B, D = src.shape
    O = prep[-2].shape[1]                       # fc_w is [D, O]

    src_bm = src.transpose(1, 0, 2)             # [B, S, D]: one contiguous block per grid step
    tgt_bm = tgt.transpose(1, 0, 2)

    io_spec = pl.BlockSpec((1, S, D), lambda b: (b, 0, 0))
    full_spec = lambda a: pl.BlockSpec(a.shape, lambda b, n=a.ndim: (0,) * n)

    out_bm = pl.pallas_call(
        functools.partial(_fused_transformer_kernel, S=S, D=D, H=nhead, eps=1e-5),
        grid=(B,),
        out_shape=jax.ShapeDtypeStruct((B, S, O), src.dtype),
        in_specs=[io_spec, io_spec] + [full_spec(a) for a in prep],
        out_specs=pl.BlockSpec((1, S, O), lambda b: (b, 0, 0)),
        compiler_params=pltpu.CompilerParams(
            dimension_semantics=("parallel",),   # independent batches -> both TCs on v7x
        ),
    )(src_bm, tgt_bm, *prep)
    return out_bm.transpose(1, 0, 2)             # back to PyTorch [S, B, O]


# --------------------------- pure-JAX reference -------------------------------

_HP = jax.lax.Precision.HIGHEST


def _ref_layernorm(z, g, b, eps=1e-5):
    mu = jnp.mean(z, axis=-1, keepdims=True)
    var = jnp.mean(jnp.square(z - mu), axis=-1, keepdims=True)
    return (z - mu) * jax.lax.rsqrt(var + eps) * g + b


def _ref_mha(query, key_value, p, nhead):
    Sq, B, D = query.shape
    Sk = key_value.shape[0]
    Dh = D // nhead
    in_w, in_b = p['in_w'], p['in_b']
    q = jnp.dot(query.reshape(Sq * B, D), in_w[:D].T, precision=_HP) + in_b[:D]
    k = jnp.dot(key_value.reshape(Sk * B, D), in_w[D:2 * D].T, precision=_HP) + in_b[D:2 * D]
    v = jnp.dot(key_value.reshape(Sk * B, D), in_w[2 * D:].T, precision=_HP) + in_b[2 * D:]

    def split(x, S):
        return x.reshape(S, B, nhead, Dh).transpose(1, 2, 0, 3)   # [B, H, S, Dh]

    qh, kh, vh = split(q, Sq), split(k, Sk), split(v, Sk)
    s = jnp.einsum('bhqd,bhkd->bhqk', qh, kh, precision=_HP) / (Dh ** 0.5)
    a = jax.nn.softmax(s, axis=-1)
    o = jnp.einsum('bhqk,bhkd->bhqd', a, vh, precision=_HP)
    o = o.transpose(2, 0, 1, 3).reshape(Sq * B, D)
    return (jnp.dot(o, p['out_w'].T, precision=_HP) + p['out_b']).reshape(Sq, B, D)


def _ref_ffn(x2, p):
    h = jnp.maximum(jnp.dot(x2, p['lin1_w'].T, precision=_HP) + p['lin1_b'], 0.0)
    return jnp.dot(h, p['lin2_w'].T, precision=_HP) + p['lin2_b']


def _ref_encoder_layer(x, p, nhead):
    S, B, D = x.shape
    sa = _ref_mha(x, x, p['self_attn'], nhead)
    x2 = _ref_layernorm(x.reshape(S * B, D) + sa.reshape(S * B, D), p['norm1_g'], p['norm1_b'])
    x3 = _ref_layernorm(x2 + _ref_ffn(x2, p), p['norm2_g'], p['norm2_b'])
    return x3.reshape(S, B, D)


def _ref_decoder_layer(x, mem, p, nhead):
    S, B, D = x.shape
    sa = _ref_mha(x, x, p['self_attn'], nhead)
    x2 = _ref_layernorm(x.reshape(S * B, D) + sa.reshape(S * B, D),
                        p['norm1_g'], p['norm1_b']).reshape(S, B, D)
    ca = _ref_mha(x2, mem, p['cross_attn'], nhead)
    x3 = _ref_layernorm(x2.reshape(S * B, D) + ca.reshape(S * B, D), p['norm2_g'], p['norm2_b'])
    x4 = _ref_layernorm(x3 + _ref_ffn(x3, p), p['norm3_g'], p['norm3_b'])
    return x4.reshape(S, B, D)


def reference_forward(src, tgt, params, nhead):
    mem = _ref_encoder_layer(src, params['encoder'], nhead)
    out = _ref_decoder_layer(tgt, mem, params['decoder'], nhead)
    S, B, D = out.shape
    y = jnp.dot(out.reshape(S * B, D), params['fc_w'].T, precision=_HP) + params['fc_b']
    return y.reshape(S, B, -1)


# --------------------------- deterministic params -----------------------------

def _init_attn(key, D):
    k1, k2, k3, k4 = jax.random.split(key, 4)
    return dict(
        in_w=0.05 * jax.random.normal(k1, (3 * D, D), jnp.float32),
        in_b=0.05 * jax.random.normal(k2, (3 * D,), jnp.float32),
        out_w=0.05 * jax.random.normal(k3, (D, D), jnp.float32),
        out_b=0.05 * jax.random.normal(k4, (D,), jnp.float32),
    )


def init_params(key, D, FF, out_size):
    ks = jax.random.split(key, 10)
    enc = dict(
        self_attn=_init_attn(ks[0], D),
        lin1_w=0.05 * jax.random.normal(ks[1], (FF, D), jnp.float32),
        lin1_b=0.05 * jax.random.normal(ks[2], (FF,), jnp.float32),
        lin2_w=0.05 * jax.random.normal(ks[3], (D, FF), jnp.float32),
        lin2_b=0.05 * jax.random.normal(ks[4], (D,), jnp.float32),
        norm1_g=jnp.ones((D,), jnp.float32), norm1_b=jnp.zeros((D,), jnp.float32),
        norm2_g=jnp.ones((D,), jnp.float32), norm2_b=jnp.zeros((D,), jnp.float32),
    )
    dec = dict(
        self_attn=_init_attn(ks[5], D),
        cross_attn=_init_attn(ks[6], D),
        lin1_w=0.05 * jax.random.normal(ks[7], (FF, D), jnp.float32),
        lin1_b=jnp.zeros((FF,), jnp.float32),
        lin2_w=0.05 * jax.random.normal(ks[8], (D, FF), jnp.float32),
        lin2_b=jnp.zeros((D,), jnp.float32),
        norm1_g=jnp.ones((D,), jnp.float32), norm1_b=jnp.zeros((D,), jnp.float32),
        norm2_g=jnp.ones((D,), jnp.float32), norm2_b=jnp.zeros((D,), jnp.float32),
        norm3_g=jnp.ones((D,), jnp.float32), norm3_b=jnp.zeros((D,), jnp.float32),
    )
    fc_w = 0.05 * jax.random.normal(ks[9], (out_size, D), jnp.float32)
    fc_b = jnp.zeros((out_size,), jnp.float32)
    return dict(encoder=enc, decoder=dec, fc_w=fc_w, fc_b=fc_b)


# --------------------------- main ---------------------------------------------

if __name__ == "__main__":
    S, B, hidden, nhead, out_size = 8, 2, 32, 8, 16
    key = jax.random.PRNGKey(0)
    k_p, k_src, k_tgt = jax.random.split(key, 3)
    params = init_params(k_p, hidden, hidden, out_size)
    src = jax.random.normal(k_src, (S, B, hidden), jnp.float32)
    tgt = jax.random.normal(k_tgt, (S, B, hidden), jnp.float32)

    prep = prepare_params(params, nhead=nhead, seq_len=S)   # one-time weight/mask prep (outside jit)

    out = transformer_forward_pallas(src, tgt, prep, nhead=nhead)
    out = jax.block_until_ready(out)
    assert out.shape == (S, B, out_size)

    ref = reference_forward(src, tgt, params, nhead)
    max_err = float(jnp.max(jnp.abs(out - ref)))
    assert max_err < 1e-3, f"mismatch vs reference: {max_err}"

    print("KERNEL_OK")
</pallas_src>

<mosaic_0001>
module attributes {stable_mosaic.version = 11 : i64} {
  func.func @_fused_transformer_kernel(%arg0: i32, %arg1: memref<1x8x32xf32, #tpu.memory_space<vmem>>, %arg2: memref<1x8x32xf32, #tpu.memory_space<vmem>>, %arg3: memref<32x64xf32, #tpu.memory_space<vmem>>, %arg4: memref<64x64xf32, #tpu.memory_space<vmem>>, %arg5: memref<64x32xf32, #tpu.memory_space<vmem>>, %arg6: memref<32x768xf32, #tpu.memory_space<vmem>>, %arg7: memref<1x768xf32, #tpu.memory_space<vmem>>, %arg8: memref<32x32xf32, #tpu.memory_space<vmem>>, %arg9: memref<1x32xf32, #tpu.memory_space<vmem>>, %arg10: memref<1x32xf32, #tpu.memory_space<vmem>>, %arg11: memref<1x32xf32, #tpu.memory_space<vmem>>, %arg12: memref<32x32xf32, #tpu.memory_space<vmem>>, %arg13: memref<1x32xf32, #tpu.memory_space<vmem>>, %arg14: memref<32x32xf32, #tpu.memory_space<vmem>>, %arg15: memref<1x32xf32, #tpu.memory_space<vmem>>, %arg16: memref<1x32xf32, #tpu.memory_space<vmem>>, %arg17: memref<1x32xf32, #tpu.memory_space<vmem>>, %arg18: memref<32x32xf32, #tpu.memory_space<vmem>>, %arg19: memref<1x32xf32, #tpu.memory_space<vmem>>, %arg20: memref<32x384xf32, #tpu.memory_space<vmem>>, %arg21: memref<1x384xf32, #tpu.memory_space<vmem>>, %arg22: memref<32x32xf32, #tpu.memory_space<vmem>>, %arg23: memref<1x32xf32, #tpu.memory_space<vmem>>, %arg24: memref<1x32xf32, #tpu.memory_space<vmem>>, %arg25: memref<1x32xf32, #tpu.memory_space<vmem>>, %arg26: memref<1x32xf32, #tpu.memory_space<vmem>>, %arg27: memref<1x32xf32, #tpu.memory_space<vmem>>, %arg28: memref<1x32xf32, #tpu.memory_space<vmem>>, %arg29: memref<1x32xf32, #tpu.memory_space<vmem>>, %arg30: memref<32x32xf32, #tpu.memory_space<vmem>>, %arg31: memref<1x32xf32, #tpu.memory_space<vmem>>, %arg32: memref<32x32xf32, #tpu.memory_space<vmem>>, %arg33: memref<1x32xf32, #tpu.memory_space<vmem>>, %arg34: memref<32x16xf32, #tpu.memory_space<vmem>>, %arg35: memref<1x16xf32, #tpu.memory_space<vmem>>, %arg36: memref<1x8x16xf32, #tpu.memory_space<vmem>>) attributes {dimension_semantics = [#tpu.dimension_semantics<parallel>], iteration_bounds = array<i64: 2>, scalar_prefetch = 0 : i64, scratch_operands = 0 : i64, tpu.core_type = #tpu.core_type<tc>, window_params = [{transform_indices = @transform_0, window_bounds = array<i64: 1, 8, 32>}, {transform_indices = @transform_1, window_bounds = array<i64: 1, 8, 32>}, {pipeline_mode = #tpu.pipeline_mode<synchronous>, transform_indices = @transform_2, window_bounds = array<i64: 32, 64>}, {pipeline_mode = #tpu.pipeline_mode<synchronous>, transform_indices = @transform_3, window_bounds = array<i64: 64, 64>}, {pipeline_mode = #tpu.pipeline_mode<synchronous>, transform_indices = @transform_4, window_bounds = array<i64: 64, 32>}, {pipeline_mode = #tpu.pipeline_mode<synchronous>, transform_indices = @transform_5, window_bounds = array<i64: 32, 768>}, {pipeline_mode = #tpu.pipeline_mode<synchronous>, transform_indices = @transform_6, window_bounds = array<i64: 1, 768>}, {pipeline_mode = #tpu.pipeline_mode<synchronous>, transform_indices = @transform_7, window_bounds = array<i64: 32, 32>}, {pipeline_mode = #tpu.pipeline_mode<synchronous>, transform_indices = @transform_8, window_bounds = array<i64: 1, 32>}, {pipeline_mode = #tpu.pipeline_mode<synchronous>, transform_indices = @transform_9, window_bounds = array<i64: 1, 32>}, {pipeline_mode = #tpu.pipeline_mode<synchronous>, transform_indices = @transform_10, window_bounds = array<i64: 1, 32>}, {pipeline_mode = #tpu.pipeline_mode<synchronous>, transform_indices = @transform_11, window_bounds = array<i64: 32, 32>}, {pipeline_mode = #tpu.pipeline_mode<synchronous>, transform_indices = @transform_12, window_bounds = array<i64: 1, 32>}, {pipeline_mode = #tpu.pipeline_mode<synchronous>, transform_indices = @transform_13, window_bounds = array<i64: 32, 32>}, {pipeline_mode = #tpu.pipeline_mode<synchronous>, transform_indices = @transform_14, window_bounds = array<i64: 1, 32>}, {pipeline_mode = #tpu.pipeline_mode<synchronous>, transform_indices = @transform_15, window_bounds = array<i64: 1, 32>}, {pipeline_mode = #tpu.pipeline_mode<synchronous>, transform_indices = @transform_16, window_bounds = array<i64: 1, 32>}, {pipeline_mode = #tpu.pipeline_mode<synchronous>, transform_indices = @transform_17, window_bounds = array<i64: 32, 32>}, {pipeline_mode = #tpu.pipeline_mode<synchronous>, transform_indices = @transform_18, window_bounds = array<i64: 1, 32>}, {pipeline_mode = #tpu.pipeline_mode<synchronous>, transform_indices = @transform_19, window_bounds = array<i64: 32, 384>}, {pipeline_mode = #tpu.pipeline_mode<synchronous>, transform_indices = @transform_20, window_bounds = array<i64: 1, 384>}, {pipeline_mode = #tpu.pipeline_mode<synchronous>, transform_indices = @transform_21, window_bounds = array<i64: 32, 32>}, {pipeline_mode = #tpu.pipeline_mode<synchronous>, transform_indices = @transform_22, window_bounds = array<i64: 1, 32>}, {pipeline_mode = #tpu.pipeline_mode<synchronous>, transform_indices = @transform_23, window_bounds = array<i64: 1, 32>}, {pipeline_mode = #tpu.pipeline_mode<synchronous>, transform_indices = @transform_24, window_bounds = array<i64: 1, 32>}, {pipeline_mode = #tpu.pipeline_mode<synchronous>, transform_indices = @transform_25, window_bounds = array<i64: 1, 32>}, {pipeline_mode = #tpu.pipeline_mode<synchronous>, transform_indices = @transform_26, window_bounds = array<i64: 1, 32>}, {pipeline_mode = #tpu.pipeline_mode<synchronous>, transform_indices = @transform_27, window_bounds = array<i64: 1, 32>}, {pipeline_mode = #tpu.pipeline_mode<synchronous>, transform_indices = @transform_28, window_bounds = array<i64: 1, 32>}, {pipeline_mode = #tpu.pipeline_mode<synchronous>, transform_indices = @transform_29, window_bounds = array<i64: 32, 32>}, {pipeline_mode = #tpu.pipeline_mode<synchronous>, transform_indices = @transform_30, window_bounds = array<i64: 1, 32>}, {pipeline_mode = #tpu.pipeline_mode<synchronous>, transform_indices = @transform_31, window_bounds = array<i64: 32, 32>}, {pipeline_mode = #tpu.pipeline_mode<synchronous>, transform_indices = @transform_32, window_bounds = array<i64: 1, 32>}, {pipeline_mode = #tpu.pipeline_mode<synchronous>, transform_indices = @transform_33, window_bounds = array<i64: 32, 16>}, {pipeline_mode = #tpu.pipeline_mode<synchronous>, transform_indices = @transform_34, window_bounds = array<i64: 1, 16>}, {transform_indices = @transform_35, window_bounds = array<i64: 1, 8, 16>}]} {
    %c0 = arith.constant 0 : index
    %c0_0 = arith.constant 0 : index
    %0 = vector.load %arg3[%c0, %c0_0] : memref<32x64xf32, #tpu.memory_space<vmem>>, vector<32x64xf32>
    %c0_1 = arith.constant 0 : index
    %c0_2 = arith.constant 0 : index
    %1 = vector.load %arg4[%c0_1, %c0_2] : memref<64x64xf32, #tpu.memory_space<vmem>>, vector<64x64xf32>
    %c0_3 = arith.constant 0 : index
    %c0_4 = arith.constant 0 : index
    %2 = vector.load %arg5[%c0_3, %c0_4] : memref<64x32xf32, #tpu.memory_space<vmem>>, vector<64x32xf32>
    %c0_5 = arith.constant 0 : index
    %c0_6 = arith.constant 0 : index
    %c0_7 = arith.constant 0 : index
    %3 = vector.load %arg1[%c0_5, %c0_6, %c0_7] : memref<1x8x32xf32, #tpu.memory_space<vmem>>, vector<1x8x32xf32>
    %4 = vector.shape_cast %3 : vector<1x8x32xf32> to vector<8x32xf32>
    %c0_8 = arith.constant 0 : index
    %c0_9 = arith.constant 0 : index
    %c0_10 = arith.constant 0 : index
    %5 = vector.load %arg2[%c0_8, %c0_9, %c0_10] : memref<1x8x32xf32, #tpu.memory_space<vmem>>, vector<1x8x32xf32>
    %6 = vector.shape_cast %5 : vector<1x8x32xf32> to vector<8x32xf32>
    %7 = tpu.concatenate %4, %6 in 0 : vector<8x32xf32>, vector<8x32xf32> -> vector<16x32xf32>
    %c0_11 = arith.constant 0 : index
    %c0_12 = arith.constant 0 : index
    %8 = vector.load %arg6[%c0_11, %c0_12] : memref<32x768xf32, #tpu.memory_space<vmem>>, vector<32x768xf32>
    %cst = arith.constant dense<0.000000e+00> : vector<16x768xf32>
    %9 = tpu.matmul %7, %8, %cst {dimension_numbers = #tpu.dot_dimension_numbers<[1], [0], [0], [1], [0, 0, 1, 1], [], []>} : vector<16x32xf32>, vector<32x768xf32>, vector<16x768xf32> -> vector<16x768xf32>
    %c0_13 = arith.constant 0 : index
    %c0_14 = arith.constant 0 : index
    %10 = vector.load %arg7[%c0_13, %c0_14] : memref<1x768xf32, #tpu.memory_space<vmem>>, vector<1x768xf32>
    %11 = vector.broadcast %10 : vector<1x768xf32> to vector<16x768xf32>
    %12 = arith.addf %9, %11 : vector<16x768xf32>
    %13 = vector.extract_strided_slice %12 {offsets = [0, 0], sizes = [8, 32], strides = [1, 1]} : vector<16x768xf32> to vector<8x32xf32>
    %14 = vector.extract_strided_slice %12 {offsets = [0, 128], sizes = [8, 32], strides = [1, 1]} : vector<16x768xf32> to vector<8x32xf32>
    %15 = vector.extract_strided_slice %12 {offsets = [0, 256], sizes = [8, 32], strides = [1, 1]} : vector<16x768xf32> to vector<8x32xf32>
    %16 = vector.extract_strided_slice %12 {offsets = [8, 384], sizes = [8, 32], strides = [1, 1]} : vector<16x768xf32> to vector<8x32xf32>
    %17 = vector.extract_strided_slice %12 {offsets = [8, 512], sizes = [8, 32], strides = [1, 1]} : vector<16x768xf32> to vector<8x32xf32>
    %18 = vector.extract_strided_slice %12 {offsets = [8, 640], sizes = [8, 32], strides = [1, 1]} : vector<16x768xf32> to vector<8x32xf32>
    %19 = tpu.transpose %14, [1, 0] : vector<8x32xf32> -> vector<32x8xf32>
    %20 = tpu.concatenate %19, %19, %19, %19, %19, %19, %19, %19 in 1 : vector<32x8xf32>, vector<32x8xf32>, vector<32x8xf32>, vector<32x8xf32>, vector<32x8xf32>, vector<32x8xf32>, vector<32x8xf32>, vector<32x8xf32> -> vector<32x64xf32>
    %21 = arith.mulf %20, %0 : vector<32x64xf32>
    %cst_15 = arith.constant dense<0.000000e+00> : vector<8x64xf32>
    %22 = tpu.matmul %13, %21, %cst_15 {dimension_numbers = #tpu.dot_dimension_numbers<[1], [0], [0], [1], [0, 0, 1, 1], [], []>} : vector<8x32xf32>, vector<32x64xf32>, vector<8x64xf32> -> vector<8x64xf32>
    %cst_16 = arith.constant dense<0xFF800000> : vector<8xf32>
    %23 = vector.multi_reduction <maximumf>, %22, %cst_16 [1] : vector<8x64xf32> to vector<8xf32>
    %24 = vector.shape_cast %23 : vector<8xf32> to vector<8x1xf32>
    %25 = vector.broadcast %24 : vector<8x1xf32> to vector<8x64xf32>
    %26 = arith.subf %22, %25 : vector<8x64xf32>
    %27 = math.exp %26 : vector<8x64xf32>
    %cst_17 = arith.constant dense<0.000000e+00> : vector<8x64xf32>
    %28 = tpu.matmul %27, %1, %cst_17 {dimension_numbers = #tpu.dot_dimension_numbers<[1], [0], [0], [1], [0, 0, 1, 1], [], []>} : vector<8x64xf32>, vector<64x64xf32>, vector<8x64xf32> -> vector<8x64xf32>
    %29 = tpu.reciprocal %28 : vector<8x64xf32> -> vector<8x64xf32>
    %30 = arith.mulf %27, %29 : vector<8x64xf32>
    %31 = tpu.concatenate %15, %15, %15, %15, %15, %15, %15, %15 in 0 : vector<8x32xf32>, vector<8x32xf32>, vector<8x32xf32>, vector<8x32xf32>, vector<8x32xf32>, vector<8x32xf32>, vector<8x32xf32>, vector<8x32xf32> -> vector<64x32xf32>
    %32 = arith.mulf %31, %2 : vector<64x32xf32>
    %cst_18 = arith.constant dense<0.000000e+00> : vector<8x32xf32>
    %33 = tpu.matmul %30, %32, %cst_18 {dimension_numbers = #tpu.dot_dimension_numbers<[1], [0], [0], [1], [0, 0, 1, 1], [], []>} : vector<8x64xf32>, vector<64x32xf32>, vector<8x32xf32> -> vector<8x32xf32>
    %c0_19 = arith.constant 0 : index
    %c0_20 = arith.constant 0 : index
    %34 = vector.load %arg8[%c0_19, %c0_20] : memref<32x32xf32, #tpu.memory_space<vmem>>, vector<32x32xf32>
    %cst_21 = arith.constant dense<0.000000e+00> : vector<8x32xf32>
    %35 = tpu.matmul %33, %34, %cst_21 {dimension_numbers = #tpu.dot_dimension_numbers<[1], [0], [0], [1], [0, 0, 1, 1], [], []>} : vector<8x32xf32>, vector<32x32xf32>, vector<8x32xf32> -> vector<8x32xf32>
    %c0_22 = arith.constant 0 : index
    %c0_23 = arith.constant 0 : index
    %36 = vector.load %arg9[%c0_22, %c0_23] : memref<1x32xf32, #tpu.memory_space<vmem>>, vector<1x32xf32>
    %37 = vector.broadcast %36 : vector<1x32xf32> to vector<8x32xf32>
    %38 = arith.addf %35, %37 : vector<8x32xf32>
    %39 = arith.addf %4, %38 : vector<8x32xf32>
    %cst_24 = arith.constant dense<0.000000e+00> : vector<8xf32>
    %40 = vector.multi_reduction <add>, %39, %cst_24 [1] : vector<8x32xf32> to vector<8xf32>
    %41 = vector.shape_cast %40 : vector<8xf32> to vector<8x1xf32>
    %cst_25 = arith.constant 3.200000e+01 : f32
    %42 = vector.broadcast %cst_25 : f32 to vector<8x1xf32>
    %43 = arith.divf %41, %42 : vector<8x1xf32>
    %44 = vector.broadcast %43 : vector<8x1xf32> to vector<8x32xf32>
    %45 = arith.subf %39, %44 : vector<8x32xf32>
    %46 = arith.mulf %45, %45 : vector<8x32xf32>
    %cst_26 = arith.constant dense<0.000000e+00> : vector<8xf32>
    %47 = vector.multi_reduction <add>, %46, %cst_26 [1] : vector<8x32xf32> to vector<8xf32>
    %48 = vector.shape_cast %47 : vector<8xf32> to vector<8x1xf32>
    %cst_27 = arith.constant 3.200000e+01 : f32
    %49 = vector.broadcast %cst_27 : f32 to vector<8x1xf32>
    %50 = arith.divf %48, %49 : vector<8x1xf32>
    %51 = vector.broadcast %43 : vector<8x1xf32> to vector<8x32xf32>
    %52 = arith.subf %39, %51 : vector<8x32xf32>
    %cst_28 = arith.constant 9.99999974E-6 : f32
    %53 = vector.broadcast %cst_28 : f32 to vector<8x1xf32>
    %54 = arith.addf %50, %53 : vector<8x1xf32>
    %55 = math.rsqrt %54 : vector<8x1xf32>
    %56 = vector.broadcast %55 : vector<8x1xf32> to vector<8x32xf32>
    %57 = arith.mulf %52, %56 : vector<8x32xf32>
    %c0_29 = arith.constant 0 : index
    %c0_30 = arith.constant 0 : index
    %58 = vector.load %arg10[%c0_29, %c0_30] : memref<1x32xf32, #tpu.memory_space<vmem>>, vector<1x32xf32>
    %59 = vector.broadcast %58 : vector<1x32xf32> to vector<8x32xf32>
    %60 = arith.mulf %57, %59 : vector<8x32xf32>
    %c0_31 = arith.constant 0 : index
    %c0_32 = arith.constant 0 : index
    %61 = vector.load %arg11[%c0_31, %c0_32] : memref<1x32xf32, #tpu.memory_space<vmem>>, vector<1x32xf32>
    %62 = vector.broadcast %61 : vector<1x32xf32> to vector<8x32xf32>
    %63 = arith.addf %60, %62 : vector<8x32xf32>
    %c0_33 = arith.constant 0 : index
    %c0_34 = arith.constant 0 : index
    %64 = vector.load %arg12[%c0_33, %c0_34] : memref<32x32xf32, #tpu.memory_space<vmem>>, vector<32x32xf32>
    %cst_35 = arith.constant dense<0.000000e+00> : vector<8x32xf32>
    %65 = tpu.matmul %63, %64, %cst_35 {dimension_numbers = #tpu.dot_dimension_numbers<[1], [0], [0], [1], [0, 0, 1, 1], [], []>} : vector<8x32xf32>, vector<32x32xf32>, vector<8x32xf32> -> vector<8x32xf32>
    %c0_36 = arith.constant 0 : index
    %c0_37 = arith.constant 0 : index
    %66 = vector.load %arg13[%c0_36, %c0_37] : memref<1x32xf32, #tpu.memory_space<vmem>>, vector<1x32xf32>
    %67 = vector.broadcast %66 : vector<1x32xf32> to vector<8x32xf32>
    %68 = arith.addf %65, %67 : vector<8x32xf32>
    %cst_38 = arith.constant 0.000000e+00 : f32
    %69 = vector.broadcast %cst_38 : f32 to vector<8x32xf32>
    %70 = arith.maximumf %68, %69 : vector<8x32xf32>
    %c0_39 = arith.constant 0 : index
    %c0_40 = arith.constant 0 : index
    %71 = vector.load %arg14[%c0_39, %c0_40] : memref<32x32xf32, #tpu.memory_space<vmem>>, vector<32x32xf32>
    %cst_41 = arith.constant dense<0.000000e+00> : vector<8x32xf32>
    %72 = tpu.matmul %70, %71, %cst_41 {dimension_numbers = #tpu.dot_dimension_numbers<[1], [0], [0], [1], [0, 0, 1, 1], [], []>} : vector<8x32xf32>, vector<32x32xf32>, vector<8x32xf32> -> vector<8x32xf32>
    %c0_42 = arith.constant 0 : index
    %c0_43 = arith.constant 0 : index
    %73 = vector.load %arg15[%c0_42, %c0_43] : memref<1x32xf32, #tpu.memory_space<vmem>>, vector<1x32xf32>
    %74 = vector.broadcast %73 : vector<1x32xf32> to vector<8x32xf32>
    %75 = arith.addf %72, %74 : vector<8x32xf32>
    %76 = arith.addf %63, %75 : vector<8x32xf32>
    %cst_44 = arith.constant dense<0.000000e+00> : vector<8xf32>
    %77 = vector.multi_reduction <add>, %76, %cst_44 [1] : vector<8x32xf32> to vector<8xf32>
    %78 = vector.shape_cast %77 : vector<8xf32> to vector<8x1xf32>
    %cst_45 = arith.constant 3.200000e+01 : f32
    %79 = vector.broadcast %cst_45 : f32 to vector<8x1xf32>
    %80 = arith.divf %78, %79 : vector<8x1xf32>
    %81 = vector.broadcast %80 : vector<8x1xf32> to vector<8x32xf32>
    %82 = arith.subf %76, %81 : vector<8x32xf32>
    %83 = arith.mulf %82, %82 : vector<8x32xf32>
    %cst_46 = arith.constant dense<0.000000e+00> : vector<8xf32>
    %84 = vector.multi_reduction <add>, %83, %cst_46 [1] : vector<8x32xf32> to vector<8xf32>
    %85 = vector.shape_cast %84 : vector<8xf32> to vector<8x1xf32>
    %cst_47 = arith.constant 3.200000e+01 : f32
    %86 = vector.broadcast %cst_47 : f32 to vector<8x1xf32>
    %87 = arith.divf %85, %86 : vector<8x1xf32>
    %88 = vector.broadcast %80 : vector<8x1xf32> to vector<8x32xf32>
    %89 = arith.subf %76, %88 : vector<8x32xf32>
    %cst_48 = arith.constant 9.99999974E-6 : f32
    %90 = vector.broadcast %cst_48 : f32 to vector<8x1xf32>
    %91 = arith.addf %87, %90 : vector<8x1xf32>
    %92 = math.rsqrt %91 : vector<8x1xf32>
    %93 = vector.broadcast %92 : vector<8x1xf32> to vector<8x32xf32>
    %94 = arith.mulf %89, %93 : vector<8x32xf32>
    %c0_49 = arith.constant 0 : index
    %c0_50 = arith.constant 0 : index
    %95 = vector.load %arg16[%c0_49, %c0_50] : memref<1x32xf32, #tpu.memory_space<vmem>>, vector<1x32xf32>
    %96 = vector.broadcast %95 : vector<1x32xf32> to vector<8x32xf32>
    %97 = arith.mulf %94, %96 : vector<8x32xf32>
    %c0_51 = arith.constant 0 : index
    %c0_52 = arith.constant 0 : index
    %98 = vector.load %arg17[%c0_51, %c0_52] : memref<1x32xf32, #tpu.memory_space<vmem>>, vector<1x32xf32>
    %99 = vector.broadcast %98 : vector<1x32xf32> to vector<8x32xf32>
    %100 = arith.addf %97, %99 : vector<8x32xf32>
    %101 = tpu.transpose %17, [1, 0] : vector<8x32xf32> -> vector<32x8xf32>
    %102 = tpu.concatenate %101, %101, %101, %101, %101, %101, %101, %101 in 1 : vector<32x8xf32>, vector<32x8xf32>, vector<32x8xf32>, vector<32x8xf32>, vector<32x8xf32>, vector<32x8xf32>, vector<32x8xf32>, vector<32x8xf32> -> vector<32x64xf32>
    %103 = arith.mulf %102, %0 : vector<32x64xf32>
    %cst_53 = arith.constant dense<0.000000e+00> : vector<8x64xf32>
    %104 = tpu.matmul %16, %103, %cst_53 {dimension_numbers = #tpu.dot_dimension_numbers<[1], [0], [0], [1], [0, 0, 1, 1], [], []>} : vector<8x32xf32>, vector<32x64xf32>, vector<8x64xf32> -> vector<8x64xf32>
    %cst_54 = arith.constant dense<0xFF800000> : vector<8xf32>
    %105 = vector.multi_reduction <maximumf>, %104, %cst_54 [1] : vector<8x64xf32> to vector<8xf32>
    %106 = vector.shape_cast %105 : vector<8xf32> to vector<8x1xf32>
    %107 = vector.broadcast %106 : vector<8x1xf32> to vector<8x64xf32>
    %108 = arith.subf %104, %107 : vector<8x64xf32>
    %109 = math.exp %108 : vector<8x64xf32>
    %cst_55 = arith.constant dense<0.000000e+00> : vector<8x64xf32>
    %110 = tpu.matmul %109, %1, %cst_55 {dimension_numbers = #tpu.dot_dimension_numbers<[1], [0], [0], [1], [0, 0, 1, 1], [], []>} : vector<8x64xf32>, vector<64x64xf32>, vector<8x64xf32> -> vector<8x64xf32>
    %111 = tpu.reciprocal %110 : vector<8x64xf32> -> vector<8x64xf32>
    %112 = arith.mulf %109, %111 : vector<8x64xf32>
    %113 = tpu.concatenate %18, %18, %18, %18, %18, %18, %18, %18 in 0 : vector<8x32xf32>, vector<8x32xf32>, vector<8x32xf32>, vector<8x32xf32>, vector<8x32xf32>, vector<8x32xf32>, vector<8x32xf32>, vector<8x32xf32> -> vector<64x32xf32>
    %114 = arith.mulf %113, %2 : vector<64x32xf32>
    %cst_56 = arith.constant dense<0.000000e+00> : vector<8x32xf32>
    %115 = tpu.matmul %112, %114, %cst_56 {dimension_numbers = #tpu.dot_dimension_numbers<[1], [0], [0], [1], [0, 0, 1, 1], [], []>} : vector<8x64xf32>, vector<64x32xf32>, vector<8x32xf32> -> vector<8x32xf32>
    %c0_57 = arith.constant 0 : index
    %c0_58 = arith.constant 0 : index
    %116 = vector.load %arg18[%c0_57, %c0_58] : memref<32x32xf32, #tpu.memory_space<vmem>>, vector<32x32xf32>
    %cst_59 = arith.constant dense<0.000000e+00> : vector<8x32xf32>
    %117 = tpu.matmul %115, %116, %cst_59 {dimension_numbers = #tpu.dot_dimension_numbers<[1], [0], [0], [1], [0, 0, 1, 1], [], []>} : vector<8x32xf32>, vector<32x32xf32>, vector<8x32xf32> -> vector<8x32xf32>
    %c0_60 = arith.constant 0 : index
    %c0_61 = arith.constant 0 : index
    %118 = vector.load %arg19[%c0_60, %c0_61] : memref<1x32xf32, #tpu.memory_space<vmem>>, vector<1x32xf32>
    %119 = vector.broadcast %118 : vector<1x32xf32> to vector<8x32xf32>
    %120 = arith.addf %117, %119 : vector<8x32xf32>
    %121 = arith.addf %6, %120 : vector<8x32xf32>
    %cst_62 = arith.constant dense<0.000000e+00> : vector<8xf32>
    %122 = vector.multi_reduction <add>, %121, %cst_62 [1] : vector<8x32xf32> to vector<8xf32>
    %123 = vector.shape_cast %122 : vector<8xf32> to vector<8x1xf32>
    %cst_63 = arith.constant 3.200000e+01 : f32
    %124 = vector.broadcast %cst_63 : f32 to vector<8x1xf32>
    %125 = arith.divf %123, %124 : vector<8x1xf32>
    %126 = vector.broadcast %125 : vector<8x1xf32> to vector<8x32xf32>
    %127 = arith.subf %121, %126 : vector<8x32xf32>
    %128 = arith.mulf %127, %127 : vector<8x32xf32>
    %cst_64 = arith.constant dense<0.000000e+00> : vector<8xf32>
    %129 = vector.multi_reduction <add>, %128, %cst_64 [1] : vector<8x32xf32> to vector<8xf32>
    %130 = vector.shape_cast %129 : vector<8xf32> to vector<8x1xf32>
    %cst_65 = arith.constant 3.200000e+01 : f32
    %131 = vector.broadcast %cst_65 : f32 to vector<8x1xf32>
    %132 = arith.divf %130, %131 : vector<8x1xf32>
    %133 = vector.broadcast %125 : vector<8x1xf32> to vector<8x32xf32>
    %134 = arith.subf %121, %133 : vector<8x32xf32>
    %cst_66 = arith.constant 9.99999974E-6 : f32
    %135 = vector.broadcast %cst_66 : f32 to vector<8x1xf32>
    %136 = arith.addf %132, %135 : vector<8x1xf32>
    %137 = math.rsqrt %136 : vector<8x1xf32>
    %138 = vector.broadcast %137 : vector<8x1xf32> to vector<8x32xf32>
    %139 = arith.mulf %134, %138 : vector<8x32xf32>
    %c0_67 = arith.constant 0 : index
    %c0_68 = arith.constant 0 : index
    %140 = vector.load %arg24[%c0_67, %c0_68] : memref<1x32xf32, #tpu.memory_space<vmem>>, vector<1x32xf32>
    %141 = vector.broadcast %140 : vector<1x32xf32> to vector<8x32xf32>
    %142 = arith.mulf %139, %141 : vector<8x32xf32>
    %c0_69 = arith.constant 0 : index
    %c0_70 = arith.constant 0 : index
    %143 = vector.load %arg25[%c0_69, %c0_70] : memref<1x32xf32, #tpu.memory_space<vmem>>, vector<1x32xf32>
    %144 = vector.broadcast %143 : vector<1x32xf32> to vector<8x32xf32>
    %145 = arith.addf %142, %144 : vector<8x32xf32>
    %146 = tpu.concatenate %145, %100 in 0 : vector<8x32xf32>, vector<8x32xf32> -> vector<16x32xf32>
    %c0_71 = arith.constant 0 : index
    %c0_72 = arith.constant 0 : index
    %147 = vector.load %arg20[%c0_71, %c0_72] : memref<32x384xf32, #tpu.memory_space<vmem>>, vector<32x384xf32>
    %cst_73 = arith.constant dense<0.000000e+00> : vector<16x384xf32>
    %148 = tpu.matmul %146, %147, %cst_73 {dimension_numbers = #tpu.dot_dimension_numbers<[1], [0], [0], [1], [0, 0, 1, 1], [], []>} : vector<16x32xf32>, vector<32x384xf32>, vector<16x384xf32> -> vector<16x384xf32>
    %c0_74 = arith.constant 0 : index
    %c0_75 = arith.constant 0 : index
    %149 = vector.load %arg21[%c0_74, %c0_75] : memref<1x384xf32, #tpu.memory_space<vmem>>, vector<1x384xf32>
    %150 = vector.broadcast %149 : vector<1x384xf32> to vector<16x384xf32>
    %151 = arith.addf %148, %150 : vector<16x384xf32>
    %152 = vector.extract_strided_slice %151 {offsets = [0, 0], sizes = [8, 32], strides = [1, 1]} : vector<16x384xf32> to vector<8x32xf32>
    %153 = vector.extract_strided_slice %151 {offsets = [8, 128], sizes = [8, 32], strides = [1, 1]} : vector<16x384xf32> to vector<8x32xf32>
    %154 = vector.extract_strided_slice %151 {offsets = [8, 256], sizes = [8, 32], strides = [1, 1]} : vector<16x384xf32> to vector<8x32xf32>
    %155 = tpu.transpose %153, [1, 0] : vector<8x32xf32> -> vector<32x8xf32>
    %156 = tpu.concatenate %155, %155, %155, %155, %155, %155, %155, %155 in 1 : vector<32x8xf32>, vector<32x8xf32>, vector<32x8xf32>, vector<32x8xf32>, vector<32x8xf32>, vector<32x8xf32>, vector<32x8xf32>, vector<32x8xf32> -> vector<32x64xf32>
    %157 = arith.mulf %156, %0 : vector<32x64xf32>
    %cst_76 = arith.constant dense<0.000000e+00> : vector<8x64xf32>
    %158 = tpu.matmul %152, %157, %cst_76 {dimension_numbers = #tpu.dot_dimension_numbers<[1], [0], [0], [1], [0, 0, 1, 1], [], []>} : vector<8x32xf32>, vector<32x64xf32>, vector<8x64xf32> -> vector<8x64xf32>
    %cst_77 = arith.constant dense<0xFF800000> : vector<8xf32>
    %159 = vector.multi_reduction <maximumf>, %158, %cst_77 [1] : vector<8x64xf32> to vector<8xf32>
    %160 = vector.shape_cast %159 : vector<8xf32> to vector<8x1xf32>
    %161 = vector.broadcast %160 : vector<8x1xf32> to vector<8x64xf32>
    %162 = arith.subf %158, %161 : vector<8x64xf32>
    %163 = math.exp %162 : vector<8x64xf32>
    %cst_78 = arith.constant dense<0.000000e+00> : vector<8x64xf32>
    %164 = tpu.matmul %163, %1, %cst_78 {dimension_numbers = #tpu.dot_dimension_numbers<[1], [0], [0], [1], [0, 0, 1, 1], [], []>} : vector<8x64xf32>, vector<64x64xf32>, vector<8x64xf32> -> vector<8x64xf32>
    %165 = tpu.reciprocal %164 : vector<8x64xf32> -> vector<8x64xf32>
    %166 = arith.mulf %163, %165 : vector<8x64xf32>
    %167 = tpu.concatenate %154, %154, %154, %154, %154, %154, %154, %154 in 0 : vector<8x32xf32>, vector<8x32xf32>, vector<8x32xf32>, vector<8x32xf32>, vector<8x32xf32>, vector<8x32xf32>, vector<8x32xf32>, vector<8x32xf32> -> vector<64x32xf32>
    %168 = arith.mulf %167, %2 : vector<64x32xf32>
    %cst_79 = arith.constant dense<0.000000e+00> : vector<8x32xf32>
    %169 = tpu.matmul %166, %168, %cst_79 {dimension_numbers = #tpu.dot_dimension_numbers<[1], [0], [0], [1], [0, 0, 1, 1], [], []>} : vector<8x64xf32>, vector<64x32xf32>, vector<8x32xf32> -> vector<8x32xf32>
    %c0_80 = arith.constant 0 : index
    %c0_81 = arith.constant 0 : index
    %170 = vector.load %arg22[%c0_80, %c0_81] : memref<32x32xf32, #tpu.memory_space<vmem>>, vector<32x32xf32>
    %cst_82 = arith.constant dense<0.000000e+00> : vector<8x32xf32>
    %171 = tpu.matmul %169, %170, %cst_82 {dimension_numbers = #tpu.dot_dimension_numbers<[1], [0], [0], [1], [0, 0, 1, 1], [], []>} : vector<8x32xf32>, vector<32x32xf32>, vector<8x32xf32> -> vector<8x32xf32>
    %c0_83 = arith.constant 0 : index
    %c0_84 = arith.constant 0 : index
    %172 = vector.load %arg23[%c0_83, %c0_84] : memref<1x32xf32, #tpu.memory_space<vmem>>, vector<1x32xf32>
    %173 = vector.broadcast %172 : vector<1x32xf32> to vector<8x32xf32>
    %174 = arith.addf %171, %173 : vector<8x32xf32>
    %175 = arith.addf %145, %174 : vector<8x32xf32>
    %cst_85 = arith.constant dense<0.000000e+00> : vector<8xf32>
    %176 = vector.multi_reduction <add>, %175, %cst_85 [1] : vector<8x32xf32> to vector<8xf32>
    %177 = vector.shape_cast %176 : vector<8xf32> to vector<8x1xf32>
    %cst_86 = arith.constant 3.200000e+01 : f32
    %178 = vector.broadcast %cst_86 : f32 to vector<8x1xf32>
    %179 = arith.divf %177, %178 : vector<8x1xf32>
    %180 = vector.broadcast %179 : vector<8x1xf32> to vector<8x32xf32>
    %181 = arith.subf %175, %180 : vector<8x32xf32>
    %182 = arith.mulf %181, %181 : vector<8x32xf32>
    %cst_87 = arith.constant dense<0.000000e+00> : vector<8xf32>
    %183 = vector.multi_reduction <add>, %182, %cst_87 [1] : vector<8x32xf32> to vector<8xf32>
    %184 = vector.shape_cast %183 : vector<8xf32> to vector<8x1xf32>
    %cst_88 = arith.constant 3.200000e+01 : f32
    %185 = vector.broadcast %cst_88 : f32 to vector<8x1xf32>
    %186 = arith.divf %184, %185 : vector<8x1xf32>
    %187 = vector.broadcast %179 : vector<8x1xf32> to vector<8x32xf32>
    %188 = arith.subf %175, %187 : vector<8x32xf32>
    %cst_89 = arith.constant 9.99999974E-6 : f32
    %189 = vector.broadcast %cst_89 : f32 to vector<8x1xf32>
    %190 = arith.addf %186, %189 : vector<8x1xf32>
    %191 = math.rsqrt %190 : vector<8x1xf32>
    %192 = vector.broadcast %191 : vector<8x1xf32> to vector<8x32xf32>
    %193 = arith.mulf %188, %192 : vector<8x32xf32>
    %c0_90 = arith.constant 0 : index
    %c0_91 = arith.constant 0 : index
    %194 = vector.load %arg26[%c0_90, %c0_91] : memref<1x32xf32, #tpu.memory_space<vmem>>, vector<1x32xf32>
    %195 = vector.broadcast %194 : vector<1x32xf32> to vector<8x32xf32>
    %196 = arith.mulf %193, %195 : vector<8x32xf32>
    %c0_92 = arith.constant 0 : index
    %c0_93 = arith.constant 0 : index
    %197 = vector.load %arg27[%c0_92, %c0_93] : memref<1x32xf32, #tpu.memory_space<vmem>>, vector<1x32xf32>
    %198 = vector.broadcast %197 : vector<1x32xf32> to vector<8x32xf32>
    %199 = arith.addf %196, %198 : vector<8x32xf32>
    %c0_94 = arith.constant 0 : index
    %c0_95 = arith.constant 0 : index
    %200 = vector.load %arg30[%c0_94, %c0_95] : memref<32x32xf32, #tpu.memory_space<vmem>>, vector<32x32xf32>
    %cst_96 = arith.constant dense<0.000000e+00> : vector<8x32xf32>
    %201 = tpu.matmul %199, %200, %cst_96 {dimension_numbers = #tpu.dot_dimension_numbers<[1], [0], [0], [1], [0, 0, 1, 1], [], []>} : vector<8x32xf32>, vector<32x32xf32>, vector<8x32xf32> -> vector<8x32xf32>
    %c0_97 = arith.constant 0 : index
    %c0_98 = arith.constant 0 : index
    %202 = vector.load %arg31[%c0_97, %c0_98] : memref<1x32xf32, #tpu.memory_space<vmem>>, vector<1x32xf32>
    %203 = vector.broadcast %202 : vector<1x32xf32> to vector<8x32xf32>
    %204 = arith.addf %201, %203 : vector<8x32xf32>
    %cst_99 = arith.constant 0.000000e+00 : f32
    %205 = vector.broadcast %cst_99 : f32 to vector<8x32xf32>
    %206 = arith.maximumf %204, %205 : vector<8x32xf32>
    %c0_100 = arith.constant 0 : index
    %c0_101 = arith.constant 0 : index
    %207 = vector.load %arg32[%c0_100, %c0_101] : memref<32x32xf32, #tpu.memory_space<vmem>>, vector<32x32xf32>
    %cst_102 = arith.constant dense<0.000000e+00> : vector<8x32xf32>
    %208 = tpu.matmul %206, %207, %cst_102 {dimension_numbers = #tpu.dot_dimension_numbers<[1], [0], [0], [1], [0, 0, 1, 1], [], []>} : vector<8x32xf32>, vector<32x32xf32>, vector<8x32xf32> -> vector<8x32xf32>
    %c0_103 = arith.constant 0 : index
    %c0_104 = arith.constant 0 : index
    %209 = vector.load %arg33[%c0_103, %c0_104] : memref<1x32xf32, #tpu.memory_space<vmem>>, vector<1x32xf32>
    %210 = vector.broadcast %209 : vector<1x32xf32> to vector<8x32xf32>
    %211 = arith.addf %208, %210 : vector<8x32xf32>
    %212 = arith.addf %199, %211 : vector<8x32xf32>
    %cst_105 = arith.constant dense<0.000000e+00> : vector<8xf32>
    %213 = vector.multi_reduction <add>, %212, %cst_105 [1] : vector<8x32xf32> to vector<8xf32>
    %214 = vector.shape_cast %213 : vector<8xf32> to vector<8x1xf32>
    %cst_106 = arith.constant 3.200000e+01 : f32
    %215 = vector.broadcast %cst_106 : f32 to vector<8x1xf32>
    %216 = arith.divf %214, %215 : vector<8x1xf32>
    %217 = vector.broadcast %216 : vector<8x1xf32> to vector<8x32xf32>
    %218 = arith.subf %212, %217 : vector<8x32xf32>
    %219 = arith.mulf %218, %218 : vector<8x32xf32>
    %cst_107 = arith.constant dense<0.000000e+00> : vector<8xf32>
    %220 = vector.multi_reduction <add>, %219, %cst_107 [1] : vector<8x32xf32> to vector<8xf32>
    %221 = vector.shape_cast %220 : vector<8xf32> to vector<8x1xf32>
    %cst_108 = arith.constant 3.200000e+01 : f32
    %222 = vector.broadcast %cst_108 : f32 to vector<8x1xf32>
    %223 = arith.divf %221, %222 : vector<8x1xf32>
    %224 = vector.broadcast %216 : vector<8x1xf32> to vector<8x32xf32>
    %225 = arith.subf %212, %224 : vector<8x32xf32>
    %cst_109 = arith.constant 9.99999974E-6 : f32
    %226 = vector.broadcast %cst_109 : f32 to vector<8x1xf32>
    %227 = arith.addf %223, %226 : vector<8x1xf32>
    %228 = math.rsqrt %227 : vector<8x1xf32>
    %229 = vector.broadcast %228 : vector<8x1xf32> to vector<8x32xf32>
    %230 = arith.mulf %225, %229 : vector<8x32xf32>
    %c0_110 = arith.constant 0 : index
    %c0_111 = arith.constant 0 : index
    %231 = vector.load %arg28[%c0_110, %c0_111] : memref<1x32xf32, #tpu.memory_space<vmem>>, vector<1x32xf32>
    %232 = vector.broadcast %231 : vector<1x32xf32> to vector<8x32xf32>
    %233 = arith.mulf %230, %232 : vector<8x32xf32>
    %c0_112 = arith.constant 0 : index
    %c0_113 = arith.constant 0 : index
    %234 = vector.load %arg29[%c0_112, %c0_113] : memref<1x32xf32, #tpu.memory_space<vmem>>, vector<1x32xf32>
    %235 = vector.broadcast %234 : vector<1x32xf32> to vector<8x32xf32>
    %236 = arith.addf %233, %235 : vector<8x32xf32>
    %c0_114 = arith.constant 0 : index
    %c0_115 = arith.constant 0 : index
    %237 = vector.load %arg34[%c0_114, %c0_115] : memref<32x16xf32, #tpu.memory_space<vmem>>, vector<32x16xf32>
    %cst_116 = arith.constant dense<0.000000e+00> : vector<8x16xf32>
    %238 = tpu.matmul %236, %237, %cst_116 {dimension_numbers = #tpu.dot_dimension_numbers<[1], [0], [0], [1], [0, 0, 1, 1], [], []>} : vector<8x32xf32>, vector<32x16xf32>, vector<8x16xf32> -> vector<8x16xf32>
    %c0_117 = arith.constant 0 : index
    %c0_118 = arith.constant 0 : index
    %239 = vector.load %arg35[%c0_117, %c0_118] : memref<1x16xf32, #tpu.memory_space<vmem>>, vector<1x16xf32>
    %240 = vector.broadcast %239 : vector<1x16xf32> to vector<8x16xf32>
    %241 = arith.addf %238, %240 : vector<8x16xf32>
    %c0_119 = arith.constant 0 : index
    %c0_120 = arith.constant 0 : index
    %c0_121 = arith.constant 0 : index
    %242 = vector.load %arg36[%c0_119, %c0_120, %c0_121] : memref<1x8x16xf32, #tpu.memory_space<vmem>>, vector<1x8x16xf32>
    %243 = vector.shape_cast %242 : vector<1x8x16xf32> to vector<8x16xf32>
    %244 = vector.shape_cast %241 : vector<8x16xf32> to vector<1x8x16xf32>
    tpu.vector_store %arg36[%c0_119, %c0_120, %c0_121], %244 {strides = array<i32>} : memref<1x8x16xf32, #tpu.memory_space<vmem>>, vector<1x8x16xf32>,
    return
  }
  func.func @transform_0(%arg0: i32) -> (i32, i32, i32) {
    %c0_i32 = arith.constant 0 : i32
    %c0_i32_0 = arith.constant 0 : i32
    %c0_i32_1 = arith.constant 0 : i32
    return %arg0, %c0_i32, %c0_i32_0 : i32, i32, i32
  }
  func.func @transform_1(%arg0: i32) -> (i32, i32, i32) {
    %c0_i32 = arith.constant 0 : i32
    %c0_i32_0 = arith.constant 0 : i32
    %c0_i32_1 = arith.constant 0 : i32
    return %arg0, %c0_i32, %c0_i32_0 : i32, i32, i32
  }
  func.func @transform_2(%arg0: i32) -> (i32, i32) {
    %c0_i32 = arith.constant 0 : i32
    %c0_i32_0 = arith.constant 0 : i32
    %c0_i32_1 = arith.constant 0 : i32
    return %c0_i32, %c0_i32_0 : i32, i32
  }
  func.func @transform_3(%arg0: i32) -> (i32, i32) {
    %c0_i32 = arith.constant 0 : i32
    %c0_i32_0 = arith.constant 0 : i32
    %c0_i32_1 = arith.constant 0 : i32
    return %c0_i32, %c0_i32_0 : i32, i32
  }
  func.func @transform_4(%arg0: i32) -> (i32, i32) {
    %c0_i32 = arith.constant 0 : i32
    %c0_i32_0 = arith.constant 0 : i32
    %c0_i32_1 = arith.constant 0 : i32
    return %c0_i32, %c0_i32_0 : i32, i32
  }
  func.func @transform_5(%arg0: i32) -> (i32, i32) {
    %c0_i32 = arith.constant 0 : i32
    %c0_i32_0 = arith.constant 0 : i32
    %c0_i32_1 = arith.constant 0 : i32
    return %c0_i32, %c0_i32_0 : i32, i32
  }
  func.func @transform_6(%arg0: i32) -> (i32, i32) {
    %c0_i32 = arith.constant 0 : i32
    %c0_i32_0 = arith.constant 0 : i32
    %c0_i32_1 = arith.constant 0 : i32
    return %c0_i32, %c0_i32_0 : i32, i32
  }
  func.func @transform_7(%arg0: i32) -> (i32, i32) {
    %c0_i32 = arith.constant 0 : i32
    %c0_i32_0 = arith.constant 0 : i32
    %c0_i32_1 = arith.constant 0 : i32
    return %c0_i32, %c0_i32_0 : i32, i32
  }
  func.func @transform_8(%arg0: i32) -> (i32, i32) {
    %c0_i32 = arith.constant 0 : i32
    %c0_i32_0 = arith.constant 0 : i32
    %c0_i32_1 = arith.constant 0 : i32
    return %c0_i32, %c0_i32_0 : i32, i32
  }
  func.func @transform_9(%arg0: i32) -> (i32, i32) {
    %c0_i32 = arith.constant 0 : i32
    %c0_i32_0 = arith.constant 0 : i32
    %c0_i32_1 = arith.constant 0 : i32
    return %c0_i32, %c0_i32_0 : i32, i32
  }
  func.func @transform_10(%arg0: i32) -> (i32, i32) {
    %c0_i32 = arith.constant 0 : i32
    %c0_i32_0 = arith.constant 0 : i32
    %c0_i32_1 = arith.constant 0 : i32
    return %c0_i32, %c0_i32_0 : i32, i32
  }
  func.func @transform_11(%arg0: i32) -> (i32, i32) {
    %c0_i32 = arith.constant 0 : i32
    %c0_i32_0 = arith.constant 0 : i32
    %c0_i32_1 = arith.constant 0 : i32
    return %c0_i32, %c0_i32_0 : i32, i32
  }
  func.func @transform_12(%arg0: i32) -> (i32, i32) {
    %c0_i32 = arith.constant 0 : i32
    %c0_i32_0 = arith.constant 0 : i32
    %c0_i32_1 = arith.constant 0 : i32
    return %c0_i32, %c0_i32_0 : i32, i32
  }
  func.func @transform_13(%arg0: i32) -> (i32, i32) {
    %c0_i32 = arith.constant 0 : i32
    %c0_i32_0 = arith.constant 0 : i32
    %c0_i32_1 = arith.constant 0 : i32
    return %c0_i32, %c0_i32_0 : i32, i32
  }
  func.func @transform_14(%arg0: i32) -> (i32, i32) {
    %c0_i32 = arith.constant 0 : i32
    %c0_i32_0 = arith.constant 0 : i32
    %c0_i32_1 = arith.constant 0 : i32
    return %c0_i32, %c0_i32_0 : i32, i32
  }
  func.func @transform_15(%arg0: i32) -> (i32, i32) {
    %c0_i32 = arith.constant 0 : i32
    %c0_i32_0 = arith.constant 0 : i32
    %c0_i32_1 = arith.constant 0 : i32
    return %c0_i32, %c0_i32_0 : i32, i32
  }
  func.func @transform_16(%arg0: i32) -> (i32, i32) {
    %c0_i32 = arith.constant 0 : i32
    %c0_i32_0 = arith.constant 0 : i32
    %c0_i32_1 = arith.constant 0 : i32
    return %c0_i32, %c0_i32_0 : i32, i32
  }
  func.func @transform_17(%arg0: i32) -> (i32, i32) {
    %c0_i32 = arith.constant 0 : i32
    %c0_i32_0 = arith.constant 0 : i32
    %c0_i32_1 = arith.constant 0 : i32
    return %c0_i32, %c0_i32_0 : i32, i32
  }
  func.func @transform_18(%arg0: i32) -> (i32, i32) {
    %c0_i32 = arith.constant 0 : i32
    %c0_i32_0 = arith.constant 0 : i32
    %c0_i32_1 = arith.constant 0 : i32
    return %c0_i32, %c0_i32_0 : i32, i32
  }
  func.func @transform_19(%arg0: i32) -> (i32, i32) {
    %c0_i32 = arith.constant 0 : i32
    %c0_i32_0 = arith.constant 0 : i32
    %c0_i32_1 = arith.constant 0 : i32
    return %c0_i32, %c0_i32_0 : i32, i32
  }
  func.func @transform_20(%arg0: i32) -> (i32, i32) {
    %c0_i32 = arith.constant 0 : i32
    %c0_i32_0 = arith.constant 0 : i32
    %c0_i32_1 = arith.constant 0 : i32
    return %c0_i32, %c0_i32_0 : i32, i32
  }
  func.func @transform_21(%arg0: i32) -> (i32, i32) {
    %c0_i32 = arith.constant 0 : i32
    %c0_i32_0 = arith.constant 0 : i32
    %c0_i32_1 = arith.constant 0 : i32
    return %c0_i32, %c0_i32_0 : i32, i32
  }
  func.func @transform_22(%arg0: i32) -> (i32, i32) {
    %c0_i32 = arith.constant 0 : i32
    %c0_i32_0 = arith.constant 0 : i32
    %c0_i32_1 = arith.constant 0 : i32
    return %c0_i32, %c0_i32_0 : i32, i32
  }
  func.func @transform_23(%arg0: i32) -> (i32, i32) {
    %c0_i32 = arith.constant 0 : i32
    %c0_i32_0 = arith.constant 0 : i32
    %c0_i32_1 = arith.constant 0 : i32
    return %c0_i32, %c0_i32_0 : i32, i32
  }
  func.func @transform_24(%arg0: i32) -> (i32, i32) {
    %c0_i32 = arith.constant 0 : i32
    %c0_i32_0 = arith.constant 0 : i32
    %c0_i32_1 = arith.constant 0 : i32
    return %c0_i32, %c0_i32_0 : i32, i32
  }
  func.func @transform_25(%arg0: i32) -> (i32, i32) {
    %c0_i32 = arith.constant 0 : i32
    %c0_i32_0 = arith.constant 0 : i32
    %c0_i32_1 = arith.constant 0 : i32
    return %c0_i32, %c0_i32_0 : i32, i32
  }
  func.func @transform_26(%arg0: i32) -> (i32, i32) {
    %c0_i32 = arith.constant 0 : i32
    %c0_i32_0 = arith.constant 0 : i32
    %c0_i32_1 = arith.constant 0 : i32
    return %c0_i32, %c0_i32_0 : i32, i32
  }
  func.func @transform_27(%arg0: i32) -> (i32, i32) {
    %c0_i32 = arith.constant 0 : i32
    %c0_i32_0 = arith.constant 0 : i32
    %c0_i32_1 = arith.constant 0 : i32
    return %c0_i32, %c0_i32_0 : i32, i32
  }
  func.func @transform_28(%arg0: i32) -> (i32, i32) {
    %c0_i32 = arith.constant 0 : i32
    %c0_i32_0 = arith.constant 0 : i32
    %c0_i32_1 = arith.constant 0 : i32
    return %c0_i32, %c0_i32_0 : i32, i32
  }
  func.func @transform_29(%arg0: i32) -> (i32, i32) {
    %c0_i32 = arith.constant 0 : i32
    %c0_i32_0 = arith.constant 0 : i32
    %c0_i32_1 = arith.constant 0 : i32
    return %c0_i32, %c0_i32_0 : i32, i32
  }
  func.func @transform_30(%arg0: i32) -> (i32, i32) {
    %c0_i32 = arith.constant 0 : i32
    %c0_i32_0 = arith.constant 0 : i32
    %c0_i32_1 = arith.constant 0 : i32
    return %c0_i32, %c0_i32_0 : i32, i32
  }
  func.func @transform_31(%arg0: i32) -> (i32, i32) {
    %c0_i32 = arith.constant 0 : i32
    %c0_i32_0 = arith.constant 0 : i32
    %c0_i32_1 = arith.constant 0 : i32
    return %c0_i32, %c0_i32_0 : i32, i32
  }
  func.func @transform_32(%arg0: i32) -> (i32, i32) {
    %c0_i32 = arith.constant 0 : i32
    %c0_i32_0 = arith.constant 0 : i32
    %c0_i32_1 = arith.constant 0 : i32
    return %c0_i32, %c0_i32_0 : i32, i32
  }
  func.func @transform_33(%arg0: i32) -> (i32, i32) {
    %c0_i32 = arith.constant 0 : i32
    %c0_i32_0 = arith.constant 0 : i32
    %c0_i32_1 = arith.constant 0 : i32
    return %c0_i32, %c0_i32_0 : i32, i32
  }
  func.func @transform_34(%arg0: i32) -> (i32, i32) {
    %c0_i32 = arith.constant 0 : i32
    %c0_i32_0 = arith.constant 0 : i32
    %c0_i32_1 = arith.constant 0 : i32
    return %c0_i32, %c0_i32_0 : i32, i32
  }
  func.func @transform_35(%arg0: i32) -> (i32, i32, i32) {
    %c0_i32 = arith.constant 0 : i32
    %c0_i32_0 = arith.constant 0 : i32
    %c0_i32_1 = arith.constant 0 : i32
    return %arg0, %c0_i32, %c0_i32_0 : i32, i32, i32
  }
}

</mosaic_0001>

<llo_original>
// kernel: transformer_forward_pallas.1
$region0: #{transformer_forward_pallas.1}
  #allocation0 [shape = 'u32[]', space=smem, size = 0x4, offset = 0x4, fixed_abs, tag = 'smem constant byte address 0x4 - core index']
  #allocation1 [shape = 'u32[72,128]{1,0:T(1,128)}', space=vmem, size = 0x9000, scoped, tag = 'internal scratch']
  %s0 = inlined_call_operand.smem [shape: u32[36], index: -1, kind: input, shape index: {}]
  %s1 = sld [smem:[%s0]]
  %s2 = scalar_lea.smem %s0, 1
  %s3 = sld [smem:[%s2]]
  %s4 = scalar_lea.smem %s0, 2
  %s5 = sld [smem:[%s4]]
  %s6 = scalar_lea.smem %s0, 3
  %s7 = sld [smem:[%s6]]
  %s8 = scalar_lea.smem %s0, 4
  %s9 = sld [smem:[%s8]]
  %s10 = scalar_lea.smem %s0, 5
  %s11 = sld [smem:[%s10]]
  %s12 = scalar_lea.smem %s0, 6
  %s13 = sld [smem:[%s12]]
  %s14 = scalar_lea.smem %s0, 7
  %s15 = sld [smem:[%s14]]
  %s16 = scalar_lea.smem %s0, 8
  %s17 = sld [smem:[%s16]]
  %s18 = scalar_lea.smem %s0, 9
  %s19 = sld [smem:[%s18]]
  %s20 = scalar_lea.smem %s0, 10
  %s21 = sld [smem:[%s20]]
  %s22 = scalar_lea.smem %s0, 11
  %s23 = sld [smem:[%s22]]
  %s24 = scalar_lea.smem %s0, 12
  %s25 = sld [smem:[%s24]]
  %s26 = scalar_lea.smem %s0, 13
  %s27 = sld [smem:[%s26]]
  %s28 = scalar_lea.smem %s0, 14
  %s29 = sld [smem:[%s28]]
  %s30 = scalar_lea.smem %s0, 15
  %s31 = sld [smem:[%s30]]
  %s32 = scalar_lea.smem %s0, 16
  %s33 = sld [smem:[%s32]]
  %s34 = scalar_lea.smem %s0, 17
  %s35 = sld [smem:[%s34]]
  %s36 = scalar_lea.smem %s0, 18
  %s37 = sld [smem:[%s36]]
  %s38 = scalar_lea.smem %s0, 19
  %s39 = sld [smem:[%s38]]
  %s40 = scalar_lea.smem %s0, 20
  %s41 = sld [smem:[%s40]]
  %s42 = scalar_lea.smem %s0, 21
  %s43 = sld [smem:[%s42]]
  %s44 = scalar_lea.smem %s0, 22
  %s45 = sld [smem:[%s44]]
  %s46 = scalar_lea.smem %s0, 23
  %s47 = sld [smem:[%s46]]
  %s48 = scalar_lea.smem %s0, 24
  %s49 = sld [smem:[%s48]]
  %s50 = scalar_lea.smem %s0, 25
  %s51 = sld [smem:[%s50]]
  %s52 = scalar_lea.smem %s0, 26
  %s53 = sld [smem:[%s52]]
  %s54 = scalar_lea.smem %s0, 27
  %s55 = sld [smem:[%s54]]
  %s56 = scalar_lea.smem %s0, 28
  %s57 = sld [smem:[%s56]]
  %s58 = scalar_lea.smem %s0, 29
  %s59 = sld [smem:[%s58]]
  %s60 = scalar_lea.smem %s0, 30
  %s61 = sld [smem:[%s60]]
  %s62 = scalar_lea.smem %s0, 31
  %s63 = sld [smem:[%s62]]
  %s64 = scalar_lea.smem %s0, 32
  %s65 = sld [smem:[%s64]]
  %s66 = scalar_lea.smem %s0, 33
  %s67 = sld [smem:[%s66]]
  %s68 = scalar_lea.smem %s0, 34
  %s69 = sld [smem:[%s68]]
  %s70 = scalar_lea.smem %s0, 35
  %s71 = sld [smem:[%s70]]
  %s72 = sld [smem:[#allocation0]]
  $region241: #{transformer_forward_pallas.1} parent=0
    _
  %s74 = ssub.s32 1, %s72
  %s75 = scalar_select 0, %s74, %s72
  $region1: #{transformer_forward_pallas.1} parent=0
    #allocation2 [shape = 'u8[32768]{0}', space=vmem, size = 0x8000, scoped, tag = 'input window, operand 3, single buffered']
    #allocation3 [shape = 's32[2]{0}', space=sflag, size = 0x8, scoped, tag = 'scoped memory for transformer_forward_pallas.1']
    #allocation4 [shape = 'u8[98304]{0}', space=vmem, size = 0x18000, scoped, tag = 'input window, operand 5, single buffered']
    #allocation5 [shape = 's32[1]{0}', space=sflag, size = 0x4, scoped, tag = 'scoped memory for transformer_forward_pallas.1']
    #allocation6 [shape = 'u8[3072]{0}', space=vmem, size = 0xc00, scoped, tag = 'input window, operand 6, single buffered']
    #allocation7 [shape = 'u8[16384]{0}', space=vmem, size = 0x4000, scoped, tag = 'input window, operand 7, single buffered']
    #allocation8 [shape = 's32[1]{0}', space=sflag, size = 0x4, scoped, tag = 'scoped memory for transformer_forward_pallas.1']
    #allocation9 [shape = 'u8[512]{0}', space=vmem, size = 0x400, scoped, tag = 'input window, operand 9, single buffered']
    #allocation10 [shape = 'u8[512]{0}', space=vmem, size = 0x400, scoped, tag = 'input window, operand 10, single buffered']
    #allocation11 [shape = 's32[1]{0}', space=sflag, size = 0x4, scoped, tag = 'scoped memory for transformer_forward_pallas.1']
    #allocation12 [shape = 'u8[16384]{0}', space=vmem, size = 0x4000, scoped, tag = 'input window, operand 11, single buffered']
    #allocation13 [shape = 'u8[512]{0}', space=vmem, size = 0x400, scoped, tag = 'input window, operand 12, single buffered']
    #allocation14 [shape = 's32[1]{0}', space=sflag, size = 0x4, scoped, tag = 'scoped memory for transformer_forward_pallas.1']
    #allocation15 [shape = 'u8[16384]{0}', space=vmem, size = 0x4000, scoped, tag = 'input window, operand 13, single buffered']
    #allocation16 [shape = 'u8[512]{0}', space=vmem, size = 0x400, scoped, tag = 'input window, operand 14, single buffered']
    #allocation17 [shape = 's32[1]{0}', space=sflag, size = 0x4, scoped, tag = 'scoped memory for transformer_forward_pallas.1']
    #allocation18 [shape = 'u8[512]{0}', space=vmem, size = 0x400, scoped, tag = 'input window, operand 15, single buffered']
    #allocation19 [shape = 'u8[512]{0}', space=vmem, size = 0x400, scoped, tag = 'input window, operand 16, single buffered']
    #allocation20 [shape = 's32[1]{0}', space=sflag, size = 0x4, scoped, tag = 'scoped memory for transformer_forward_pallas.1']
    #allocation21 [shape = 'u8[16384]{0}', space=vmem, size = 0x4000, scoped, tag = 'input window, operand 17, single buffered']
    #allocation22 [shape = 'u8[512]{0}', space=vmem, size = 0x400, scoped, tag = 'input window, operand 18, single buffered']
    #allocation23 [shape = 's32[1]{0}', space=sflag, size = 0x4, scoped, tag = 'scoped memory for transformer_forward_pallas.1']
    #allocation24 [shape = 'u8[1536]{0}', space=vmem, size = 0x800, scoped, tag = 'input window, operand 20, single buffered']
    #allocation25 [shape = 'u8[16384]{0}', space=vmem, size = 0x4000, scoped, tag = 'input window, operand 29, single buffered']
    #allocation26 [shape = 's32[1]{0}', space=sflag, size = 0x4, scoped, tag = 'scoped memory for transformer_forward_pallas.1']
    #allocation27 [shape = 'u8[16384]{0}', space=vmem, size = 0x4000, scoped, tag = 'input window, operand 31, single buffered']
    %76 = vsyncpa [#allocation3], 0
    %77 = vsyncpa [#allocation5], 0
    %78 = vsyncpa [#allocation8], 0
    %79 = vsyncpa [#allocation11], 0
    %80 = vsyncpa [#allocation14], 0
    %81 = vsyncpa [#allocation17], 0
    %82 = vsyncpa [#allocation20], 0
    %83 = vsyncpa [#allocation23], 0
    %84 = vsyncpa [#allocation26], 0
    loop: start=0, step=1, limit=4
    $region2: #{transformer_forward_pallas.1} parent=1 // loop_pre_header
      _
    $region3: #{transformer_forward_pallas.1} parent=1 // loop_header
      %s86 = sphi 0, %s90
      %p87 = scmp.ge.s32.totalorder %s86, 4
      %s96 = sphi 0, %s98
      %s99 = sphi 0, %s96
      %s100 = sphi 0, %s99
      %s116 = sphi 0, %s100
      %s122 = sphi 0, %s124
      %s125 = sphi 0, %s122
      %s126 = sphi 0, %s125
      %s142 = sphi 0, %s126
      %s146 = sphi 0, %s146
      %s148 = sphi 0, %s146
      %s149 = sphi 0, %s148
      %s163 = sphi 0, %s149
      %s167 = sphi 0, %s167
      %s169 = sphi 0, %s167
      %s170 = sphi 0, %s169
      %s184 = sphi 0, %s170
      %s188 = sphi 0, %s188
      %s190 = sphi 0, %s188
      %s191 = sphi 0, %s190
      %s205 = sphi 0, %s191
      %s209 = sphi 0, %s209
      %s211 = sphi 0, %s209
      %s212 = sphi 0, %s211
      %s226 = sphi 0, %s212
      %s230 = sphi 0, %s230
      %s232 = sphi 0, %s230
      %s233 = sphi 0, %s232
      %s247 = sphi 0, %s233
      %s251 = sphi 0, %s251
      %s253 = sphi 0, %s251
      %s254 = sphi 0, %s253
      %s268 = sphi 0, %s254
      %s272 = sphi 0, %s272
      %s274 = sphi 0, %s272
      %s275 = sphi 0, %s274
      %s289 = sphi 0, %s275
      %s293 = sphi 0, %s293
      %s295 = sphi 0, %s293
      %s296 = sphi 0, %s295
      %s310 = sphi 0, %s296
      %s314 = sphi 0, %s314
      %s316 = sphi 0, %s314
      %s317 = sphi 0, %s316
      %s331 = sphi 0, %s317
      %s335 = sphi 0, %s335
      %s337 = sphi 0, %s335
      %s338 = sphi 0, %s337
      %s352 = sphi 0, %s338
      %s356 = sphi 0, %s356
      %s358 = sphi 0, %s356
      %s359 = sphi 0, %s358
      %s373 = sphi 0, %s359
      %s377 = sphi 0, %s377
      %s379 = sphi 0, %s377
      %s380 = sphi 0, %s379
      %s394 = sphi 0, %s380
      %s398 = sphi 0, %s398
      %s400 = sphi 0, %s398
      %s401 = sphi 0, %s400
      %s415 = sphi 0, %s401
      %s419 = sphi 0, %s419
      %s421 = sphi 0, %s419
      %s422 = sphi 0, %s421
      %s436 = sphi 0, %s422
      %s440 = sphi 0, %s440
      %s442 = sphi 0, %s440
      %s443 = sphi 0, %s442
      %s457 = sphi 0, %s443
      %s461 = sphi 0, %s461
      %s463 = sphi 0, %s461
      %s464 = sphi 0, %s463
      %s478 = sphi 0, %s464
      %s482 = sphi 0, %s482
      %s484 = sphi 0, %s482
      %s485 = sphi 0, %s484
      %s499 = sphi 0, %s485
      %s503 = sphi 0, %s503
      %s505 = sphi 0, %s503
      %s506 = sphi 0, %s505
      %s520 = sphi 0, %s506
      %s524 = sphi 0, %s524
      %s526 = sphi 0, %s524
      %s527 = sphi 0, %s526
      %s541 = sphi 0, %s527
      %s545 = sphi 0, %s545
      %s547 = sphi 0, %s545
      %s548 = sphi 0, %s547
      %s562 = sphi 0, %s548
      %s566 = sphi 0, %s566
      %s568 = sphi 0, %s566
      %s569 = sphi 0, %s568
      %s583 = sphi 0, %s569
      %s587 = sphi 0, %s587
      %s589 = sphi 0, %s587
      %s590 = sphi 0, %s589
      %s604 = sphi 0, %s590
      %s608 = sphi 0, %s608
      %s610 = sphi 0, %s608
      %s611 = sphi 0, %s610
      %s625 = sphi 0, %s611
      %s629 = sphi 0, %s629
      %s631 = sphi 0, %s629
      %s632 = sphi 0, %s631
      %s646 = sphi 0, %s632
      %s650 = sphi 0, %s650
      %s652 = sphi 0, %s650
      %s653 = sphi 0, %s652
      %s667 = sphi 0, %s653
      %s671 = sphi 0, %s671
      %s673 = sphi 0, %s671
      %s674 = sphi 0, %s673
      %s688 = sphi 0, %s674
      %s692 = sphi 0, %s692
      %s694 = sphi 0, %s692
      %s695 = sphi 0, %s694
      %s709 = sphi 0, %s695
      %s713 = sphi 0, %s713
      %s715 = sphi 0, %s713
      %s716 = sphi 0, %s715
      %s730 = sphi 0, %s716
      %s734 = sphi 0, %s734
      %s736 = sphi 0, %s734
      %s737 = sphi 0, %s736
      %s751 = sphi 0, %s737
      %s755 = sphi 0, %s755
      %s757 = sphi 0, %s755
      %s758 = sphi 0, %s757
      %s772 = sphi 0, %s758
      %s776 = sphi 0, %s776
      %s778 = sphi 0, %s776
      %s779 = sphi 0, %s778
      %s793 = sphi 0, %s779
      %s797 = sphi 0, %s797
      %s799 = sphi 0, %s797
      %s800 = sphi 0, %s799
      %s814 = sphi 0, %s800
      %s818 = sphi 0, %s818
      %s820 = sphi 0, %s818
      %s821 = sphi 0, %s820
      %s835 = sphi 0, %s821
      %s841 = sphi 0, %s843
      %s844 = sphi 0, %s841
      %s845 = sphi 0, %s844
      %s861 = sphi 0, %s845
    $region4: #{transformer_forward_pallas.1} parent=1 // loop_header_branch
      %89 = sbr.rel (%p87) target = $region8
    $region5: #{transformer_forward_pallas.1} parent=1 // loop_body
      %s91 = ssub.s32 %s86, 1
      %s92 = ssub.s32 %s86, 2
      %s93 = sadd.s32 %s86, 1
      %s94 = ssub.s32 %s86, %s93
      %p95 = scmp.eq.s32.totalorder %s94, 0
      %s97 = sadd.s32 %s96, 1
      %s98 = scalar_select %p95, %s96, %s97
      %p101 = pneg %p95
      %p102 = scmp.eq.s32.totalorder %s86, 1
      %p103 = por %p101, %p102
      %p104 = scmp.ne.s32.totalorder %s96, %s99
      %p105 = scmp.eq.s32.totalorder %s86, 0
      %p106 = por %p104, %p105
      %p107 = scmp.ne.s32.totalorder %s96, %s99
      %p108 = scmp.eq.s32.totalorder %s91, 1
      %p109 = por %p107, %p108
      %p110 = scmp.ne.s32.totalorder %s99, %s100
      %p111 = scmp.eq.s32.totalorder %s91, 0
      %p112 = por %p110, %p111
      %p113 = scmp.ne.s32.totalorder %s99, %s100
      %p114 = scmp.eq.s32.totalorder %s92, 1
      %p115 = por %p113, %p114
      %p117 = scmp.ne.s32.totalorder %s100, %s116
      %p118 = scmp.eq.s32.totalorder %s92, 0
      %p119 = por %p117, %p118
      %s120 = ssub.s32 %s86, %s93
      %p121 = scmp.eq.s32.totalorder %s120, 0
      %s123 = sadd.s32 %s122, 1
      %s124 = scalar_select %p121, %s122, %s123
      %p127 = pneg %p121
      %p128 = scmp.eq.s32.totalorder %s86, 1
      %p129 = por %p127, %p128
      %p130 = scmp.ne.s32.totalorder %s122, %s125
      %p131 = scmp.eq.s32.totalorder %s86, 0
      %p132 = por %p130, %p131
      %p133 = scmp.ne.s32.totalorder %s122, %s125
      %p134 = scmp.eq.s32.totalorder %s91, 1
      %p135 = por %p133, %p134
      %p136 = scmp.ne.s32.totalorder %s125, %s126
      %p137 = scmp.eq.s32.totalorder %s91, 0
      %p138 = por %p136, %p137
      %p139 = scmp.ne.s32.totalorder %s125, %s126
      %p140 = scmp.eq.s32.totalorder %s92, 1
      %p141 = por %p139, %p140
      %p143 = scmp.ne.s32.totalorder %s126, %s142
      %p144 = scmp.eq.s32.totalorder %s92, 0
      %p145 = por %p143, %p144
      %s147 = sadd.s32 %s146, 1
      %p150 = scmp.eq.s32.totalorder %s86, 1
      %p151 = scmp.ne.s32.totalorder %s146, %s148
      %p152 = scmp.eq.s32.totalorder %s86, 0
      %p153 = por %p151, %p152
      %p154 = scmp.ne.s32.totalorder %s146, %s148
      %p155 = scmp.eq.s32.totalorder %s91, 1
      %p156 = por %p154, %p155
      %p157 = scmp.ne.s32.totalorder %s148, %s149
      %p158 = scmp.eq.s32.totalorder %s91, 0
      %p159 = por %p157, %p158
      %p160 = scmp.ne.s32.totalorder %s148, %s149
      %p161 = scmp.eq.s32.totalorder %s92, 1
      %p162 = por %p160, %p161
      %p164 = scmp.ne.s32.totalorder %s149, %s163
      %p165 = scmp.eq.s32.totalorder %s92, 0
      %p166 = por %p164, %p165
      %s168 = sadd.s32 %s167, 1
      %p171 = scmp.eq.s32.totalorder %s86, 1
      %p172 = scmp.ne.s32.totalorder %s167, %s169
      %p173 = scmp.eq.s32.totalorder %s86, 0
      %p174 = por %p172, %p173
      %p175 = scmp.ne.s32.totalorder %s167, %s169
      %p176 = scmp.eq.s32.totalorder %s91, 1
      %p177 = por %p175, %p176
      %p178 = scmp.ne.s32.totalorder %s169, %s170
      %p179 = scmp.eq.s32.totalorder %s91, 0
      %p180 = por %p178, %p179
      %p181 = scmp.ne.s32.totalorder %s169, %s170
      %p182 = scmp.eq.s32.totalorder %s92, 1
      %p183 = por %p181, %p182
      %p185 = scmp.ne.s32.totalorder %s170, %s184
      %p186 = scmp.eq.s32.totalorder %s92, 0
      %p187 = por %p185, %p186
      %s189 = sadd.s32 %s188, 1
      %p192 = scmp.eq.s32.totalorder %s86, 1
      %p193 = scmp.ne.s32.totalorder %s188, %s190
      %p194 = scmp.eq.s32.totalorder %s86, 0
      %p195 = por %p193, %p194
      %p196 = scmp.ne.s32.totalorder %s188, %s190
      %p197 = scmp.eq.s32.totalorder %s91, 1
      %p198 = por %p196, %p197
      %p199 = scmp.ne.s32.totalorder %s190, %s191
      %p200 = scmp.eq.s32.totalorder %s91, 0
      %p201 = por %p199, %p200
      %p202 = scmp.ne.s32.totalorder %s190, %s191
      %p203 = scmp.eq.s32.totalorder %s92, 1
      %p204 = por %p202, %p203
      %p206 = scmp.ne.s32.totalorder %s191, %s205
      %p207 = scmp.eq.s32.totalorder %s92, 0
      %p208 = por %p206, %p207
      %s210 = sadd.s32 %s209, 1
      %p213 = scmp.eq.s32.totalorder %s86, 1
      %p214 = scmp.ne.s32.totalorder %s209, %s211
      %p215 = scmp.eq.s32.totalorder %s86, 0
      %p216 = por %p214, %p215
      %p217 = scmp.ne.s32.totalorder %s209, %s211
      %p218 = scmp.eq.s32.totalorder %s91, 1
      %p219 = por %p217, %p218
      %p220 = scmp.ne.s32.totalorder %s211, %s212
      %p221 = scmp.eq.s32.totalorder %s91, 0
      %p222 = por %p220, %p221
      %p223 = scmp.ne.s32.totalorder %s211, %s212
      %p224 = scmp.eq.s32.totalorder %s92, 1
      %p225 = por %p223, %p224
      %p227 = scmp.ne.s32.totalorder %s212, %s226
      %p228 = scmp.eq.s32.totalorder %s92, 0
      %p229 = por %p227, %p228
      %s231 = sadd.s32 %s230, 1
      %p234 = scmp.eq.s32.totalorder %s86, 1
      %p235 = scmp.ne.s32.totalorder %s230, %s232
      %p236 = scmp.eq.s32.totalorder %s86, 0
      %p237 = por %p235, %p236
      %p238 = scmp.ne.s32.totalorder %s230, %s232
      %p239 = scmp.eq.s32.totalorder %s91, 1
      %p240 = por %p238, %p239
      %p241 = scmp.ne.s32.totalorder %s232, %s233
      %p242 = scmp.eq.s32.totalorder %s91, 0
      %p243 = por %p241, %p242
      %p244 = scmp.ne.s32.totalorder %s232, %s233
      %p245 = scmp.eq.s32.totalorder %s92, 1
      %p246 = por %p244, %p245
      %p248 = scmp.ne.s32.totalorder %s233, %s247
      %p249 = scmp.eq.s32.totalorder %s92, 0
      %p250 = por %p248, %p249
      %s252 = sadd.s32 %s251, 1
      %p255 = scmp.eq.s32.totalorder %s86, 1
      %p256 = scmp.ne.s32.totalorder %s251, %s253
      %p257 = scmp.eq.s32.totalorder %s86, 0
      %p258 = por %p256, %p257
      %p259 = scmp.ne.s32.totalorder %s251, %s253
      %p260 = scmp.eq.s32.totalorder %s91, 1
      %p261 = por %p259, %p260
      %p262 = scmp.ne.s32.totalorder %s253, %s254
      %p263 = scmp.eq.s32.totalorder %s91, 0
      %p264 = por %p262, %p263
      %p265 = scmp.ne.s32.totalorder %s253, %s254
      %p266 = scmp.eq.s32.totalorder %s92, 1
      %p267 = por %p265, %p266
      %p269 = scmp.ne.s32.totalorder %s254, %s268
      %p270 = scmp.eq.s32.totalorder %s92, 0
      %p271 = por %p269, %p270
      %s273 = sadd.s32 %s272, 1
      %p276 = scmp.eq.s32.totalorder %s86, 1
      %p277 = scmp.ne.s32.totalorder %s272, %s274
      %p278 = scmp.eq.s32.totalorder %s86, 0
      %p279 = por %p277, %p278
      %p280 = scmp.ne.s32.totalorder %s272, %s274
      %p281 = scmp.eq.s32.totalorder %s91, 1
      %p282 = por %p280, %p281
      %p283 = scmp.ne.s32.totalorder %s274, %s275
      %p284 = scmp.eq.s32.totalorder %s91, 0
      %p285 = por %p283, %p284
      %p286 = scmp.ne.s32.totalorder %s274, %s275
      %p287 = scmp.eq.s32.totalorder %s92, 1
      %p288 = por %p286, %p287
      %p290 = scmp.ne.s32.totalorder %s275, %s289
      %p291 = scmp.eq.s32.totalorder %s92, 0
      %p292 = por %p290, %p291
      %s294 = sadd.s32 %s293, 1
      %p297 = scmp.eq.s32.totalorder %s86, 1
      %p298 = scmp.ne.s32.totalorder %s293, %s295
      %p299 = scmp.eq.s32.totalorder %s86, 0
      %p300 = por %p298, %p299
      %p301 = scmp.ne.s32.totalorder %s293, %s295
      %p302 = scmp.eq.s32.totalorder %s91, 1
      %p303 = por %p301, %p302
      %p304 = scmp.ne.s32.totalorder %s295, %s296
      %p305 = scmp.eq.s32.totalorder %s91, 0
      %p306 = por %p304, %p305
      %p307 = scmp.ne.s32.totalorder %s295, %s296
      %p308 = scmp.eq.s32.totalorder %s92, 1
      %p309 = por %p307, %p308
      %p311 = scmp.ne.s32.totalorder %s296, %s310
      %p312 = scmp.eq.s32.totalorder %s92, 0
      %p313 = por %p311, %p312
      %s315 = sadd.s32 %s314, 1
      %p318 = scmp.eq.s32.totalorder %s86, 1
      %p319 = scmp.ne.s32.totalorder %s314, %s316
      %p320 = scmp.eq.s32.totalorder %s86, 0
      %p321 = por %p319, %p320
      %p322 = scmp.ne.s32.totalorder %s314, %s316
      %p323 = scmp.eq.s32.totalorder %s91, 1
      %p324 = por %p322, %p323
      %p325 = scmp.ne.s32.totalorder %s316, %s317
      %p326 = scmp.eq.s32.totalorder %s91, 0
      %p327 = por %p325, %p326
      %p328 = scmp.ne.s32.totalorder %s316, %s317
      %p329 = scmp.eq.s32.totalorder %s92, 1
      %p330 = por %p328, %p329
      %p332 = scmp.ne.s32.totalorder %s317, %s331
      %p333 = scmp.eq.s32.totalorder %s92, 0
      %p334 = por %p332, %p333
      %s336 = sadd.s32 %s335, 1
      %p339 = scmp.eq.s32.totalorder %s86, 1
      %p340 = scmp.ne.s32.totalorder %s335, %s337
      %p341 = scmp.eq.s32.totalorder %s86, 0
      %p342 = por %p340, %p341
      %p343 = scmp.ne.s32.totalorder %s335, %s337
      %p344 = scmp.eq.s32.totalorder %s91, 1
      %p345 = por %p343, %p344
      %p346 = scmp.ne.s32.totalorder %s337, %s338
      %p347 = scmp.eq.s32.totalorder %s91, 0
      %p348 = por %p346, %p347
      %p349 = scmp.ne.s32.totalorder %s337, %s338
      %p350 = scmp.eq.s32.totalorder %s92, 1
      %p351 = por %p349, %p350
      %p353 = scmp.ne.s32.totalorder %s338, %s352
      %p354 = scmp.eq.s32.totalorder %s92, 0
      %p355 = por %p353, %p354
      %s357 = sadd.s32 %s356, 1
      %p360 = scmp.eq.s32.totalorder %s86, 1
      %p361 = scmp.ne.s32.totalorder %s356, %s358
      %p362 = scmp.eq.s32.totalorder %s86, 0
      %p363 = por %p361, %p362
      %p364 = scmp.ne.s32.totalorder %s356, %s358
      %p365 = scmp.eq.s32.totalorder %s91, 1
      %p366 = por %p364, %p365
      %p367 = scmp.ne.s32.totalorder %s358, %s359
      %p368 = scmp.eq.s32.totalorder %s91, 0
      %p369 = por %p367, %p368
      %p370 = scmp.ne.s32.totalorder %s358, %s359
      %p371 = scmp.eq.s32.totalorder %s92, 1
      %p372 = por %p370, %p371
      %p374 = scmp.ne.s32.totalorder %s359, %s373
      %p375 = scmp.eq.s32.totalorder %s92, 0
      %p376 = por %p374, %p375
      %s378 = sadd.s32 %s377, 1
      %p381 = scmp.eq.s32.totalorder %s86, 1
      %p382 = scmp.ne.s32.totalorder %s377, %s379
      %p383 = scmp.eq.s32.totalorder %s86, 0
      %p384 = por %p382, %p383
      %p385 = scmp.ne.s32.totalorder %s377, %s379
      %p386 = scmp.eq.s32.totalorder %s91, 1
      %p387 = por %p385, %p386
      %p388 = scmp.ne.s32.totalorder %s379, %s380
      %p389 = scmp.eq.s32.totalorder %s91, 0
      %p390 = por %p388, %p389
      %p391 = scmp.ne.s32.totalorder %s379, %s380
      %p392 = scmp.eq.s32.totalorder %s92, 1
      %p393 = por %p391, %p392
      %p395 = scmp.ne.s32.totalorder %s380, %s394
      %p396 = scmp.eq.s32.totalorder %s92, 0
      %p397 = por %p395, %p396
      %s399 = sadd.s32 %s398, 1
      %p402 = scmp.eq.s32.totalorder %s86, 1
      %p403 = scmp.ne.s32.totalorder %s398, %s400
      %p404 = scmp.eq.s32.totalorder %s86, 0
      %p405 = por %p403, %p404
      %p406 = scmp.ne.s32.totalorder %s398, %s400
      %p407 = scmp.eq.s32.totalorder %s91, 1
      %p408 = por %p406, %p407
      %p409 = scmp.ne.s32.totalorder %s400, %s401
      %p410 = scmp.eq.s32.totalorder %s91, 0
      %p411 = por %p409, %p410
      %p412 = scmp.ne.s32.totalorder %s400, %s401
      %p413 = scmp.eq.s32.totalorder %s92, 1
      %p414 = por %p412, %p413
      %p416 = scmp.ne.s32.totalorder %s401, %s415
      %p417 = scmp.eq.s32.totalorder %s92, 0
      %p418 = por %p416, %p417
      %s420 = sadd.s32 %s419, 1
      %p423 = scmp.eq.s32.totalorder %s86, 1
      %p424 = scmp.ne.s32.totalorder %s419, %s421
      %p425 = scmp.eq.s32.totalorder %s86, 0
      %p426 = por %p424, %p425
      %p427 = scmp.ne.s32.totalorder %s419, %s421
      %p428 = scmp.eq.s32.totalorder %s91, 1
      %p429 = por %p427, %p428
      %p430 = scmp.ne.s32.totalorder %s421, %s422
      %p431 = scmp.eq.s32.totalorder %s91, 0
      %p432 = por %p430, %p431
      %p433 = scmp.ne.s32.totalorder %s421, %s422
      %p434 = scmp.eq.s32.totalorder %s92, 1
      %p435 = por %p433, %p434
      %p437 = scmp.ne.s32.totalorder %s422, %s436
      %p438 = scmp.eq.s32.totalorder %s92, 0
      %p439 = por %p437, %p438
      %s441 = sadd.s32 %s440, 1
      %p444 = scmp.eq.s32.totalorder %s86, 1
      %p445 = scmp.ne.s32.totalorder %s440, %s442
      %p446 = scmp.eq.s32.totalorder %s86, 0
      %p447 = por %p445, %p446
      %p448 = scmp.ne.s32.totalorder %s440, %s442
      %p449 = scmp.eq.s32.totalorder %s91, 1
      %p450 = por %p448, %p449
      %p451 = scmp.ne.s32.totalorder %s442, %s443
      %p452 = scmp.eq.s32.totalorder %s91, 0
      %p453 = por %p451, %p452
      %p454 = scmp.ne.s32.totalorder %s442, %s443
      %p455 = scmp.eq.s32.totalorder %s92, 1
      %p456 = por %p454, %p455
      %p458 = scmp.ne.s32.totalorder %s443, %s457
      %p459 = scmp.eq.s32.totalorder %s92, 0
      %p460 = por %p458, %p459
      %s462 = sadd.s32 %s461, 1
      %p465 = scmp.eq.s32.totalorder %s86, 1
      %p466 = scmp.ne.s32.totalorder %s461, %s463
      %p467 = scmp.eq.s32.totalorder %s86, 0
      %p468 = por %p466, %p467
      %p469 = scmp.ne.s32.totalorder %s461, %s463
      %p470 = scmp.eq.s32.totalorder %s91, 1
      %p471 = por %p469, %p470
      %p472 = scmp.ne.s32.totalorder %s463, %s464
      %p473 = scmp.eq.s32.totalorder %s91, 0
      %p474 = por %p472, %p473
      %p475 = scmp.ne.s32.totalorder %s463, %s464
      %p476 = scmp.eq.s32.totalorder %s92, 1
      %p477 = por %p475, %p476
      %p479 = scmp.ne.s32.totalorder %s464, %s478
      %p480 = scmp.eq.s32.totalorder %s92, 0
      %p481 = por %p479, %p480
      %s483 = sadd.s32 %s482, 1
      %p486 = scmp.eq.s32.totalorder %s86, 1
      %p487 = scmp.ne.s32.totalorder %s482, %s484
      %p488 = scmp.eq.s32.totalorder %s86, 0
      %p489 = por %p487, %p488
      %p490 = scmp.ne.s32.totalorder %s482, %s484
      %p491 = scmp.eq.s32.totalorder %s91, 1
      %p492 = por %p490, %p491
      %p493 = scmp.ne.s32.totalorder %s484, %s485
      %p494 = scmp.eq.s32.totalorder %s91, 0
      %p495 = por %p493, %p494
      %p496 = scmp.ne.s32.totalorder %s484, %s485
      %p497 = scmp.eq.s32.totalorder %s92, 1
      %p498 = por %p496, %p497
      %p500 = scmp.ne.s32.totalorder %s485, %s499
      %p501 = scmp.eq.s32.totalorder %s92, 0
      %p502 = por %p500, %p501
      %s504 = sadd.s32 %s503, 1
      %p507 = scmp.eq.s32.totalorder %s86, 1
      %p508 = scmp.ne.s32.totalorder %s503, %s505
      %p509 = scmp.eq.s32.totalorder %s86, 0
      %p510 = por %p508, %p509
      %p511 = scmp.ne.s32.totalorder %s503, %s505
      %p512 = scmp.eq.s32.totalorder %s91, 1
      %p513 = por %p511, %p512
      %p514 = scmp.ne.s32.totalorder %s505, %s506
      %p515 = scmp.eq.s32.totalorder %s91, 0
      %p516 = por %p514, %p515
      %p517 = scmp.ne.s32.totalorder %s505, %s506
      %p518 = scmp.eq.s32.totalorder %s92, 1
      %p519 = por %p517, %p518
      %p521 = scmp.ne.s32.totalorder %s506, %s520
      %p522 = scmp.eq.s32.totalorder %s92, 0
      %p523 = por %p521, %p522
      %s525 = sadd.s32 %s524, 1
      %p528 = scmp.eq.s32.totalorder %s86, 1
      %p529 = scmp.ne.s32.totalorder %s524, %s526
      %p530 = scmp.eq.s32.totalorder %s86, 0
      %p531 = por %p529, %p530
      %p532 = scmp.ne.s32.totalorder %s524, %s526
      %p533 = scmp.eq.s32.totalorder %s91, 1
      %p534 = por %p532, %p533
      %p535 = scmp.ne.s32.totalorder %s526, %s527
      %p536 = scmp.eq.s32.totalorder %s91, 0
      %p537 = por %p535, %p536
      %p538 = scmp.ne.s32.totalorder %s526, %s527
      %p539 = scmp.eq.s32.totalorder %s92, 1
      %p540 = por %p538, %p539
      %p542 = scmp.ne.s32.totalorder %s527, %s541
      %p543 = scmp.eq.s32.totalorder %s92, 0
      %p544 = por %p542, %p543
      %s546 = sadd.s32 %s545, 1
      %p549 = scmp.eq.s32.totalorder %s86, 1
      %p550 = scmp.ne.s32.totalorder %s545, %s547
      %p551 = scmp.eq.s32.totalorder %s86, 0
      %p552 = por %p550, %p551
      %p553 = scmp.ne.s32.totalorder %s545, %s547
      %p554 = scmp.eq.s32.totalorder %s91, 1
      %p555 = por %p553, %p554
      %p556 = scmp.ne.s32.totalorder %s547, %s548
      %p557 = scmp.eq.s32.totalorder %s91, 0
      %p558 = por %p556, %p557
      %p559 = scmp.ne.s32.totalorder %s547, %s548
      %p560 = scmp.eq.s32.totalorder %s92, 1
      %p561 = por %p559, %p560
      %p563 = scmp.ne.s32.totalorder %s548, %s562
      %p564 = scmp.eq.s32.totalorder %s92, 0
      %p565 = por %p563, %p564
      %s567 = sadd.s32 %s566, 1
      %p570 = scmp.eq.s32.totalorder %s86, 1
      %p571 = scmp.ne.s32.totalorder %s566, %s568
      %p572 = scmp.eq.s32.totalorder %s86, 0
      %p573 = por %p571, %p572
      %p574 = scmp.ne.s32.totalorder %s566, %s568
      %p575 = scmp.eq.s32.totalorder %s91, 1
      %p576 = por %p574, %p575
      %p577 = scmp.ne.s32.totalorder %s568, %s569
      %p578 = scmp.eq.s32.totalorder %s91, 0
      %p579 = por %p577, %p578
      %p580 = scmp.ne.s32.totalorder %s568, %s569
      %p581 = scmp.eq.s32.totalorder %s92, 1
      %p582 = por %p580, %p581
      %p584 = scmp.ne.s32.totalorder %s569, %s583
      %p585 = scmp.eq.s32.totalorder %s92, 0
      %p586 = por %p584, %p585
      %s588 = sadd.s32 %s587, 1
      %p591 = scmp.eq.s32.totalorder %s86, 1
      %p592 = scmp.ne.s32.totalorder %s587, %s589
      %p593 = scmp.eq.s32.totalorder %s86, 0
      %p594 = por %p592, %p593
      %p595 = scmp.ne.s32.totalorder %s587, %s589
      %p596 = scmp.eq.s32.totalorder %s91, 1
      %p597 = por %p595, %p596
      %p598 = scmp.ne.s32.totalorder %s589, %s590
      %p599 = scmp.eq.s32.totalorder %s91, 0
      %p600 = por %p598, %p599
      %p601 = scmp.ne.s32.totalorder %s589, %s590
      %p602 = scmp.eq.s32.totalorder %s92, 1
      %p603 = por %p601, %p602
      %p605 = scmp.ne.s32.totalorder %s590, %s604
      %p606 = scmp.eq.s32.totalorder %s92, 0
      %p607 = por %p605, %p606
      %s609 = sadd.s32 %s608, 1
      %p612 = scmp.eq.s32.totalorder %s86, 1
      %p613 = scmp.ne.s32.totalorder %s608, %s610
      %p614 = scmp.eq.s32.totalorder %s86, 0
      %p615 = por %p613, %p614
      %p616 = scmp.ne.s32.totalorder %s608, %s610
      %p617 = scmp.eq.s32.totalorder %s91, 1
      %p618 = por %p616, %p617
      %p619 = scmp.ne.s32.totalorder %s610, %s611
      %p620 = scmp.eq.s32.totalorder %s91, 0
      %p621 = por %p619, %p620
      %p622 = scmp.ne.s32.totalorder %s610, %s611
      %p623 = scmp.eq.s32.totalorder %s92, 1
      %p624 = por %p622, %p623
      %p626 = scmp.ne.s32.totalorder %s611, %s625
      %p627 = scmp.eq.s32.totalorder %s92, 0
      %p628 = por %p626, %p627
      %s630 = sadd.s32 %s629, 1
      %p633 = scmp.eq.s32.totalorder %s86, 1
      %p634 = scmp.ne.s32.totalorder %s629, %s631
      %p635 = scmp.eq.s32.totalorder %s86, 0
      %p636 = por %p634, %p635
      %p637 = scmp.ne.s32.totalorder %s629, %s631
      %p638 = scmp.eq.s32.totalorder %s91, 1
      %p639 = por %p637, %p638
      %p640 = scmp.ne.s32.totalorder %s631, %s632
      %p641 = scmp.eq.s32.totalorder %s91, 0
      %p642 = por %p640, %p641
      %p643 = scmp.ne.s32.totalorder %s631, %s632
      %p644 = scmp.eq.s32.totalorder %s92, 1
      %p645 = por %p643, %p644
      %p647 = scmp.ne.s32.totalorder %s632, %s646
      %p648 = scmp.eq.s32.totalorder %s92, 0
      %p649 = por %p647, %p648
      %s651 = sadd.s32 %s650, 1
      %p654 = scmp.eq.s32.totalorder %s86, 1
      %p655 = scmp.ne.s32.totalorder %s650, %s652
      %p656 = scmp.eq.s32.totalorder %s86, 0
      %p657 = por %p655, %p656
      %p658 = scmp.ne.s32.totalorder %s650, %s652
      %p659 = scmp.eq.s32.totalorder %s91, 1
      %p660 = por %p658, %p659
      %p661 = scmp.ne.s32.totalorder %s652, %s653
      %p662 = scmp.eq.s32.totalorder %s91, 0
      %p663 = por %p661, %p662
      %p664 = scmp.ne.s32.totalorder %s652, %s653
      %p665 = scmp.eq.s32.totalorder %s92, 1
      %p666 = por %p664, %p665
      %p668 = scmp.ne.s32.totalorder %s653, %s667
      %p669 = scmp.eq.s32.totalorder %s92, 0
      %p670 = por %p668, %p669
      %s672 = sadd.s32 %s671, 1
      %p675 = scmp.eq.s32.totalorder %s86, 1
      %p676 = scmp.ne.s32.totalorder %s671, %s673
      %p677 = scmp.eq.s32.totalorder %s86, 0
      %p678 = por %p676, %p677
      %p679 = scmp.ne.s32.totalorder %s671, %s673
      %p680 = scmp.eq.s32.totalorder %s91, 1
      %p681 = por %p679, %p680
      %p682 = scmp.ne.s32.totalorder %s673, %s674
      %p683 = scmp.eq.s32.totalorder %s91, 0
      %p684 = por %p682, %p683
      %p685 = scmp.ne.s32.totalorder %s673, %s674
      %p686 = scmp.eq.s32.totalorder %s92, 1
      %p687 = por %p685, %p686
      %p689 = scmp.ne.s32.totalorder %s674, %s688
      %p690 = scmp.eq.s32.totalorder %s92, 0
      %p691 = por %p689, %p690
      %s693 = sadd.s32 %s692, 1
      %p696 = scmp.eq.s32.totalorder %s86, 1
      %p697 = scmp.ne.s32.totalorder %s692, %s694
      %p698 = scmp.eq.s32.totalorder %s86, 0
      %p699 = por %p697, %p698
      %p700 = scmp.ne.s32.totalorder %s692, %s694
      %p701 = scmp.eq.s32.totalorder %s91, 1
      %p702 = por %p700, %p701
      %p703 = scmp.ne.s32.totalorder %s694, %s695
      %p704 = scmp.eq.s32.totalorder %s91, 0
      %p705 = por %p703, %p704
      %p706 = scmp.ne.s32.totalorder %s694, %s695
      %p707 = scmp.eq.s32.totalorder %s92, 1
      %p708 = por %p706, %p707
      %p710 = scmp.ne.s32.totalorder %s695, %s709
      %p711 = scmp.eq.s32.totalorder %s92, 0
      %p712 = por %p710, %p711
      %s714 = sadd.s32 %s713, 1
      %p717 = scmp.eq.s32.totalorder %s86, 1
      %p718 = scmp.ne.s32.totalorder %s713, %s715
      %p719 = scmp.eq.s32.totalorder %s86, 0
      %p720 = por %p718, %p719
      %p721 = scmp.ne.s32.totalorder %s713, %s715
      %p722 = scmp.eq.s32.totalorder %s91, 1
      %p723 = por %p721, %p722
      %p724 = scmp.ne.s32.totalorder %s715, %s716
      %p725 = scmp.eq.s32.totalorder %s91, 0
      %p726 = por %p724, %p725
      %p727 = scmp.ne.s32.totalorder %s715, %s716
      %p728 = scmp.eq.s32.totalorder %s92, 1
      %p729 = por %p727, %p728
      %p731 = scmp.ne.s32.totalorder %s716, %s730
      %p732 = scmp.eq.s32.totalorder %s92, 0
      %p733 = por %p731, %p732
      %s735 = sadd.s32 %s734, 1
      %p738 = scmp.eq.s32.totalorder %s86, 1
      %p739 = scmp.ne.s32.totalorder %s734, %s736
      %p740 = scmp.eq.s32.totalorder %s86, 0
      %p741 = por %p739, %p740
      %p742 = scmp.ne.s32.totalorder %s734, %s736
      %p743 = scmp.eq.s32.totalorder %s91, 1
      %p744 = por %p742, %p743
      %p745 = scmp.ne.s32.totalorder %s736, %s737
      %p746 = scmp.eq.s32.totalorder %s91, 0
      %p747 = por %p745, %p746
      %p748 = scmp.ne.s32.totalorder %s736, %s737
      %p749 = scmp.eq.s32.totalorder %s92, 1
      %p750 = por %p748, %p749
      %p752 = scmp.ne.s32.totalorder %s737, %s751
      %p753 = scmp.eq.s32.totalorder %s92, 0
      %p754 = por %p752, %p753
      %s756 = sadd.s32 %s755, 1
      %p759 = scmp.eq.s32.totalorder %s86, 1
      %p760 = scmp.ne.s32.totalorder %s755, %s757
      %p761 = scmp.eq.s32.totalorder %s86, 0
      %p762 = por %p760, %p761
      %p763 = scmp.ne.s32.totalorder %s755, %s757
      %p764 = scmp.eq.s32.totalorder %s91, 1
      %p765 = por %p763, %p764
      %p766 = scmp.ne.s32.totalorder %s757, %s758
      %p767 = scmp.eq.s32.totalorder %s91, 0
      %p768 = por %p766, %p767
      %p769 = scmp.ne.s32.totalorder %s757, %s758
      %p770 = scmp.eq.s32.totalorder %s92, 1
      %p771 = por %p769, %p770
      %p773 = scmp.ne.s32.totalorder %s758, %s772
      %p774 = scmp.eq.s32.totalorder %s92, 0
      %p775 = por %p773, %p774
      %s777 = sadd.s32 %s776, 1
      %p780 = scmp.eq.s32.totalorder %s86, 1
      %p781 = scmp.ne.s32.totalorder %s776, %s778
      %p782 = scmp.eq.s32.totalorder %s86, 0
      %p783 = por %p781, %p782
      %p784 = scmp.ne.s32.totalorder %s776, %s778
      %p785 = scmp.eq.s32.totalorder %s91, 1
      %p786 = por %p784, %p785
      %p787 = scmp.ne.s32.totalorder %s778, %s779
      %p788 = scmp.eq.s32.totalorder %s91, 0
      %p789 = por %p787, %p788
      %p790 = scmp.ne.s32.totalorder %s778, %s779
      %p791 = scmp.eq.s32.totalorder %s92, 1
      %p792 = por %p790, %p791
      %p794 = scmp.ne.s32.totalorder %s779, %s793
      %p795 = scmp.eq.s32.totalorder %s92, 0
      %p796 = por %p794, %p795
      %s798 = sadd.s32 %s797, 1
      %p801 = scmp.eq.s32.totalorder %s86, 1
      %p802 = scmp.ne.s32.totalorder %s797, %s799
      %p803 = scmp.eq.s32.totalorder %s86, 0
      %p804 = por %p802, %p803
      %p805 = scmp.ne.s32.totalorder %s797, %s799
      %p806 = scmp.eq.s32.totalorder %s91, 1
      %p807 = por %p805, %p806
      %p808 = scmp.ne.s32.totalorder %s799, %s800
      %p809 = scmp.eq.s32.totalorder %s91, 0
      %p810 = por %p808, %p809
      %p811 = scmp.ne.s32.totalorder %s799, %s800
      %p812 = scmp.eq.s32.totalorder %s92, 1
      %p813 = por %p811, %p812
      %p815 = scmp.ne.s32.totalorder %s800, %s814
      %p816 = scmp.eq.s32.totalorder %s92, 0
      %p817 = por %p815, %p816
      %s819 = sadd.s32 %s818, 1
      %p822 = scmp.eq.s32.totalorder %s86, 1
      %p823 = scmp.ne.s32.totalorder %s818, %s820
      %p824 = scmp.eq.s32.totalorder %s86, 0
      %p825 = por %p823, %p824
      %p826 = scmp.ne.s32.totalorder %s818, %s820
      %p827 = scmp.eq.s32.totalorder %s91, 1
      %p828 = por %p826, %p827
      %p829 = scmp.ne.s32.totalorder %s820, %s821
      %p830 = scmp.eq.s32.totalorder %s91, 0
      %p831 = por %p829, %p830
      %p832 = scmp.ne.s32.totalorder %s820, %s821
      %p833 = scmp.eq.s32.totalorder %s92, 1
      %p834 = por %p832, %p833
      %p836 = scmp.ne.s32.totalorder %s821, %s835
      %p837 = scmp.eq.s32.totalorder %s92, 0
      %p838 = por %p836, %p837
      %s839 = ssub.s32 %s86, %s93
      %p840 = scmp.eq.s32.totalorder %s839, 0
      %s842 = sadd.s32 %s841, 1
      %s843 = scalar_select %p840, %s841, %s842
      %p846 = pneg %p840
      %p847 = scmp.eq.s32.totalorder %s86, 1
      %p848 = por %p846, %p847
      %p849 = scmp.ne.s32.totalorder %s841, %s844
      %p850 = scmp.eq.s32.totalorder %s86, 0
      %p851 = por %p849, %p850
      %p852 = scmp.ne.s32.totalorder %s841, %s844
      %p853 = scmp.eq.s32.totalorder %s91, 1
      %p854 = por %p852, %p853
      %p855 = scmp.ne.s32.totalorder %s844, %s845
      %p856 = scmp.eq.s32.totalorder %s91, 0
      %p857 = por %p855, %p856
      %p858 = scmp.ne.s32.totalorder %s844, %s845
      %p859 = scmp.eq.s32.totalorder %s92, 1
      %p860 = por %p858, %p859
      %p862 = scmp.ne.s32.totalorder %s845, %s861
      %p863 = scmp.eq.s32.totalorder %s92, 0
      %p864 = por %p862, %p863
      %p865 = scmp.le.s32.totalorder 1, %s86
      %p866 = scmp.lt.s32.totalorder %s86, 3
      %p867 = pnand %p865, %p866
      %p868 = pneg %p867
      // Predicated region
      $region9: #{transformer_forward_pallas.1} parent=5 // pred_check
        _
      $region10: #{transformer_forward_pallas.1} parent=5 // pred_check_branch
        %870 = sbr.rel (%p867) target = $region12
      $region11: #{transformer_forward_pallas.1} parent=5 // pred_region
        %s871 = ssub.s32 %s86, 1
        // Predicated region
        $region13: #{transformer_forward_pallas.1} parent=11 // pred_check
          %p872 = pneg %p159
        $region14: #{transformer_forward_pallas.1} parent=11 // pred_check_branch
          %874 = sbr.rel (%p872) target = $region16
        $region15: #{transformer_forward_pallas.1} parent=11 // pred_region
          _
        $region16: #{transformer_forward_pallas.1} parent=11 // pred_fallthru
          _
        // Predicated region
        $region17: #{transformer_forward_pallas.1} parent=11 // pred_check
          %p875 = pneg %p180
        $region18: #{transformer_forward_pallas.1} parent=11 // pred_check_branch
          %877 = sbr.rel (%p875) target = $region20
        $region19: #{transformer_forward_pallas.1} parent=11 // pred_region
          %879 = vsyncadd [#allocation3], 0
          %s880 = sshll.u32 %s7, 4
          %s881 = int_to_ptr.hbm [resolvable:$true] %s880
          %s882 = sshll.u32 [#allocation2], 4
          %s883 = int_to_ptr.vmem [resolvable:$true] %s882
          %888 = dma.hbm_to_vmem [thread:$0]  %s881, 1024, %s883, [#allocation3], 128, 128, 8
        $region20: #{transformer_forward_pallas.1} parent=11 // pred_fallthru
          _
        // Predicated region
        $region21: #{transformer_forward_pallas.1} parent=11 // pred_check
          %p889 = pneg %p201
        $region22: #{transformer_forward_pallas.1} parent=11 // pred_check_branch
          %891 = sbr.rel (%p889) target = $region24
        $region23: #{transformer_forward_pallas.1} parent=11 // pred_region
          _
        $region24: #{transformer_forward_pallas.1} parent=11 // pred_fallthru
          _
        // Predicated region
        $region25: #{transformer_forward_pallas.1} parent=11 // pred_check
          %p892 = pneg %p222
        $region26: #{transformer_forward_pallas.1} parent=11 // pred_check_branch
          %894 = sbr.rel (%p892) target = $region28
        $region27: #{transformer_forward_pallas.1} parent=11 // pred_region
          %896 = vsyncadd [#allocation5], 0
          %s897 = sshll.u32 %s11, 4
          %s898 = int_to_ptr.hbm [resolvable:$true] %s897
          %s899 = sshll.u32 [#allocation4], 4
          %s900 = int_to_ptr.vmem [resolvable:$true] %s899
          %905 = dma.hbm_to_vmem [thread:$0]  %s898, 3072, %s900, [#allocation5], 768, 768, 48
        $region28: #{transformer_forward_pallas.1} parent=11 // pred_fallthru
          _
        // Predicated region
        $region29: #{transformer_forward_pallas.1} parent=11 // pred_check
          %p906 = pneg %p243
        $region30: #{transformer_forward_pallas.1} parent=11 // pred_check_branch
          %908 = sbr.rel (%p906) target = $region32
        $region31: #{transformer_forward_pallas.1} parent=11 // pred_region
          %910 = vsyncadd [#allocation5], 0
          %s912 = sshll.u32 %s13, 4
          %s913 = int_to_ptr.hbm [resolvable:$true] %s912
          %s914 = sshll.u32 [#allocation6], 4
          %s915 = int_to_ptr.vmem [resolvable:$true] %s914
          %917 = dma.hbm_to_vmem [thread:$0]  %s913, 96, %s915, [#allocation5]
        $region32: #{transformer_forward_pallas.1} parent=11 // pred_fallthru
          _
        // Predicated region
        $region33: #{transformer_forward_pallas.1} parent=11 // pred_check
          %p918 = pneg %p264
        $region34: #{transformer_forward_pallas.1} parent=11 // pred_check_branch
          %920 = sbr.rel (%p918) target = $region36
        $region35: #{transformer_forward_pallas.1} parent=11 // pred_region
          %922 = vsyncadd [#allocation8], 0
          %s923 = sshll.u32 %s15, 4
          %s924 = int_to_ptr.hbm [resolvable:$true] %s923
          %s925 = sshll.u32 [#allocation7], 4
          %s926 = int_to_ptr.vmem [resolvable:$true] %s925
          %931 = dma.hbm_to_vmem [thread:$0]  %s924, 512, %s926, [#allocation8], 128, 128, 8
        $region36: #{transformer_forward_pallas.1} parent=11 // pred_fallthru
          _
        // Predicated region
        $region37: #{transformer_forward_pallas.1} parent=11 // pred_check
          %p932 = pneg %p285
        $region38: #{transformer_forward_pallas.1} parent=11 // pred_check_branch
          %934 = sbr.rel (%p932) target = $region40
        $region39: #{transformer_forward_pallas.1} parent=11 // pred_region
          _
        $region40: #{transformer_forward_pallas.1} parent=11 // pred_fallthru
          _
        // Predicated region
        $region41: #{transformer_forward_pallas.1} parent=11 // pred_check
          %p935 = pneg %p306
        $region42: #{transformer_forward_pallas.1} parent=11 // pred_check_branch
          %937 = sbr.rel (%p935) target = $region44
        $region43: #{transformer_forward_pallas.1} parent=11 // pred_region
          %939 = vsyncadd [#allocation8], 0
          %s941 = sshll.u32 %s19, 4
          %s942 = int_to_ptr.hbm [resolvable:$true] %s941
          %s943 = sshll.u32 [#allocation9], 4
          %s944 = int_to_ptr.vmem [resolvable:$true] %s943
          %946 = dma.hbm_to_vmem [thread:$0]  %s942, 16, %s944, [#allocation8]
        $region44: #{transformer_forward_pallas.1} parent=11 // pred_fallthru
          _
        // Predicated region
        $region45: #{transformer_forward_pallas.1} parent=11 // pred_check
          %p947 = pneg %p327
        $region46: #{transformer_forward_pallas.1} parent=11 // pred_check_branch
          %949 = sbr.rel (%p947) target = $region48
        $region47: #{transformer_forward_pallas.1} parent=11 // pred_region
          %951 = vsyncadd [#allocation11], 0
          %s953 = sshll.u32 %s21, 4
          %s954 = int_to_ptr.hbm [resolvable:$true] %s953
          %s955 = sshll.u32 [#allocation10], 4
          %s956 = int_to_ptr.vmem [resolvable:$true] %s955
          %958 = dma.hbm_to_vmem [thread:$0]  %s954, 16, %s956, [#allocation11]
        $region48: #{transformer_forward_pallas.1} parent=11 // pred_fallthru
          _
        // Predicated region
        $region49: #{transformer_forward_pallas.1} parent=11 // pred_check
          %p959 = pneg %p348
        $region50: #{transformer_forward_pallas.1} parent=11 // pred_check_branch
          %961 = sbr.rel (%p959) target = $region52
        $region51: #{transformer_forward_pallas.1} parent=11 // pred_region
          %963 = vsyncadd [#allocation11], 0
          %s964 = sshll.u32 %s23, 4
          %s965 = int_to_ptr.hbm [resolvable:$true] %s964
          %s966 = sshll.u32 [#allocation12], 4
          %s967 = int_to_ptr.vmem [resolvable:$true] %s966
          %972 = dma.hbm_to_vmem [thread:$0]  %s965, 512, %s967, [#allocation11], 128, 128, 8
        $region52: #{transformer_forward_pallas.1} parent=11 // pred_fallthru
          _
        // Predicated region
        $region53: #{transformer_forward_pallas.1} parent=11 // pred_check
          %p973 = pneg %p369
        $region54: #{transformer_forward_pallas.1} parent=11 // pred_check_branch
          %975 = sbr.rel (%p973) target = $region56
        $region55: #{transformer_forward_pallas.1} parent=11 // pred_region
          %977 = vsyncadd [#allocation14], 0
          %s979 = sshll.u32 %s25, 4
          %s980 = int_to_ptr.hbm [resolvable:$true] %s979
          %s981 = sshll.u32 [#allocation13], 4
          %s982 = int_to_ptr.vmem [resolvable:$true] %s981
          %984 = dma.hbm_to_vmem [thread:$0]  %s980, 16, %s982, [#allocation14]
        $region56: #{transformer_forward_pallas.1} parent=11 // pred_fallthru
          _
        // Predicated region
        $region57: #{transformer_forward_pallas.1} parent=11 // pred_check
          %p985 = pneg %p390
        $region58: #{transformer_forward_pallas.1} parent=11 // pred_check_branch
          %987 = sbr.rel (%p985) target = $region60
        $region59: #{transformer_forward_pallas.1} parent=11 // pred_region
          %989 = vsyncadd [#allocation14], 0
          %s990 = sshll.u32 %s27, 4
          %s991 = int_to_ptr.hbm [resolvable:$true] %s990
          %s992 = sshll.u32 [#allocation15], 4
          %s993 = int_to_ptr.vmem [resolvable:$true] %s992
          %998 = dma.hbm_to_vmem [thread:$0]  %s991, 512, %s993, [#allocation14], 128, 128, 8
        $region60: #{transformer_forward_pallas.1} parent=11 // pred_fallthru
          _
        // Predicated region
        $region61: #{transformer_forward_pallas.1} parent=11 // pred_check
          %p999 = pneg %p411
        $region62: #{transformer_forward_pallas.1} parent=11 // pred_check_branch
          %1001 = sbr.rel (%p999) target = $region64
        $region63: #{transformer_forward_pallas.1} parent=11 // pred_region
          %1003 = vsyncadd [#allocation17], 0
          %s1005 = sshll.u32 %s29, 4
          %s1006 = int_to_ptr.hbm [resolvable:$true] %s1005
          %s1007 = sshll.u32 [#allocation16], 4
          %s1008 = int_to_ptr.vmem [resolvable:$true] %s1007
          %1010 = dma.hbm_to_vmem [thread:$0]  %s1006, 16, %s1008, [#allocation17]
        $region64: #{transformer_forward_pallas.1} parent=11 // pred_fallthru
          _
        // Predicated region
        $region65: #{transformer_forward_pallas.1} parent=11 // pred_check
          %p1011 = pneg %p432
        $region66: #{transformer_forward_pallas.1} parent=11 // pred_check_branch
          %1013 = sbr.rel (%p1011) target = $region68
        $region67: #{transformer_forward_pallas.1} parent=11 // pred_region
          %1015 = vsyncadd [#allocation17], 0
          %s1017 = sshll.u32 %s31, 4
          %s1018 = int_to_ptr.hbm [resolvable:$true] %s1017
          %s1019 = sshll.u32 [#allocation18], 4
          %s1020 = int_to_ptr.vmem [resolvable:$true] %s1019
          %1022 = dma.hbm_to_vmem [thread:$0]  %s1018, 16, %s1020, [#allocation17]
        $region68: #{transformer_forward_pallas.1} parent=11 // pred_fallthru
          _
        // Predicated region
        $region69: #{transformer_forward_pallas.1} parent=11 // pred_check
          %p1023 = pneg %p453
        $region70: #{transformer_forward_pallas.1} parent=11 // pred_check_branch
          %1025 = sbr.rel (%p1023) target = $region72
        $region71: #{transformer_forward_pallas.1} parent=11 // pred_region
          %1027 = vsyncadd [#allocation20], 0
          %s1029 = sshll.u32 %s33, 4
          %s1030 = int_to_ptr.hbm [resolvable:$true] %s1029
          %s1031 = sshll.u32 [#allocation19], 4
          %s1032 = int_to_ptr.vmem [resolvable:$true] %s1031
          %1034 = dma.hbm_to_vmem [thread:$0]  %s1030, 16, %s1032, [#allocation20]
        $region72: #{transformer_forward_pallas.1} parent=11 // pred_fallthru
          _
        // Predicated region
        $region73: #{transformer_forward_pallas.1} parent=11 // pred_check
          %p1035 = pneg %p474
        $region74: #{transformer_forward_pallas.1} parent=11 // pred_check_branch
          %1037 = sbr.rel (%p1035) target = $region76
        $region75: #{transformer_forward_pallas.1} parent=11 // pred_region
          %1039 = vsyncadd [#allocation20], 0
          %s1040 = sshll.u32 %s35, 4
          %s1041 = int_to_ptr.hbm [resolvable:$true] %s1040
          %s1042 = sshll.u32 [#allocation21], 4
          %s1043 = int_to_ptr.vmem [resolvable:$true] %s1042
          %1048 = dma.hbm_to_vmem [thread:$0]  %s1041, 512, %s1043, [#allocation20], 128, 128, 8
        $region76: #{transformer_forward_pallas.1} parent=11 // pred_fallthru
          _
        // Predicated region
        $region77: #{transformer_forward_pallas.1} parent=11 // pred_check
          %p1049 = pneg %p495
        $region78: #{transformer_forward_pallas.1} parent=11 // pred_check_branch
          %1051 = sbr.rel (%p1049) target = $region80
        $region79: #{transformer_forward_pallas.1} parent=11 // pred_region
          %1053 = vsyncadd [#allocation23], 0
          %s1055 = sshll.u32 %s37, 4
          %s1056 = int_to_ptr.hbm [resolvable:$true] %s1055
          %s1057 = sshll.u32 [#allocation22], 4
          %s1058 = int_to_ptr.vmem [resolvable:$true] %s1057
          %1060 = dma.hbm_to_vmem [thread:$0]  %s1056, 16, %s1058, [#allocation23]
        $region80: #{transformer_forward_pallas.1} parent=11 // pred_fallthru
          _
        // Predicated region
        $region81: #{transformer_forward_pallas.1} parent=11 // pred_check
          %p1061 = pneg %p516
        $region82: #{transformer_forward_pallas.1} parent=11 // pred_check_branch
          %1063 = sbr.rel (%p1061) target = $region84
        $region83: #{transformer_forward_pallas.1} parent=11 // pred_region
          _
        $region84: #{transformer_forward_pallas.1} parent=11 // pred_fallthru
          _
        // Predicated region
        $region85: #{transformer_forward_pallas.1} parent=11 // pred_check
          %p1064 = pneg %p537
        $region86: #{transformer_forward_pallas.1} parent=11 // pred_check_branch
          %1066 = sbr.rel (%p1064) target = $region88
        $region87: #{transformer_forward_pallas.1} parent=11 // pred_region
          %1068 = vsyncadd [#allocation23], 0
          %s1070 = sshll.u32 %s41, 4
          %s1071 = int_to_ptr.hbm [resolvable:$true] %s1070
          %s1072 = sshll.u32 [#allocation24], 4
          %s1073 = int_to_ptr.vmem [resolvable:$true] %s1072
          %1075 = dma.hbm_to_vmem [thread:$0]  %s1071, 48, %s1073, [#allocation23]
        $region88: #{transformer_forward_pallas.1} parent=11 // pred_fallthru
          _
        // Predicated region
        $region89: #{transformer_forward_pallas.1} parent=11 // pred_check
          %p1076 = pneg %p558
        $region90: #{transformer_forward_pallas.1} parent=11 // pred_check_branch
          %1078 = sbr.rel (%p1076) target = $region92
        $region91: #{transformer_forward_pallas.1} parent=11 // pred_region
          _
        $region92: #{transformer_forward_pallas.1} parent=11 // pred_fallthru
          _
        // Predicated region
        $region93: #{transformer_forward_pallas.1} parent=11 // pred_check
          %p1079 = pneg %p579
        $region94: #{transformer_forward_pallas.1} parent=11 // pred_check_branch
          %1081 = sbr.rel (%p1079) target = $region96
        $region95: #{transformer_forward_pallas.1} parent=11 // pred_region
          _
        $region96: #{transformer_forward_pallas.1} parent=11 // pred_fallthru
          _
        // Predicated region
        $region97: #{transformer_forward_pallas.1} parent=11 // pred_check
          %p1082 = pneg %p600
        $region98: #{transformer_forward_pallas.1} parent=11 // pred_check_branch
          %1084 = sbr.rel (%p1082) target = $region100
        $region99: #{transformer_forward_pallas.1} parent=11 // pred_region
          _
        $region100: #{transformer_forward_pallas.1} parent=11 // pred_fallthru
          _
        // Predicated region
        $region101: #{transformer_forward_pallas.1} parent=11 // pred_check
          %p1085 = pneg %p621
        $region102: #{transformer_forward_pallas.1} parent=11 // pred_check_branch
          %1087 = sbr.rel (%p1085) target = $region104
        $region103: #{transformer_forward_pallas.1} parent=11 // pred_region
          _
        $region104: #{transformer_forward_pallas.1} parent=11 // pred_fallthru
          _
        // Predicated region
        $region105: #{transformer_forward_pallas.1} parent=11 // pred_check
          %p1088 = pneg %p642
        $region106: #{transformer_forward_pallas.1} parent=11 // pred_check_branch
          %1090 = sbr.rel (%p1088) target = $region108
        $region107: #{transformer_forward_pallas.1} parent=11 // pred_region
          _
        $region108: #{transformer_forward_pallas.1} parent=11 // pred_fallthru
          _
        // Predicated region
        $region109: #{transformer_forward_pallas.1} parent=11 // pred_check
          %p1091 = pneg %p663
        $region110: #{transformer_forward_pallas.1} parent=11 // pred_check_branch
          %1093 = sbr.rel (%p1091) target = $region112
        $region111: #{transformer_forward_pallas.1} parent=11 // pred_region
          _
        $region112: #{transformer_forward_pallas.1} parent=11 // pred_fallthru
          _
        // Predicated region
        $region113: #{transformer_forward_pallas.1} parent=11 // pred_check
          %p1094 = pneg %p684
        $region114: #{transformer_forward_pallas.1} parent=11 // pred_check_branch
          %1096 = sbr.rel (%p1094) target = $region116
        $region115: #{transformer_forward_pallas.1} parent=11 // pred_region
          _
        $region116: #{transformer_forward_pallas.1} parent=11 // pred_fallthru
          _
        // Predicated region
        $region117: #{transformer_forward_pallas.1} parent=11 // pred_check
          %p1097 = pneg %p705
        $region118: #{transformer_forward_pallas.1} parent=11 // pred_check_branch
          %1099 = sbr.rel (%p1097) target = $region120
        $region119: #{transformer_forward_pallas.1} parent=11 // pred_region
          _
        $region120: #{transformer_forward_pallas.1} parent=11 // pred_fallthru
          _
        // Predicated region
        $region121: #{transformer_forward_pallas.1} parent=11 // pred_check
          %p1100 = pneg %p726
        $region122: #{transformer_forward_pallas.1} parent=11 // pred_check_branch
          %1102 = sbr.rel (%p1100) target = $region124
        $region123: #{transformer_forward_pallas.1} parent=11 // pred_region
          %1104 = vsyncadd [#allocation26], 0
          %s1105 = sshll.u32 %s59, 4
          %s1106 = int_to_ptr.hbm [resolvable:$true] %s1105
          %s1107 = sshll.u32 [#allocation25], 4
          %s1108 = int_to_ptr.vmem [resolvable:$true] %s1107
          %1113 = dma.hbm_to_vmem [thread:$0]  %s1106, 512, %s1108, [#allocation26], 128, 128, 8
        $region124: #{transformer_forward_pallas.1} parent=11 // pred_fallthru
          _
        // Predicated region
        $region125: #{transformer_forward_pallas.1} parent=11 // pred_check
          %p1114 = pneg %p747
        $region126: #{transformer_forward_pallas.1} parent=11 // pred_check_branch
          %1116 = sbr.rel (%p1114) target = $region128
        $region127: #{transformer_forward_pallas.1} parent=11 // pred_region
          _
        $region128: #{transformer_forward_pallas.1} parent=11 // pred_fallthru
          _
        // Predicated region
        $region129: #{transformer_forward_pallas.1} parent=11 // pred_check
          %p1117 = pneg %p768
        $region130: #{transformer_forward_pallas.1} parent=11 // pred_check_branch
          %1119 = sbr.rel (%p1117) target = $region132
        $region131: #{transformer_forward_pallas.1} parent=11 // pred_region
          %1121 = vsyncadd [#allocation26], 0
          %s1122 = sshll.u32 %s63, 4
          %s1123 = int_to_ptr.hbm [resolvable:$true] %s1122
          %s1124 = sshll.u32 [#allocation27], 4
          %s1125 = int_to_ptr.vmem [resolvable:$true] %s1124
          %1130 = dma.hbm_to_vmem [thread:$0]  %s1123, 512, %s1125, [#allocation26], 128, 128, 8
        $region132: #{transformer_forward_pallas.1} parent=11 // pred_fallthru
          _
        // Predicated region
        $region133: #{transformer_forward_pallas.1} parent=11 // pred_check
          %p1131 = pneg %p789
        $region134: #{transformer_forward_pallas.1} parent=11 // pred_check_branch
          %1133 = sbr.rel (%p1131) target = $region136
        $region135: #{transformer_forward_pallas.1} parent=11 // pred_region
          _
        $region136: #{transformer_forward_pallas.1} parent=11 // pred_fallthru
          _
        // Predicated region
        $region137: #{transformer_forward_pallas.1} parent=11 // pred_check
          %p1134 = pneg %p810
        $region138: #{transformer_forward_pallas.1} parent=11 // pred_check_branch
          %1136 = sbr.rel (%p1134) target = $region140
        $region139: #{transformer_forward_pallas.1} parent=11 // pred_region
          _
        $region140: #{transformer_forward_pallas.1} parent=11 // pred_fallthru
          _
        // Predicated region
        $region141: #{transformer_forward_pallas.1} parent=11 // pred_check
          %p1137 = pneg %p831
        $region142: #{transformer_forward_pallas.1} parent=11 // pred_check_branch
          %1139 = sbr.rel (%p1137) target = $region144
        $region143: #{transformer_forward_pallas.1} parent=11 // pred_region
          _
        $region144: #{transformer_forward_pallas.1} parent=11 // pred_fallthru
          _
      $region12: #{transformer_forward_pallas.1} parent=5 // pred_fallthru
        _
      %p1140 = scmp.lt.s32.totalorder %s86, 2
      // Predicated region
      $region145: #{transformer_forward_pallas.1} parent=5 // pred_check
        %p1141 = pneg %p1140
      $region146: #{transformer_forward_pallas.1} parent=5 // pred_check_branch
        %1143 = sbr.rel (%p1141) target = $region148
      $region147: #{transformer_forward_pallas.1} parent=5 // pred_region
        // Predicated region
        $region149: #{transformer_forward_pallas.1} parent=147 // pred_check
          %p1144 = pneg %p106
        $region150: #{transformer_forward_pallas.1} parent=147 // pred_check_branch
          %1146 = sbr.rel (%p1144) target = $region152
        $region151: #{transformer_forward_pallas.1} parent=147 // pred_region
          %p1147 = scmp.lt.s32.totalorder %s86, 1
          %s1148 = scalar_select %p1147, %s86, 1
          %s1149 = smul.addr %s1148, 8
          %s1150 = scalar_lea.vmem %s1, %s1149
        $region152: #{transformer_forward_pallas.1} parent=147 // pred_fallthru
          _
        // Predicated region
        $region153: #{transformer_forward_pallas.1} parent=147 // pred_check
          %p1151 = pneg %p132
        $region154: #{transformer_forward_pallas.1} parent=147 // pred_check_branch
          %1153 = sbr.rel (%p1151) target = $region156
        $region155: #{transformer_forward_pallas.1} parent=147 // pred_region
          %p1154 = scmp.lt.s32.totalorder %s86, 1
          %s1155 = scalar_select %p1154, %s86, 1
          %s1156 = smul.addr %s1155, 8
          %s1157 = scalar_lea.vmem %s3, %s1156
        $region156: #{transformer_forward_pallas.1} parent=147 // pred_fallthru
          _
      $region148: #{transformer_forward_pallas.1} parent=5 // pred_fallthru
        _
      %p1158 = scmp.le.s32.totalorder 1, %s86
      %p1159 = scmp.lt.s32.totalorder %s86, 3
      %p1160 = pnand %p1158, %p1159
      %p1161 = pneg %p1160
      // Predicated region
      $region157: #{transformer_forward_pallas.1} parent=5 // pred_check
        _
      $region158: #{transformer_forward_pallas.1} parent=5 // pred_check_branch
        %1163 = sbr.rel (%p1160) target = $region160
      $region159: #{transformer_forward_pallas.1} parent=5 // pred_region
        %s1164 = ssub.s32 %s86, 1
        // Predicated region
        $region161: #{transformer_forward_pallas.1} parent=159 // pred_check
          %p1165 = pneg %p180
        $region162: #{transformer_forward_pallas.1} parent=159 // pred_check_branch
          %1167 = sbr.rel (%p1165) target = $region164
        $region163: #{transformer_forward_pallas.1} parent=159 // pred_region
          %1169 = dma.done [#allocation3], 1024
        $region164: #{transformer_forward_pallas.1} parent=159 // pred_fallthru
          _
        // Predicated region
        $region165: #{transformer_forward_pallas.1} parent=159 // pred_check
          %p1170 = pneg %p222
        $region166: #{transformer_forward_pallas.1} parent=159 // pred_check_branch
          %1172 = sbr.rel (%p1170) target = $region168
        $region167: #{transformer_forward_pallas.1} parent=159 // pred_region
          %1174 = dma.done [#allocation5], 3072
        $region168: #{transformer_forward_pallas.1} parent=159 // pred_fallthru
          _
        // Predicated region
        $region169: #{transformer_forward_pallas.1} parent=159 // pred_check
          %p1175 = pneg %p243
        $region170: #{transformer_forward_pallas.1} parent=159 // pred_check_branch
          %1177 = sbr.rel (%p1175) target = $region172
        $region171: #{transformer_forward_pallas.1} parent=159 // pred_region
          %1179 = dma.done [#allocation5], 96
        $region172: #{transformer_forward_pallas.1} parent=159 // pred_fallthru
          _
        // Predicated region
        $region173: #{transformer_forward_pallas.1} parent=159 // pred_check
          %p1180 = pneg %p264
        $region174: #{transformer_forward_pallas.1} parent=159 // pred_check_branch
          %1182 = sbr.rel (%p1180) target = $region176
        $region175: #{transformer_forward_pallas.1} parent=159 // pred_region
          %1184 = dma.done [#allocation8], 512
        $region176: #{transformer_forward_pallas.1} parent=159 // pred_fallthru
          _
        // Predicated region
        $region177: #{transformer_forward_pallas.1} parent=159 // pred_check
          %p1185 = pneg %p306
        $region178: #{transformer_forward_pallas.1} parent=159 // pred_check_branch
          %1187 = sbr.rel (%p1185) target = $region180
        $region179: #{transformer_forward_pallas.1} parent=159 // pred_region
          %1189 = dma.done [#allocation8], 16
        $region180: #{transformer_forward_pallas.1} parent=159 // pred_fallthru
          _
        // Predicated region
        $region181: #{transformer_forward_pallas.1} parent=159 // pred_check
          %p1190 = pneg %p327
        $region182: #{transformer_forward_pallas.1} parent=159 // pred_check_branch
          %1192 = sbr.rel (%p1190) target = $region184
        $region183: #{transformer_forward_pallas.1} parent=159 // pred_region
          %1194 = dma.done [#allocation11], 16
        $region184: #{transformer_forward_pallas.1} parent=159 // pred_fallthru
          _
        // Predicated region
        $region185: #{transformer_forward_pallas.1} parent=159 // pred_check
          %p1195 = pneg %p348
        $region186: #{transformer_forward_pallas.1} parent=159 // pred_check_branch
          %1197 = sbr.rel (%p1195) target = $region188
        $region187: #{transformer_forward_pallas.1} parent=159 // pred_region
          %1199 = dma.done [#allocation11], 512
        $region188: #{transformer_forward_pallas.1} parent=159 // pred_fallthru
          _
        // Predicated region
        $region189: #{transformer_forward_pallas.1} parent=159 // pred_check
          %p1200 = pneg %p369
        $region190: #{transformer_forward_pallas.1} parent=159 // pred_check_branch
          %1202 = sbr.rel (%p1200) target = $region192
        $region191: #{transformer_forward_pallas.1} parent=159 // pred_region
          %1204 = dma.done [#allocation14], 16
        $region192: #{transformer_forward_pallas.1} parent=159 // pred_fallthru
          _
        // Predicated region
        $region193: #{transformer_forward_pallas.1} parent=159 // pred_check
          %p1205 = pneg %p390
        $region194: #{transformer_forward_pallas.1} parent=159 // pred_check_branch
          %1207 = sbr.rel (%p1205) target = $region196
        $region195: #{transformer_forward_pallas.1} parent=159 // pred_region
          %1209 = dma.done [#allocation14], 512
        $region196: #{transformer_forward_pallas.1} parent=159 // pred_fallthru
          _
        // Predicated region
        $region197: #{transformer_forward_pallas.1} parent=159 // pred_check
          %p1210 = pneg %p411
        $region198: #{transformer_forward_pallas.1} parent=159 // pred_check_branch
          %1212 = sbr.rel (%p1210) target = $region200
        $region199: #{transformer_forward_pallas.1} parent=159 // pred_region
          %1214 = dma.done [#allocation17], 16
        $region200: #{transformer_forward_pallas.1} parent=159 // pred_fallthru
          _
        // Predicated region
        $region201: #{transformer_forward_pallas.1} parent=159 // pred_check
          %p1215 = pneg %p432
        $region202: #{transformer_forward_pallas.1} parent=159 // pred_check_branch
          %1217 = sbr.rel (%p1215) target = $region204
        $region203: #{transformer_forward_pallas.1} parent=159 // pred_region
          %1219 = dma.done [#allocation17], 16
        $region204: #{transformer_forward_pallas.1} parent=159 // pred_fallthru
          _
        // Predicated region
        $region205: #{transformer_forward_pallas.1} parent=159 // pred_check
          %p1220 = pneg %p453
        $region206: #{transformer_forward_pallas.1} parent=159 // pred_check_branch
          %1222 = sbr.rel (%p1220) target = $region208
        $region207: #{transformer_forward_pallas.1} parent=159 // pred_region
          %1224 = dma.done [#allocation20], 16
        $region208: #{transformer_forward_pallas.1} parent=159 // pred_fallthru
          _
        // Predicated region
        $region209: #{transformer_forward_pallas.1} parent=159 // pred_check
          %p1225 = pneg %p474
        $region210: #{transformer_forward_pallas.1} parent=159 // pred_check_branch
          %1227 = sbr.rel (%p1225) target = $region212
        $region211: #{transformer_forward_pallas.1} parent=159 // pred_region
          %1229 = dma.done [#allocation20], 512
        $region212: #{transformer_forward_pallas.1} parent=159 // pred_fallthru
          _
        // Predicated region
        $region213: #{transformer_forward_pallas.1} parent=159 // pred_check
          %p1230 = pneg %p495
        $region214: #{transformer_forward_pallas.1} parent=159 // pred_check_branch
          %1232 = sbr.rel (%p1230) target = $region216
        $region215: #{transformer_forward_pallas.1} parent=159 // pred_region
          %1234 = dma.done [#allocation23], 16
        $region216: #{transformer_forward_pallas.1} parent=159 // pred_fallthru
          _
        // Predicated region
        $region217: #{transformer_forward_pallas.1} parent=159 // pred_check
          %p1235 = pneg %p537
        $region218: #{transformer_forward_pallas.1} parent=159 // pred_check_branch
          %1237 = sbr.rel (%p1235) target = $region220
        $region219: #{transformer_forward_pallas.1} parent=159 // pred_region
          %1239 = dma.done [#allocation23], 48
        $region220: #{transformer_forward_pallas.1} parent=159 // pred_fallthru
          _
        // Predicated region
        $region221: #{transformer_forward_pallas.1} parent=159 // pred_check
          %p1240 = pneg %p726
        $region222: #{transformer_forward_pallas.1} parent=159 // pred_check_branch
          %1242 = sbr.rel (%p1240) target = $region224
        $region223: #{transformer_forward_pallas.1} parent=159 // pred_region
          %1244 = dma.done [#allocation26], 512
        $region224: #{transformer_forward_pallas.1} parent=159 // pred_fallthru
          _
        // Predicated region
        $region225: #{transformer_forward_pallas.1} parent=159 // pred_check
          %p1245 = pneg %p768
        $region226: #{transformer_forward_pallas.1} parent=159 // pred_check_branch
          %1247 = sbr.rel (%p1245) target = $region228
        $region227: #{transformer_forward_pallas.1} parent=159 // pred_region
          %1249 = dma.done [#allocation26], 512
        $region228: #{transformer_forward_pallas.1} parent=159 // pred_fallthru
          _
        %p1250 = scmp.lt.s32.totalorder %s91, 1
        %s1251 = scalar_select %p1250, %s91, 1
        %s1252 = smul.addr %s1251, 8
        %s1253 = scalar_lea.vmem %s1, %s1252
        %p1254 = pneg %p112
        %p1255 = pneg %p109
        %p1256 = scmp.lt.s32.totalorder %s91, 1
        %s1257 = scalar_select %p1256, %s91, 1
        %s1258 = smul.addr %s1257, 8
        %s1259 = scalar_lea.vmem %s3, %s1258
        %p1260 = pneg %p138
        %p1261 = pneg %p135
        %p1262 = pneg %p159
        %p1263 = pneg %p156
        %p1264 = pneg %p180
        %p1265 = pneg %p177
        %p1266 = pneg %p201
        %p1267 = pneg %p198
        %p1268 = pneg %p222
        %p1269 = pneg %p219
        %p1270 = pneg %p243
        %p1271 = pneg %p240
        %p1272 = pneg %p264
        %p1273 = pneg %p261
        %p1274 = pneg %p285
        %p1275 = pneg %p282
        %p1276 = pneg %p306
        %p1277 = pneg %p303
        %p1278 = pneg %p327
        %p1279 = pneg %p324
        %p1280 = pneg %p348
        %p1281 = pneg %p345
        %p1282 = pneg %p369
        %p1283 = pneg %p366
        %p1284 = pneg %p390
        %p1285 = pneg %p387
        %p1286 = pneg %p411
        %p1287 = pneg %p408
        %p1288 = pneg %p432
        %p1289 = pneg %p429
        %p1290 = pneg %p453
        %p1291 = pneg %p450
        %p1292 = pneg %p474
        %p1293 = pneg %p471
        %p1294 = pneg %p495
        %p1295 = pneg %p492
        %p1296 = pneg %p516
        %p1297 = pneg %p513
        %p1298 = pneg %p537
        %p1299 = pneg %p534
        %p1300 = pneg %p558
        %p1301 = pneg %p555
        %p1302 = pneg %p579
        %p1303 = pneg %p576
        %p1304 = pneg %p600
        %p1305 = pneg %p597
        %p1306 = pneg %p621
        %p1307 = pneg %p618
        %p1308 = pneg %p642
        %p1309 = pneg %p639
        %p1310 = pneg %p663
        %p1311 = pneg %p660
        %p1312 = pneg %p684
        %p1313 = pneg %p681
        %p1314 = pneg %p705
        %p1315 = pneg %p702
        %p1316 = pneg %p726
        %p1317 = pneg %p723
        %p1318 = pneg %p747
        %p1319 = pneg %p744
        %p1320 = pneg %p768
        %p1321 = pneg %p765
        %p1322 = pneg %p789
        %p1323 = pneg %p786
        %p1324 = pneg %p810
        %p1325 = pneg %p807
        %p1326 = pneg %p831
        %p1327 = pneg %p828
        %p1328 = pneg %p857
        %p1329 = pneg %p854
        %p1330 = scmp.lt.s32.totalorder %s91, 1
        %s1331 = scalar_select %p1330, %s91, 1
        %s1332 = smul.addr %s1331, 8
        %s1333 = scalar_lea.vmem %s71, %s1332
        %p1334 = scmp.lt.s32.totalorder %s91, 1
        %s1335 = scalar_select %p1334, %s91, 1
        %s1336 = smul.addr %s1335, 8
        %s1337 = scalar_lea.vmem %s1, %s1336
        %p1338 = scmp.lt.s32.totalorder %s91, 1
        %s1339 = scalar_select %p1338, %s91, 1
        %s1340 = smul.addr %s1339, 8
        %s1341 = scalar_lea.vmem %s3, %s1340
        %p1342 = scmp.lt.s32.totalorder %s91, 1
        %s1343 = scalar_select %p1342, %s91, 1
        %s1344 = smul.addr %s1343, 8
        %s1345 = scalar_lea.vmem %s71, %s1344
        %v1346 = vld [vmem:[%s5] sm:$0xff]
        %v1347 = vld [vmem:[%s5 + $0x8] sm:$0xff]
        %v1348 = vld [vmem:[%s5 + $0x10] sm:$0xff]
        %v1349 = vld [vmem:[%s5 + $0x18] sm:$0xff]
        %v1350 = vld [vmem:[#allocation2] sm:$0xff]
        %v1351 = vld [vmem:[#allocation2 + $0x8] sm:$0xff]
        %v1352 = vld [vmem:[#allocation2 + $0x10] sm:$0xff]
        %v1353 = vld [vmem:[#allocation2 + $0x18] sm:$0xff]
        %v1354 = vld [vmem:[#allocation2 + $0x20] sm:$0xff]
        %v1355 = vld [vmem:[#allocation2 + $0x28] sm:$0xff]
        %v1356 = vld [vmem:[#allocation2 + $0x30] sm:$0xff]
        %v1357 = vld [vmem:[#allocation2 + $0x38] sm:$0xff]
        %v1358 = vld [vmem:[%s9] sm:$0xff]
        %v1359 = vld [vmem:[%s9 + $0x8] sm:$0xff]
        %v1360 = vld [vmem:[%s9 + $0x10] sm:$0xff]
        %v1361 = vld [vmem:[%s9 + $0x18] sm:$0xff]
        %v1362 = vld [vmem:[%s9 + $0x20] sm:$0xff]
        %v1363 = vld [vmem:[%s9 + $0x28] sm:$0xff]
        %v1364 = vld [vmem:[%s9 + $0x30] sm:$0xff]
        %v1365 = vld [vmem:[%s9 + $0x38] sm:$0xff]
        %v1366 = vld [vmem:[%s1337] sm:$0xff]
        %v1367 = vld [vmem:[%s1341] sm:$0xff]
        %v1368 = vld [vmem:[#allocation4] sm:$0xff]
        %v1369 = vld [vmem:[#allocation4 + $0x8] sm:$0xff]
        %v1370 = vld [vmem:[#allocation4 + $0x10] sm:$0xff]
        %v1371 = vld [vmem:[#allocation4 + $0x18] sm:$0xff]
        %v1372 = vld [vmem:[#allocation4 + $0x20] sm:$0xff]
        %v1373 = vld [vmem:[#allocation4 + $0x28] sm:$0xff]
        %v1374 = vld [vmem:[#allocation4 + $0x30] sm:$0xff]
        %v1375 = vld [vmem:[#allocation4 + $0x38] sm:$0xff]
        %v1376 = vld [vmem:[#allocation4 + $0x40] sm:$0xff]
        %v1377 = vld [vmem:[#allocation4 + $0x48] sm:$0xff]
        %v1378 = vld [vmem:[#allocation4 + $0x50] sm:$0xff]
        %v1379 = vld [vmem:[#allocation4 + $0x58] sm:$0xff]
        %v1380 = vld [vmem:[#allocation4 + $0x60] sm:$0xff]
        %v1381 = vld [vmem:[#allocation4 + $0x68] sm:$0xff]
        %v1382 = vld [vmem:[#allocation4 + $0x70] sm:$0xff]
        %v1383 = vld [vmem:[#allocation4 + $0x78] sm:$0xff]
        %v1384 = vld [vmem:[#allocation4 + $0x80] sm:$0xff]
        %v1385 = vld [vmem:[#allocation4 + $0x88] sm:$0xff]
        %v1386 = vld [vmem:[#allocation4 + $0x90] sm:$0xff]
        %v1387 = vld [vmem:[#allocation4 + $0x98] sm:$0xff]
        %v1388 = vld [vmem:[#allocation4 + $0xa0] sm:$0xff]
        %v1389 = vld [vmem:[#allocation4 + $0xa8] sm:$0xff]
        %v1390 = vld [vmem:[#allocation4 + $0xb0] sm:$0xff]
        %v1391 = vld [vmem:[#allocation4 + $0xb8] sm:$0xff]
        %v1392 = vld [vmem:[#allocation6] sm:$0x3f]
        %v1394 = vperm.slane %v1392, 0
        %v1395 = vperm.slane %v1392, 1
        %v1396 = vperm.slane %v1392, 2
        %v1397 = vperm.slane %v1392, 3
        %v1398 = vperm.slane %v1392, 4
        %v1399 = vperm.slane %v1392, 5
        %vm1406 = vcmask 261120
        %v1408 = vsel %vm1406, %v1366, 0
        %v1411 = vsel %vm1406, %v1367, 0
        %1413 = vmatpush.msra.mxu0 0.0
        %1414 = vmatpush.msra.mxu0 0.0
        %1415 = vmatpush.msra.mxu0 0.0
        %1416 = vmatpush.msra.mxu0 0.0
        %1417 = vmatpush.msra.mxu0 0.0
        %1418 = vmatpush.msra.mxu0 0.0
        %1419 = vmatpush.msra.mxu0 0.0
        %1420 = vmatpush.msra.mxu0 0.0
        %1421 = vmatpush.msra.mxu0 0.0
        %1422 = vmatpush.msra.mxu0 0.0
        %1423 = vmatpush.msra.mxu0 0.0
        %1424 = vmatpush.msra.mxu0 0.0
        %1425 = vmatpush.msra.mxu0 %v1386
        %1426 = vmatpush.msra.mxu0 %v1380
        %1427 = vmatpush.msra.mxu0 %v1374
        %1428 = vmatpush.msra.mxu0 %v1368
        %1429 = vmatmul.f32.gmra.mxu0 %v1408
        %v1430 = vpop.f32.mrf.mxu0
        %v1431 = vadd.f32 %v1394, %v1430
        %1432 = vmatmul.f32.gmra.mxu0 %v1411
        %v1433 = vpop.f32.mrf.mxu0
        %1434 = vdwg.mxu0
        %1435 = vmatpush.msra.mxu0 0.0
        %1436 = vmatpush.msra.mxu0 0.0
        %1437 = vmatpush.msra.mxu0 0.0
        %1438 = vmatpush.msra.mxu0 0.0
        %1439 = vmatpush.msra.mxu0 0.0
        %1440 = vmatpush.msra.mxu0 0.0
        %1441 = vmatpush.msra.mxu0 0.0
        %1442 = vmatpush.msra.mxu0 0.0
        %1443 = vmatpush.msra.mxu0 0.0
        %1444 = vmatpush.msra.mxu0 0.0
        %1445 = vmatpush.msra.mxu0 0.0
        %1446 = vmatpush.msra.mxu0 0.0
        %1447 = vmatpush.msra.mxu0 %v1387
        %1448 = vmatpush.msra.mxu0 %v1381
        %1449 = vmatpush.msra.mxu0 %v1375
        %1450 = vmatpush.msra.mxu0 %v1369
        %1451 = vmatmul.f32.gmra.mxu0 %v1408
        %v1452 = vpop.f32.mrf.mxu0
        %v1453 = vadd.f32 %v1395, %v1452
        %1454 = vmatmul.f32.gmra.mxu0 %v1411
        %v1455 = vpop.f32.mrf.mxu0
        %1456 = vdwg.mxu0
        %1457 = vmatpush.msra.mxu0 0.0
        %1458 = vmatpush.msra.mxu0 0.0
        %1459 = vmatpush.msra.mxu0 0.0
        %1460 = vmatpush.msra.mxu0 0.0
        %1461 = vmatpush.msra.mxu0 0.0
        %1462 = vmatpush.msra.mxu0 0.0
        %1463 = vmatpush.msra.mxu0 0.0
        %1464 = vmatpush.msra.mxu0 0.0
        %1465 = vmatpush.msra.mxu0 0.0
        %1466 = vmatpush.msra.mxu0 0.0
        %1467 = vmatpush.msra.mxu0 0.0
        %1468 = vmatpush.msra.mxu0 0.0
        %1469 = vmatpush.msra.mxu0 %v1388
        %1470 = vmatpush.msra.mxu0 %v1382
        %1471 = vmatpush.msra.mxu0 %v1376
        %1472 = vmatpush.msra.mxu0 %v1370
        %1473 = vmatmul.f32.gmra.mxu0 %v1408
        %v1474 = vpop.f32.mrf.mxu0
        %v1475 = vadd.f32 %v1396, %v1474
        %1476 = vmatmul.f32.gmra.mxu0 %v1411
        %v1477 = vpop.f32.mrf.mxu0
        %1478 = vdwg.mxu0
        %1479 = vmatpush.msra.mxu0 0.0
        %1480 = vmatpush.msra.mxu0 0.0
        %1481 = vmatpush.msra.mxu0 0.0
        %1482 = vmatpush.msra.mxu0 0.0
        %1483 = vmatpush.msra.mxu0 0.0
        %1484 = vmatpush.msra.mxu0 0.0
        %1485 = vmatpush.msra.mxu0 0.0
        %1486 = vmatpush.msra.mxu0 0.0
        %1487 = vmatpush.msra.mxu0 0.0
        %1488 = vmatpush.msra.mxu0 0.0
        %1489 = vmatpush.msra.mxu0 0.0
        %1490 = vmatpush.msra.mxu0 0.0
        %1491 = vmatpush.msra.mxu0 %v1389
        %1492 = vmatpush.msra.mxu0 %v1383
        %1493 = vmatpush.msra.mxu0 %v1377
        %1494 = vmatpush.msra.mxu0 %v1371
        %1495 = vmatmul.f32.gmra.mxu0 %v1408
        %v1496 = vpop.f32.mrf.mxu0
        %1497 = vmatmul.f32.gmra.mxu0 %v1411
        %v1498 = vpop.f32.mrf.mxu0
        %v1499 = vadd.f32 %v1397, %v1498
        %1500 = vdwg.mxu0
        %1501 = vmatpush.msra.mxu0 0.0
        %1502 = vmatpush.msra.mxu0 0.0
        %1503 = vmatpush.msra.mxu0 0.0
        %1504 = vmatpush.msra.mxu0 0.0
        %1505 = vmatpush.msra.mxu0 0.0
        %1506 = vmatpush.msra.mxu0 0.0
        %1507 = vmatpush.msra.mxu0 0.0
        %1508 = vmatpush.msra.mxu0 0.0
        %1509 = vmatpush.msra.mxu0 0.0
        %1510 = vmatpush.msra.mxu0 0.0
        %1511 = vmatpush.msra.mxu0 0.0
        %1512 = vmatpush.msra.mxu0 0.0
        %1513 = vmatpush.msra.mxu0 %v1390
        %1514 = vmatpush.msra.mxu0 %v1384
        %1515 = vmatpush.msra.mxu0 %v1378
        %1516 = vmatpush.msra.mxu0 %v1372
        %1517 = vmatmul.f32.gmra.mxu0 %v1408
        %v1518 = vpop.f32.mrf.mxu0
        %1519 = vmatmul.f32.gmra.mxu0 %v1411
        %v1520 = vpop.f32.mrf.mxu0
        %v1521 = vadd.f32 %v1398, %v1520
        %1522 = vdwg.mxu0
        %1523 = vmatpush.msra.mxu0 0.0
        %1524 = vmatpush.msra.mxu0 0.0
        %1525 = vmatpush.msra.mxu0 0.0
        %1526 = vmatpush.msra.mxu0 0.0
        %1527 = vmatpush.msra.mxu0 0.0
        %1528 = vmatpush.msra.mxu0 0.0
        %1529 = vmatpush.msra.mxu0 0.0
        %1530 = vmatpush.msra.mxu0 0.0
        %1531 = vmatpush.msra.mxu0 0.0
        %1532 = vmatpush.msra.mxu0 0.0
        %1533 = vmatpush.msra.mxu0 0.0
        %1534 = vmatpush.msra.mxu0 0.0
        %1535 = vmatpush.msra.mxu0 %v1391
        %1536 = vmatpush.msra.mxu0 %v1385
        %1537 = vmatpush.msra.mxu0 %v1379
        %1538 = vmatpush.msra.mxu0 %v1373
        %1539 = vmatmul.f32.gmra.mxu0 %v1408
        %v1540 = vpop.f32.mrf.mxu0
        %1541 = vmatmul.f32.gmra.mxu0 %v1411
        %v1542 = vpop.f32.mrf.mxu0
        %v1543 = vadd.f32 %v1399, %v1542
        %1544 = vdwg.mxu0
        %1545 = vxpose.xlu0.b32.start [1/16] %v1453, 128
        %1546 = vxpose.xlu0.b32.cont [2/16] 0.0, 128
        %1547 = vxpose.xlu0.b32.cont [3/16] 0.0, 128
        %1548 = vxpose.xlu0.b32.cont [4/16] 0.0, 128
        %1549 = vxpose.xlu0.b32.cont [5/16] 0.0, 128
        %1550 = vxpose.xlu0.b32.cont [6/16] 0.0, 128
        %1551 = vxpose.xlu0.b32.cont [7/16] 0.0, 128
        %1552 = vxpose.xlu0.b32.cont [8/16] 0.0, 128
        %1553 = vxpose.xlu0.b32.cont [9/16] 0.0, 128
        %1554 = vxpose.xlu0.b32.cont [10/16] 0.0, 128
        %1555 = vxpose.xlu0.b32.cont [11/16] 0.0, 128
        %1556 = vxpose.xlu0.b32.cont [12/16] 0.0, 128
        %1557 = vxpose.xlu0.b32.cont [13/16] 0.0, 128
        %1558 = vxpose.xlu0.b32.cont [14/16] 0.0, 128
        %1559 = vxpose.xlu0.b32.cont [15/16] 0.0, 128
        %1560 = vxpose.xlu0.b32.end [16/16] 0.0, 128
        %v1561 = vpop.trf.xlu0
        %v1562 = vpop.trf.xlu0
        %v1563 = vpop.trf.xlu0
        %v1564 = vpop.trf.xlu0
        %v1565 = vpop.trf.xlu0
        %v1566 = vpop.trf.xlu0
        %v1567 = vpop.trf.xlu0
        %v1568 = vpop.trf.xlu0
        %v1569 = vpop.trf.xlu0
        %v1570 = vpop.trf.xlu0
        %v1571 = vpop.trf.xlu0
        %v1572 = vpop.trf.xlu0
        %v1573 = vpop.trf.xlu0
        %v1574 = vpop.trf.xlu0
        %v1575 = vpop.trf.xlu0
        %v1576 = vpop.trf.xlu0
        %1581 = vrot.lane.b32.xlu0 %v1561, 8
        %v1582 = vpop.permute.xlu0 %1581
        %1583 = vrot.lane.b32.xlu0 %v1562, 8
        %v1584 = vpop.permute.xlu0 %1583
        %1585 = vrot.lane.b32.xlu0 %v1563, 8
        %v1586 = vpop.permute.xlu0 %1585
        %1587 = vrot.lane.b32.xlu0 %v1564, 8
        %v1588 = vpop.permute.xlu0 %1587
        %1593 = vrot.lane.b32.xlu0 %v1561, 16
        %v1594 = vpop.permute.xlu0 %1593
        %1595 = vrot.lane.b32.xlu0 %v1562, 16
        %v1596 = vpop.permute.xlu0 %1595
        %1597 = vrot.lane.b32.xlu0 %v1563, 16
        %v1598 = vpop.permute.xlu0 %1597
        %1599 = vrot.lane.b32.xlu0 %v1564, 16
        %v1600 = vpop.permute.xlu0 %1599
        %1605 = vrot.lane.b32.xlu0 %v1561, 24
        %v1606 = vpop.permute.xlu0 %1605
        %1607 = vrot.lane.b32.xlu0 %v1562, 24
        %v1608 = vpop.permute.xlu0 %1607
        %1609 = vrot.lane.b32.xlu0 %v1563, 24
        %v1610 = vpop.permute.xlu0 %1609
        %1611 = vrot.lane.b32.xlu0 %v1564, 24
        %v1612 = vpop.permute.xlu0 %1611
        %1617 = vrot.lane.b32.xlu0 %v1561, 32
        %v1618 = vpop.permute.xlu0 %1617
        %1619 = vrot.lane.b32.xlu0 %v1562, 32
        %v1620 = vpop.permute.xlu0 %1619
        %1621 = vrot.lane.b32.xlu0 %v1563, 32
        %v1622 = vpop.permute.xlu0 %1621
        %1623 = vrot.lane.b32.xlu0 %v1564, 32
        %v1624 = vpop.permute.xlu0 %1623
        %1629 = vrot.lane.b32.xlu0 %v1561, 40
        %v1630 = vpop.permute.xlu0 %1629
        %1631 = vrot.lane.b32.xlu0 %v1562, 40
        %v1632 = vpop.permute.xlu0 %1631
        %1633 = vrot.lane.b32.xlu0 %v1563, 40
        %v1634 = vpop.permute.xlu0 %1633
        %1635 = vrot.lane.b32.xlu0 %v1564, 40
        %v1636 = vpop.permute.xlu0 %1635
        %1641 = vrot.lane.b32.xlu0 %v1561, 48
        %v1642 = vpop.permute.xlu0 %1641
        %1643 = vrot.lane.b32.xlu0 %v1562, 48
        %v1644 = vpop.permute.xlu0 %1643
        %1645 = vrot.lane.b32.xlu0 %v1563, 48
        %v1646 = vpop.permute.xlu0 %1645
        %1647 = vrot.lane.b32.xlu0 %v1564, 48
        %v1648 = vpop.permute.xlu0 %1647
        %1653 = vrot.lane.b32.xlu0 %v1561, 56
        %v1654 = vpop.permute.xlu0 %1653
        %1655 = vrot.lane.b32.xlu0 %v1562, 56
        %v1656 = vpop.permute.xlu0 %1655
        %1657 = vrot.lane.b32.xlu0 %v1563, 56
        %v1658 = vpop.permute.xlu0 %1657
        %1659 = vrot.lane.b32.xlu0 %v1564, 56
        %v1660 = vpop.permute.xlu0 %1659
        %vm1665 = vcmask 64512
        %v1666 = vsel %vm1665, %v1561, %v1582
        %v1667 = vsel %vm1665, %v1562, %v1584
        %v1668 = vsel %vm1665, %v1563, %v1586
        %v1669 = vsel %vm1665, %v1564, %v1588
        %vm1670 = vcmask 130048
        %v1671 = vsel %vm1670, %v1666, %v1594
        %v1672 = vsel %vm1670, %v1667, %v1596
        %v1673 = vsel %vm1670, %v1668, %v1598
        %v1674 = vsel %vm1670, %v1669, %v1600
        %vm1675 = vcmask 195584
        %v1676 = vsel %vm1675, %v1671, %v1606
        %v1677 = vsel %vm1675, %v1672, %v1608
        %v1678 = vsel %vm1675, %v1673, %v1610
        %v1679 = vsel %vm1675, %v1674, %v1612
        %v1680 = vsel %vm1406, %v1676, %v1618
        %v1681 = vsel %vm1406, %v1677, %v1620
        %v1682 = vsel %vm1406, %v1678, %v1622
        %v1683 = vsel %vm1406, %v1679, %v1624
        %vm1684 = vcmask 326656
        %v1685 = vsel %vm1684, %v1680, %v1630
        %v1686 = vsel %vm1684, %v1681, %v1632
        %v1687 = vsel %vm1684, %v1682, %v1634
        %v1688 = vsel %vm1684, %v1683, %v1636
        %vm1689 = vcmask 392192
        %v1690 = vsel %vm1689, %v1685, %v1642
        %v1691 = vsel %vm1689, %v1686, %v1644
        %v1692 = vsel %vm1689, %v1687, %v1646
        %v1693 = vsel %vm1689, %v1688, %v1648
        %vm1694 = vcmask 457728
        %v1695 = vsel %vm1694, %v1690, %v1654
        %v1696 = vsel %vm1694, %v1691, %v1656
        %v1697 = vsel %vm1694, %v1692, %v1658
        %v1698 = vsel %vm1694, %v1693, %v1660
        %v1699 = vmul.f32 %v1695, %v1346
        %v1700 = vmul.f32 %v1696, %v1347
        %v1701 = vmul.f32 %v1697, %v1348
        %v1702 = vmul.f32 %v1698, %v1349
        %v1704 = vsel %vm1406, %v1431, 0
        %1706 = vmatpush.msra.mxu0 0.0
        %1707 = vmatpush.msra.mxu0 0.0
        %1708 = vmatpush.msra.mxu0 0.0
        %1709 = vmatpush.msra.mxu0 0.0
        %1710 = vmatpush.msra.mxu0 0.0
        %1711 = vmatpush.msra.mxu0 0.0
        %1712 = vmatpush.msra.mxu0 0.0
        %1713 = vmatpush.msra.mxu0 0.0
        %1714 = vmatpush.msra.mxu0 0.0
        %1715 = vmatpush.msra.mxu0 0.0
        %1716 = vmatpush.msra.mxu0 0.0
        %1717 = vmatpush.msra.mxu0 0.0
        %1718 = vmatpush.msra.mxu0 %v1702
        %1719 = vmatpush.msra.mxu0 %v1701
        %1720 = vmatpush.msra.mxu0 %v1700
        %1721 = vmatpush.msra.mxu0 %v1699
        %1722 = vmatmul.f32.gmra.mxu0 %v1704
        %v1723 = vpop.f32.mrf.mxu0
        %v1724 = vadd.f32 0.0, %v1723
        %1725 = vdwg.mxu0
        %vm1726 = vcmask 523264
        %v1727 = vsel %vm1726, %v1724, -inf
        %1728 = vmax.xlane.f32.xlu0 %v1727
        %v1729 = vpop.xlane.xlu0 %1728
        %v1730 = vsub.f32 %v1724, %v1729
        %v1731 = vmul.f32 %v1730, 1.442695
        %v1732 = vpow.pop %v1731
        %v1734 = vsel %vm1726, %v1732, 0
        %1736 = vmatpush.msra.mxu0 0.0
        %1737 = vmatpush.msra.mxu0 0.0
        %1738 = vmatpush.msra.mxu0 0.0
        %1739 = vmatpush.msra.mxu0 0.0
        %1740 = vmatpush.msra.mxu0 0.0
        %1741 = vmatpush.msra.mxu0 0.0
        %1742 = vmatpush.msra.mxu0 0.0
        %1743 = vmatpush.msra.mxu0 0.0
        %1744 = vmatpush.msra.mxu0 %v1357
        %1745 = vmatpush.msra.mxu0 %v1356
        %1746 = vmatpush.msra.mxu0 %v1355
        %1747 = vmatpush.msra.mxu0 %v1354
        %1748 = vmatpush.msra.mxu0 %v1353
        %1749 = vmatpush.msra.mxu0 %v1352
        %1750 = vmatpush.msra.mxu0 %v1351
        %1751 = vmatpush.msra.mxu0 %v1350
        %1752 = vmatmul.f32.gmra.mxu0 %v1734
        %v1753 = vpop.f32.mrf.mxu0
        %v1754 = vadd.f32 0.0, %v1753
        %1755 = vdwg.mxu0
        %v1756 = vrcp.pop %v1754
        %v1757 = vmul.f32 %v1754, %v1756
        %v1758 = vsub.f32 1.0, %v1757
        %v1759 = vmul.f32 %v1756, %v1758
        %v1760 = vadd.f32 %v1756, %v1759
        %vm1761 = vweird.f32 %v1754
        %vm1762 = vweird.f32 %v1756
        %vm1763 = vmor %vm1761, %vm1762
        %v1764 = vsel %vm1763, %v1756, %v1760
        %v1765 = vand.u32 2147483647, %v1754
        %vm1766 = vcmp.eq.f32.partialorder %v1765, 8.507059e+37
        %v1767 = vand.u32 %v1754, 2147483648
        %v1768 = vor.u32 1.1754944e-38, %v1767
        %v1769 = vsel %vm1766, %v1768, %v1764
        %v1770 = vmul.f32 %v1732, %v1769
        %v1771 = vmul.f32 %v1475, %v1358
        %v1772 = vmul.f32 %v1475, %v1359
        %v1773 = vmul.f32 %v1475, %v1360
        %v1774 = vmul.f32 %v1475, %v1361
        %v1775 = vmul.f32 %v1475, %v1362
        %v1776 = vmul.f32 %v1475, %v1363
        %v1777 = vmul.f32 %v1475, %v1364
        %v1778 = vmul.f32 %v1475, %v1365
        %v1780 = vsel %vm1726, %v1770, 0
        %1782 = vmatpush.msra.mxu0 0.0
        %1783 = vmatpush.msra.mxu0 0.0
        %1784 = vmatpush.msra.mxu0 0.0
        %1785 = vmatpush.msra.mxu0 0.0
        %1786 = vmatpush.msra.mxu0 0.0
        %1787 = vmatpush.msra.mxu0 0.0
        %1788 = vmatpush.msra.mxu0 0.0
        %1789 = vmatpush.msra.mxu0 0.0
        %1790 = vmatpush.msra.mxu0 %v1778
        %1791 = vmatpush.msra.mxu0 %v1777
        %1792 = vmatpush.msra.mxu0 %v1776
        %1793 = vmatpush.msra.mxu0 %v1775
        %1794 = vmatpush.msra.mxu0 %v1774
        %1795 = vmatpush.msra.mxu0 %v1773
        %1796 = vmatpush.msra.mxu0 %v1772
        %1797 = vmatpush.msra.mxu0 %v1771
        %1798 = vmatmul.f32.gmra.mxu0 %v1780
        %v1799 = vpop.f32.mrf.mxu0
        %v1800 = vadd.f32 0.0, %v1799
        %1801 = vdwg.mxu0
        %v1802 = vld [vmem:[#allocation7] sm:$0xff]
        %v1803 = vld [vmem:[#allocation7 + $0x8] sm:$0xff]
        %v1804 = vld [vmem:[#allocation7 + $0x10] sm:$0xff]
        %v1805 = vld [vmem:[#allocation7 + $0x18] sm:$0xff]
        %v1806 = vld [vmem:[%s17] sm:$0x1]
        %v1808 = vperm.slane %v1806, 0
        %v1811 = vsel %vm1406, %v1800, 0
        %1813 = vmatpush.msra.mxu0 0.0
        %1814 = vmatpush.msra.mxu0 0.0
        %1815 = vmatpush.msra.mxu0 0.0
        %1816 = vmatpush.msra.mxu0 0.0
        %1817 = vmatpush.msra.mxu0 0.0
        %1818 = vmatpush.msra.mxu0 0.0
        %1819 = vmatpush.msra.mxu0 0.0
        %1820 = vmatpush.msra.mxu0 0.0
        %1821 = vmatpush.msra.mxu0 0.0
        %1822 = vmatpush.msra.mxu0 0.0
        %1823 = vmatpush.msra.mxu0 0.0
        %1824 = vmatpush.msra.mxu0 0.0
        %1825 = vmatpush.msra.mxu0 %v1805
        %1826 = vmatpush.msra.mxu0 %v1804
        %1827 = vmatpush.msra.mxu0 %v1803
        %1828 = vmatpush.msra.mxu0 %v1802
        %1829 = vmatmul.f32.gmra.mxu0 %v1811
        %v1830 = vpop.f32.mrf.mxu0
        %v1831 = vadd.f32 %v1808, %v1830
        %1832 = vdwg.mxu0
        %v1833 = vadd.f32 %v1366, %v1831
        %v1834 = vsel %vm1406, %v1833, 0.0
        %1835 = vadd.xlane.f32.xlu0 %v1834
        %v1836 = vpop.xlane.xlu0 %1835
        %v1837 = vrcp.pop 32.0
        %v1838 = vmul.f32 32.0, %v1837
        %v1839 = vsub.f32 1.0, %v1838
        %v1840 = vmul.f32 %v1837, %v1839
        %v1841 = vadd.f32 %v1837, %v1840
        %vm1842 = vweird.f32 %v1837
        %v1843 = vsel %vm1842, %v1837, %v1841
        %v1844 = vmul.f32 %v1836, %v1843
        %v1845 = vsub.f32 %v1833, %v1844
        %v1846 = vmul.f32 %v1845, %v1845
        %v1847 = vsel %vm1406, %v1846, 0.0
        %1848 = vadd.xlane.f32.xlu0 %v1847
        %v1849 = vpop.xlane.xlu0 %1848
        %v1850 = vmul.f32 %v1849, %v1843
        %v1851 = vadd.f32 %v1850, 1e-05
        %v1852 = vrsqrt.pop %v1851
        %v1853 = vmul.f32 %v1852, %v1851
        %v1854 = vmul.f32 %v1853, %v1852
        %v1855 = vmul.f32 0.5, %v1854
        %v1856 = vsub.f32 1.5, %v1855
        %v1857 = vmul.f32 %v1852, %v1856
        %vm1858 = vweird.f32 %v1851
        %vm1859 = vweird.f32 %v1852
        %vm1860 = vmor %vm1858, %vm1859
        %v1861 = vsel %vm1860, %v1852, %v1857
        %v1862 = vmul.f32 %v1845, %v1861
        %v1863 = vld [vmem:[#allocation9] sm:$0x1]
        %v1865 = vperm.slane %v1863, 0
        %v1867 = vmul.f32 %v1862, %v1865
        %v1868 = vld [vmem:[#allocation10] sm:$0x1]
        %v1870 = vperm.slane %v1868, 0
        %v1872 = vadd.f32 %v1867, %v1870
        %v1873 = vld [vmem:[#allocation12] sm:$0xff]
        %v1874 = vld [vmem:[#allocation12 + $0x8] sm:$0xff]
        %v1875 = vld [vmem:[#allocation12 + $0x10] sm:$0xff]
        %v1876 = vld [vmem:[#allocation12 + $0x18] sm:$0xff]
        %v1877 = vld [vmem:[#allocation13] sm:$0x1]
        %v1879 = vperm.slane %v1877, 0
        %v1882 = vsel %vm1406, %v1872, 0
        %1884 = vmatpush.msra.mxu0 0.0
        %1885 = vmatpush.msra.mxu0 0.0
        %1886 = vmatpush.msra.mxu0 0.0
        %1887 = vmatpush.msra.mxu0 0.0
        %1888 = vmatpush.msra.mxu0 0.0
        %1889 = vmatpush.msra.mxu0 0.0
        %1890 = vmatpush.msra.mxu0 0.0
        %1891 = vmatpush.msra.mxu0 0.0
        %1892 = vmatpush.msra.mxu0 0.0
        %1893 = vmatpush.msra.mxu0 0.0
        %1894 = vmatpush.msra.mxu0 0.0
        %1895 = vmatpush.msra.mxu0 0.0
        %1896 = vmatpush.msra.mxu0 %v1876
        %1897 = vmatpush.msra.mxu0 %v1875
        %1898 = vmatpush.msra.mxu0 %v1874
        %1899 = vmatpush.msra.mxu0 %v1873
        %1900 = vmatmul.f32.gmra.mxu0 %v1882
        %v1901 = vpop.f32.mrf.mxu0
        %v1902 = vadd.f32 %v1879, %v1901
        %1903 = vdwg.mxu0
        %v1904 = vmax.f32 %v1902, 0.0
        %v1905 = vld [vmem:[#allocation15] sm:$0xff]
        %v1906 = vld [vmem:[#allocation15 + $0x8] sm:$0xff]
        %v1907 = vld [vmem:[#allocation15 + $0x10] sm:$0xff]
        %v1908 = vld [vmem:[#allocation15 + $0x18] sm:$0xff]
        %v1909 = vld [vmem:[#allocation16] sm:$0x1]
        %v1911 = vperm.slane %v1909, 0
        %v1914 = vsel %vm1406, %v1904, 0
        %1916 = vmatpush.msra.mxu0 0.0
        %1917 = vmatpush.msra.mxu0 0.0
        %1918 = vmatpush.msra.mxu0 0.0
        %1919 = vmatpush.msra.mxu0 0.0
        %1920 = vmatpush.msra.mxu0 0.0
        %1921 = vmatpush.msra.mxu0 0.0
        %1922 = vmatpush.msra.mxu0 0.0
        %1923 = vmatpush.msra.mxu0 0.0
        %1924 = vmatpush.msra.mxu0 0.0
        %1925 = vmatpush.msra.mxu0 0.0
        %1926 = vmatpush.msra.mxu0 0.0
        %1927 = vmatpush.msra.mxu0 0.0
        %1928 = vmatpush.msra.mxu0 %v1908
        %1929 = vmatpush.msra.mxu0 %v1907
        %1930 = vmatpush.msra.mxu0 %v1906
        %1931 = vmatpush.msra.mxu0 %v1905
        %1932 = vmatmul.f32.gmra.mxu0 %v1914
        %v1933 = vpop.f32.mrf.mxu0
        %v1934 = vadd.f32 %v1911, %v1933
        %1935 = vdwg.mxu0
        %v1936 = vadd.f32 %v1872, %v1934
        %v1937 = vsel %vm1406, %v1936, 0.0
        %1938 = vadd.xlane.f32.xlu0 %v1937
        %v1939 = vpop.xlane.xlu0 %1938
        %v1940 = vmul.f32 %v1939, %v1843
        %v1941 = vsub.f32 %v1936, %v1940
        %v1942 = vmul.f32 %v1941, %v1941
        %v1943 = vsel %vm1406, %v1942, 0.0
        %1944 = vadd.xlane.f32.xlu0 %v1943
        %v1945 = vpop.xlane.xlu0 %1944
        %v1946 = vmul.f32 %v1945, %v1843
        %v1947 = vadd.f32 %v1946, 1e-05
        %v1948 = vrsqrt.pop %v1947
        %v1949 = vmul.f32 %v1948, %v1947
        %v1950 = vmul.f32 %v1949, %v1948
        %v1951 = vmul.f32 0.5, %v1950
        %v1952 = vsub.f32 1.5, %v1951
        %v1953 = vmul.f32 %v1948, %v1952
        %vm1954 = vweird.f32 %v1947
        %vm1955 = vweird.f32 %v1948
        %vm1956 = vmor %vm1954, %vm1955
        %v1957 = vsel %vm1956, %v1948, %v1953
        %v1958 = vmul.f32 %v1941, %v1957
        %v1959 = vld [vmem:[#allocation18] sm:$0x1]
        %v1961 = vperm.slane %v1959, 0
        %v1963 = vmul.f32 %v1958, %v1961
        %v1964 = vld [vmem:[#allocation19] sm:$0x1]
        %v1966 = vperm.slane %v1964, 0
        %v1968 = vadd.f32 %v1963, %v1966
        %1969 = vxpose.xlu0.b32.start [1/16] %v1521, 128
        %1970 = vxpose.xlu0.b32.cont [2/16] 0.0, 128
        %1971 = vxpose.xlu0.b32.cont [3/16] 0.0, 128
        %1972 = vxpose.xlu0.b32.cont [4/16] 0.0, 128
        %1973 = vxpose.xlu0.b32.cont [5/16] 0.0, 128
        %1974 = vxpose.xlu0.b32.cont [6/16] 0.0, 128
        %1975 = vxpose.xlu0.b32.cont [7/16] 0.0, 128
        %1976 = vxpose.xlu0.b32.cont [8/16] 0.0, 128
        %1977 = vxpose.xlu0.b32.cont [9/16] 0.0, 128
        %1978 = vxpose.xlu0.b32.cont [10/16] 0.0, 128
        %1979 = vxpose.xlu0.b32.cont [11/16] 0.0, 128
        %1980 = vxpose.xlu0.b32.cont [12/16] 0.0, 128
        %1981 = vxpose.xlu0.b32.cont [13/16] 0.0, 128
        %1982 = vxpose.xlu0.b32.cont [14/16] 0.0, 128
        %1983 = vxpose.xlu0.b32.cont [15/16] 0.0, 128
        %1984 = vxpose.xlu0.b32.end [16/16] 0.0, 128
        %v1985 = vpop.trf.xlu0
        %v1986 = vpop.trf.xlu0
        %v1987 = vpop.trf.xlu0
        %v1988 = vpop.trf.xlu0
        %v1989 = vpop.trf.xlu0
        %v1990 = vpop.trf.xlu0
        %v1991 = vpop.trf.xlu0
        %v1992 = vpop.trf.xlu0
        %v1993 = vpop.trf.xlu0
        %v1994 = vpop.trf.xlu0
        %v1995 = vpop.trf.xlu0
        %v1996 = vpop.trf.xlu0
        %v1997 = vpop.trf.xlu0
        %v1998 = vpop.trf.xlu0
        %v1999 = vpop.trf.xlu0
        %v2000 = vpop.trf.xlu0
        %2005 = vrot.lane.b32.xlu0 %v1985, 8
        %v2006 = vpop.permute.xlu0 %2005
        %2007 = vrot.lane.b32.xlu0 %v1986, 8
        %v2008 = vpop.permute.xlu0 %2007
        %2009 = vrot.lane.b32.xlu0 %v1987, 8
        %v2010 = vpop.permute.xlu0 %2009
        %2011 = vrot.lane.b32.xlu0 %v1988, 8
        %v2012 = vpop.permute.xlu0 %2011
        %2017 = vrot.lane.b32.xlu0 %v1985, 16
        %v2018 = vpop.permute.xlu0 %2017
        %2019 = vrot.lane.b32.xlu0 %v1986, 16
        %v2020 = vpop.permute.xlu0 %2019
        %2021 = vrot.lane.b32.xlu0 %v1987, 16
        %v2022 = vpop.permute.xlu0 %2021
        %2023 = vrot.lane.b32.xlu0 %v1988, 16
        %v2024 = vpop.permute.xlu0 %2023
        %2029 = vrot.lane.b32.xlu0 %v1985, 24
        %v2030 = vpop.permute.xlu0 %2029
        %2031 = vrot.lane.b32.xlu0 %v1986, 24
        %v2032 = vpop.permute.xlu0 %2031
        %2033 = vrot.lane.b32.xlu0 %v1987, 24
        %v2034 = vpop.permute.xlu0 %2033
        %2035 = vrot.lane.b32.xlu0 %v1988, 24
        %v2036 = vpop.permute.xlu0 %2035
        %2041 = vrot.lane.b32.xlu0 %v1985, 32
        %v2042 = vpop.permute.xlu0 %2041
        %2043 = vrot.lane.b32.xlu0 %v1986, 32
        %v2044 = vpop.permute.xlu0 %2043
        %2045 = vrot.lane.b32.xlu0 %v1987, 32
        %v2046 = vpop.permute.xlu0 %2045
        %2047 = vrot.lane.b32.xlu0 %v1988, 32
        %v2048 = vpop.permute.xlu0 %2047
        %2053 = vrot.lane.b32.xlu0 %v1985, 40
        %v2054 = vpop.permute.xlu0 %2053
        %2055 = vrot.lane.b32.xlu0 %v1986, 40
        %v2056 = vpop.permute.xlu0 %2055
        %2057 = vrot.lane.b32.xlu0 %v1987, 40
        %v2058 = vpop.permute.xlu0 %2057
        %2059 = vrot.lane.b32.xlu0 %v1988, 40
        %v2060 = vpop.permute.xlu0 %2059
        %2065 = vrot.lane.b32.xlu0 %v1985, 48
        %v2066 = vpop.permute.xlu0 %2065
        %2067 = vrot.lane.b32.xlu0 %v1986, 48
        %v2068 = vpop.permute.xlu0 %2067
        %2069 = vrot.lane.b32.xlu0 %v1987, 48
        %v2070 = vpop.permute.xlu0 %2069
        %2071 = vrot.lane.b32.xlu0 %v1988, 48
        %v2072 = vpop.permute.xlu0 %2071
        %2077 = vrot.lane.b32.xlu0 %v1985, 56
        %v2078 = vpop.permute.xlu0 %2077
        %2079 = vrot.lane.b32.xlu0 %v1986, 56
        %v2080 = vpop.permute.xlu0 %2079
        %2081 = vrot.lane.b32.xlu0 %v1987, 56
        %v2082 = vpop.permute.xlu0 %2081
        %2083 = vrot.lane.b32.xlu0 %v1988, 56
        %v2084 = vpop.permute.xlu0 %2083
        %v2089 = vsel %vm1665, %v1985, %v2006
        %v2090 = vsel %vm1665, %v1986, %v2008
        %v2091 = vsel %vm1665, %v1987, %v2010
        %v2092 = vsel %vm1665, %v1988, %v2012
        %v2093 = vsel %vm1670, %v2089, %v2018
        %v2094 = vsel %vm1670, %v2090, %v2020
        %v2095 = vsel %vm1670, %v2091, %v2022
        %v2096 = vsel %vm1670, %v2092, %v2024
        %v2097 = vsel %vm1675, %v2093, %v2030
        %v2098 = vsel %vm1675, %v2094, %v2032
        %v2099 = vsel %vm1675, %v2095, %v2034
        %v2100 = vsel %vm1675, %v2096, %v2036
        %v2101 = vsel %vm1406, %v2097, %v2042
        %v2102 = vsel %vm1406, %v2098, %v2044
        %v2103 = vsel %vm1406, %v2099, %v2046
        %v2104 = vsel %vm1406, %v2100, %v2048
        %v2105 = vsel %vm1684, %v2101, %v2054
        %v2106 = vsel %vm1684, %v2102, %v2056
        %v2107 = vsel %vm1684, %v2103, %v2058
        %v2108 = vsel %vm1684, %v2104, %v2060
        %v2109 = vsel %vm1689, %v2105, %v2066
        %v2110 = vsel %vm1689, %v2106, %v2068
        %v2111 = vsel %vm1689, %v2107, %v2070
        %v2112 = vsel %vm1689, %v2108, %v2072
        %v2113 = vsel %vm1694, %v2109, %v2078
        %v2114 = vsel %vm1694, %v2110, %v2080
        %v2115 = vsel %vm1694, %v2111, %v2082
        %v2116 = vsel %vm1694, %v2112, %v2084
        %v2117 = vmul.f32 %v2113, %v1346
        %v2118 = vmul.f32 %v2114, %v1347
        %v2119 = vmul.f32 %v2115, %v1348
        %v2120 = vmul.f32 %v2116, %v1349
        %v2122 = vsel %vm1406, %v1499, 0
        %2124 = vmatpush.msra.mxu0 0.0
        %2125 = vmatpush.msra.mxu0 0.0
        %2126 = vmatpush.msra.mxu0 0.0
        %2127 = vmatpush.msra.mxu0 0.0
        %2128 = vmatpush.msra.mxu0 0.0
        %2129 = vmatpush.msra.mxu0 0.0
        %2130 = vmatpush.msra.mxu0 0.0
        %2131 = vmatpush.msra.mxu0 0.0
        %2132 = vmatpush.msra.mxu0 0.0
        %2133 = vmatpush.msra.mxu0 0.0
        %2134 = vmatpush.msra.mxu0 0.0
        %2135 = vmatpush.msra.mxu0 0.0
        %2136 = vmatpush.msra.mxu0 %v2120
        %2137 = vmatpush.msra.mxu0 %v2119
        %2138 = vmatpush.msra.mxu0 %v2118
        %2139 = vmatpush.msra.mxu0 %v2117
        %2140 = vmatmul.f32.gmra.mxu0 %v2122
        %v2141 = vpop.f32.mrf.mxu0
        %v2142 = vadd.f32 0.0, %v2141
        %2143 = vdwg.mxu0
        %v2144 = vsel %vm1726, %v2142, -inf
        %2145 = vmax.xlane.f32.xlu0 %v2144
        %v2146 = vpop.xlane.xlu0 %2145
        %v2147 = vsub.f32 %v2142, %v2146
        %v2148 = vmul.f32 %v2147, 1.442695
        %v2149 = vpow.pop %v2148
        %v2151 = vsel %vm1726, %v2149, 0
        %2153 = vmatpush.msra.mxu0 0.0
        %2154 = vmatpush.msra.mxu0 0.0
        %2155 = vmatpush.msra.mxu0 0.0
        %2156 = vmatpush.msra.mxu0 0.0
        %2157 = vmatpush.msra.mxu0 0.0
        %2158 = vmatpush.msra.mxu0 0.0
        %2159 = vmatpush.msra.mxu0 0.0
        %2160 = vmatpush.msra.mxu0 0.0
        %2161 = vmatpush.msra.mxu0 %v1357
        %2162 = vmatpush.msra.mxu0 %v1356
        %2163 = vmatpush.msra.mxu0 %v1355
        %2164 = vmatpush.msra.mxu0 %v1354
        %2165 = vmatpush.msra.mxu0 %v1353
        %2166 = vmatpush.msra.mxu0 %v1352
        %2167 = vmatpush.msra.mxu0 %v1351
        %2168 = vmatpush.msra.mxu0 %v1350
        %2169 = vmatmul.f32.gmra.mxu0 %v2151
        %v2170 = vpop.f32.mrf.mxu0
        %v2171 = vadd.f32 0.0, %v2170
        %2172 = vdwg.mxu0
        %v2173 = vrcp.pop %v2171
        %v2174 = vmul.f32 %v2171, %v2173
        %v2175 = vsub.f32 1.0, %v2174
        %v2176 = vmul.f32 %v2173, %v2175
        %v2177 = vadd.f32 %v2173, %v2176
        %vm2178 = vweird.f32 %v2171
        %vm2179 = vweird.f32 %v2173
        %vm2180 = vmor %vm2178, %vm2179
        %v2181 = vsel %vm2180, %v2173, %v2177
        %v2182 = vand.u32 2147483647, %v2171
        %vm2183 = vcmp.eq.f32.partialorder %v2182, 8.507059e+37
        %v2184 = vand.u32 %v2171, 2147483648
        %v2185 = vor.u32 1.1754944e-38, %v2184
        %v2186 = vsel %vm2183, %v2185, %v2181
        %v2187 = vmul.f32 %v2149, %v2186
        %v2188 = vmul.f32 %v1543, %v1358
        %v2189 = vmul.f32 %v1543, %v1359
        %v2190 = vmul.f32 %v1543, %v1360
        %v2191 = vmul.f32 %v1543, %v1361
        %v2192 = vmul.f32 %v1543, %v1362
        %v2193 = vmul.f32 %v1543, %v1363
        %v2194 = vmul.f32 %v1543, %v1364
        %v2195 = vmul.f32 %v1543, %v1365
        %v2197 = vsel %vm1726, %v2187, 0
        %2199 = vmatpush.msra.mxu0 0.0
        %2200 = vmatpush.msra.mxu0 0.0
        %2201 = vmatpush.msra.mxu0 0.0
        %2202 = vmatpush.msra.mxu0 0.0
        %2203 = vmatpush.msra.mxu0 0.0
        %2204 = vmatpush.msra.mxu0 0.0
        %2205 = vmatpush.msra.mxu0 0.0
        %2206 = vmatpush.msra.mxu0 0.0
        %2207 = vmatpush.msra.mxu0 %v2195
        %2208 = vmatpush.msra.mxu0 %v2194
        %2209 = vmatpush.msra.mxu0 %v2193
        %2210 = vmatpush.msra.mxu0 %v2192
        %2211 = vmatpush.msra.mxu0 %v2191
        %2212 = vmatpush.msra.mxu0 %v2190
        %2213 = vmatpush.msra.mxu0 %v2189
        %2214 = vmatpush.msra.mxu0 %v2188
        %2215 = vmatmul.f32.gmra.mxu0 %v2197
        %v2216 = vpop.f32.mrf.mxu0
        %v2217 = vadd.f32 0.0, %v2216
        %2218 = vdwg.mxu0
        %v2219 = vld [vmem:[#allocation21] sm:$0xff]
        %v2220 = vld [vmem:[#allocation21 + $0x8] sm:$0xff]
        %v2221 = vld [vmem:[#allocation21 + $0x10] sm:$0xff]
        %v2222 = vld [vmem:[#allocation21 + $0x18] sm:$0xff]
        %v2223 = vld [vmem:[#allocation22] sm:$0x1]
        %v2225 = vperm.slane %v2223, 0
        %v2228 = vsel %vm1406, %v2217, 0
        %2230 = vmatpush.msra.mxu0 0.0
        %2231 = vmatpush.msra.mxu0 0.0
        %2232 = vmatpush.msra.mxu0 0.0
        %2233 = vmatpush.msra.mxu0 0.0
        %2234 = vmatpush.msra.mxu0 0.0
        %2235 = vmatpush.msra.mxu0 0.0
        %2236 = vmatpush.msra.mxu0 0.0
        %2237 = vmatpush.msra.mxu0 0.0
        %2238 = vmatpush.msra.mxu0 0.0
        %2239 = vmatpush.msra.mxu0 0.0
        %2240 = vmatpush.msra.mxu0 0.0
        %2241 = vmatpush.msra.mxu0 0.0
        %2242 = vmatpush.msra.mxu0 %v2222
        %2243 = vmatpush.msra.mxu0 %v2221
        %2244 = vmatpush.msra.mxu0 %v2220
        %2245 = vmatpush.msra.mxu0 %v2219
        %2246 = vmatmul.f32.gmra.mxu0 %v2228
        %v2247 = vpop.f32.mrf.mxu0
        %v2248 = vadd.f32 %v2225, %v2247
        %2249 = vdwg.mxu0
        %v2250 = vadd.f32 %v1367, %v2248
        %v2251 = vsel %vm1406, %v2250, 0.0
        %2252 = vadd.xlane.f32.xlu0 %v2251
        %v2253 = vpop.xlane.xlu0 %2252
        %v2254 = vmul.f32 %v2253, %v1843
        %v2255 = vsub.f32 %v2250, %v2254
        %v2256 = vmul.f32 %v2255, %v2255
        %v2257 = vsel %vm1406, %v2256, 0.0
        %2258 = vadd.xlane.f32.xlu0 %v2257
        %v2259 = vpop.xlane.xlu0 %2258
        %v2260 = vmul.f32 %v2259, %v1843
        %v2261 = vadd.f32 %v2260, 1e-05
        %v2262 = vrsqrt.pop %v2261
        %v2263 = vmul.f32 %v2262, %v2261
        %v2264 = vmul.f32 %v2263, %v2262
        %v2265 = vmul.f32 0.5, %v2264
        %v2266 = vsub.f32 1.5, %v2265
        %v2267 = vmul.f32 %v2262, %v2266
        %vm2268 = vweird.f32 %v2261
        %vm2269 = vweird.f32 %v2262
        %vm2270 = vmor %vm2268, %vm2269
        %v2271 = vsel %vm2270, %v2262, %v2267
        %v2272 = vmul.f32 %v2255, %v2271
        %v2273 = vld [vmem:[%s47] sm:$0x1]
        %v2275 = vperm.slane %v2273, 0
        %v2277 = vmul.f32 %v2272, %v2275
        %v2278 = vld [vmem:[%s49] sm:$0x1]
        %v2280 = vperm.slane %v2278, 0
        %v2282 = vadd.f32 %v2277, %v2280
        %v2283 = vld [vmem:[%s39] sm:$0xff]
        %v2284 = vld [vmem:[%s39 + $0x8] sm:$0xff]
        %v2285 = vld [vmem:[%s39 + $0x10] sm:$0xff]
        %v2286 = vld [vmem:[%s39 + $0x18] sm:$0xff]
        %v2287 = vld [vmem:[%s39 + $0x20] sm:$0xff]
        %v2288 = vld [vmem:[%s39 + $0x28] sm:$0xff]
        %v2289 = vld [vmem:[%s39 + $0x30] sm:$0xff]
        %v2290 = vld [vmem:[%s39 + $0x38] sm:$0xff]
        %v2291 = vld [vmem:[%s39 + $0x40] sm:$0xff]
        %v2292 = vld [vmem:[%s39 + $0x48] sm:$0xff]
        %v2293 = vld [vmem:[%s39 + $0x50] sm:$0xff]
        %v2294 = vld [vmem:[%s39 + $0x58] sm:$0xff]
        %v2295 = vld [vmem:[#allocation24] sm:$0x7]
        %v2297 = vperm.slane %v2295, 0
        %v2298 = vperm.slane %v2295, 1
        %v2299 = vperm.slane %v2295, 2
        %v2304 = vsel %vm1406, %v2282, 0
        %v2307 = vsel %vm1406, %v1968, 0
        %2309 = vmatpush.msra.mxu0 0.0
        %2310 = vmatpush.msra.mxu0 0.0
        %2311 = vmatpush.msra.mxu0 0.0
        %2312 = vmatpush.msra.mxu0 0.0
        %2313 = vmatpush.msra.mxu0 0.0
        %2314 = vmatpush.msra.mxu0 0.0
        %2315 = vmatpush.msra.mxu0 0.0
        %2316 = vmatpush.msra.mxu0 0.0
        %2317 = vmatpush.msra.mxu0 0.0
        %2318 = vmatpush.msra.mxu0 0.0
        %2319 = vmatpush.msra.mxu0 0.0
        %2320 = vmatpush.msra.mxu0 0.0
        %2321 = vmatpush.msra.mxu0 %v2292
        %2322 = vmatpush.msra.mxu0 %v2289
        %2323 = vmatpush.msra.mxu0 %v2286
        %2324 = vmatpush.msra.mxu0 %v2283
        %2325 = vmatmul.f32.gmra.mxu0 %v2304
        %v2326 = vpop.f32.mrf.mxu0
        %v2327 = vadd.f32 %v2297, %v2326
        %2328 = vmatmul.f32.gmra.mxu0 %v2307
        %v2329 = vpop.f32.mrf.mxu0
        %2330 = vdwg.mxu0
        %2331 = vmatpush.msra.mxu0 0.0
        %2332 = vmatpush.msra.mxu0 0.0
        %2333 = vmatpush.msra.mxu0 0.0
        %2334 = vmatpush.msra.mxu0 0.0
        %2335 = vmatpush.msra.mxu0 0.0
        %2336 = vmatpush.msra.mxu0 0.0
        %2337 = vmatpush.msra.mxu0 0.0
        %2338 = vmatpush.msra.mxu0 0.0
        %2339 = vmatpush.msra.mxu0 0.0
        %2340 = vmatpush.msra.mxu0 0.0
        %2341 = vmatpush.msra.mxu0 0.0
        %2342 = vmatpush.msra.mxu0 0.0
        %2343 = vmatpush.msra.mxu0 %v2293
        %2344 = vmatpush.msra.mxu0 %v2290
        %2345 = vmatpush.msra.mxu0 %v2287
        %2346 = vmatpush.msra.mxu0 %v2284
        %2347 = vmatmul.f32.gmra.mxu0 %v2304
        %v2348 = vpop.f32.mrf.mxu0
        %2349 = vmatmul.f32.gmra.mxu0 %v2307
        %v2350 = vpop.f32.mrf.mxu0
        %v2351 = vadd.f32 %v2298, %v2350
        %2352 = vdwg.mxu0
        %2353 = vmatpush.msra.mxu0 0.0
        %2354 = vmatpush.msra.mxu0 0.0
        %2355 = vmatpush.msra.mxu0 0.0
        %2356 = vmatpush.msra.mxu0 0.0
        %2357 = vmatpush.msra.mxu0 0.0
        %2358 = vmatpush.msra.mxu0 0.0
        %2359 = vmatpush.msra.mxu0 0.0
        %2360 = vmatpush.msra.mxu0 0.0
        %2361 = vmatpush.msra.mxu0 0.0
        %2362 = vmatpush.msra.mxu0 0.0
        %2363 = vmatpush.msra.mxu0 0.0
        %2364 = vmatpush.msra.mxu0 0.0
        %2365 = vmatpush.msra.mxu0 %v2294
        %2366 = vmatpush.msra.mxu0 %v2291
        %2367 = vmatpush.msra.mxu0 %v2288
        %2368 = vmatpush.msra.mxu0 %v2285
        %2369 = vmatmul.f32.gmra.mxu0 %v2304
        %v2370 = vpop.f32.mrf.mxu0
        %2371 = vmatmul.f32.gmra.mxu0 %v2307
        %v2372 = vpop.f32.mrf.mxu0
        %v2373 = vadd.f32 %v2299, %v2372
        %2374 = vdwg.mxu0
        %2375 = vxpose.xlu0.b32.start [1/16] %v2351, 128
        %2376 = vxpose.xlu0.b32.cont [2/16] 0.0, 128
        %2377 = vxpose.xlu0.b32.cont [3/16] 0.0, 128
        %2378 = vxpose.xlu0.b32.cont [4/16] 0.0, 128
        %2379 = vxpose.xlu0.b32.cont [5/16] 0.0, 128
        %2380 = vxpose.xlu0.b32.cont [6/16] 0.0, 128
        %2381 = vxpose.xlu0.b32.cont [7/16] 0.0, 128
        %2382 = vxpose.xlu0.b32.cont [8/16] 0.0, 128
        %2383 = vxpose.xlu0.b32.cont [9/16] 0.0, 128
        %2384 = vxpose.xlu0.b32.cont [10/16] 0.0, 128
        %2385 = vxpose.xlu0.b32.cont [11/16] 0.0, 128
        %2386 = vxpose.xlu0.b32.cont [12/16] 0.0, 128
        %2387 = vxpose.xlu0.b32.cont [13/16] 0.0, 128
        %2388 = vxpose.xlu0.b32.cont [14/16] 0.0, 128
        %2389 = vxpose.xlu0.b32.cont [15/16] 0.0, 128
        %2390 = vxpose.xlu0.b32.end [16/16] 0.0, 128
        %v2391 = vpop.trf.xlu0
        %v2392 = vpop.trf.xlu0
        %v2393 = vpop.trf.xlu0
        %v2394 = vpop.trf.xlu0
        %v2395 = vpop.trf.xlu0
        %v2396 = vpop.trf.xlu0
        %v2397 = vpop.trf.xlu0
        %v2398 = vpop.trf.xlu0
        %v2399 = vpop.trf.xlu0
        %v2400 = vpop.trf.xlu0
        %v2401 = vpop.trf.xlu0
        %v2402 = vpop.trf.xlu0
        %v2403 = vpop.trf.xlu0
        %v2404 = vpop.trf.xlu0
        %v2405 = vpop.trf.xlu0
        %v2406 = vpop.trf.xlu0
        %2411 = vrot.lane.b32.xlu0 %v2391, 8
        %v2412 = vpop.permute.xlu0 %2411
        %2413 = vrot.lane.b32.xlu0 %v2392, 8
        %v2414 = vpop.permute.xlu0 %2413
        %2415 = vrot.lane.b32.xlu0 %v2393, 8
        %v2416 = vpop.permute.xlu0 %2415
        %2417 = vrot.lane.b32.xlu0 %v2394, 8
        %v2418 = vpop.permute.xlu0 %2417
        %2423 = vrot.lane.b32.xlu0 %v2391, 16
        %v2424 = vpop.permute.xlu0 %2423
        %2425 = vrot.lane.b32.xlu0 %v2392, 16
        %v2426 = vpop.permute.xlu0 %2425
        %2427 = vrot.lane.b32.xlu0 %v2393, 16
        %v2428 = vpop.permute.xlu0 %2427
        %2429 = vrot.lane.b32.xlu0 %v2394, 16
        %v2430 = vpop.permute.xlu0 %2429
        %2435 = vrot.lane.b32.xlu0 %v2391, 24
        %v2436 = vpop.permute.xlu0 %2435
        %2437 = vrot.lane.b32.xlu0 %v2392, 24
        %v2438 = vpop.permute.xlu0 %2437
        %2439 = vrot.lane.b32.xlu0 %v2393, 24
        %v2440 = vpop.permute.xlu0 %2439
        %2441 = vrot.lane.b32.xlu0 %v2394, 24
        %v2442 = vpop.permute.xlu0 %2441
        %2447 = vrot.lane.b32.xlu0 %v2391, 32
        %v2448 = vpop.permute.xlu0 %2447
        %2449 = vrot.lane.b32.xlu0 %v2392, 32
        %v2450 = vpop.permute.xlu0 %2449
        %2451 = vrot.lane.b32.xlu0 %v2393, 32
        %v2452 = vpop.permute.xlu0 %2451
        %2453 = vrot.lane.b32.xlu0 %v2394, 32
        %v2454 = vpop.permute.xlu0 %2453
        %2459 = vrot.lane.b32.xlu0 %v2391, 40
        %v2460 = vpop.permute.xlu0 %2459
        %2461 = vrot.lane.b32.xlu0 %v2392, 40
        %v2462 = vpop.permute.xlu0 %2461
        %2463 = vrot.lane.b32.xlu0 %v2393, 40
        %v2464 = vpop.permute.xlu0 %2463
        %2465 = vrot.lane.b32.xlu0 %v2394, 40
        %v2466 = vpop.permute.xlu0 %2465
        %2471 = vrot.lane.b32.xlu0 %v2391, 48
        %v2472 = vpop.permute.xlu0 %2471
        %2473 = vrot.lane.b32.xlu0 %v2392, 48
        %v2474 = vpop.permute.xlu0 %2473
        %2475 = vrot.lane.b32.xlu0 %v2393, 48
        %v2476 = vpop.permute.xlu0 %2475
        %2477 = vrot.lane.b32.xlu0 %v2394, 48
        %v2478 = vpop.permute.xlu0 %2477
        %2483 = vrot.lane.b32.xlu0 %v2391, 56
        %v2484 = vpop.permute.xlu0 %2483
        %2485 = vrot.lane.b32.xlu0 %v2392, 56
        %v2486 = vpop.permute.xlu0 %2485
        %2487 = vrot.lane.b32.xlu0 %v2393, 56
        %v2488 = vpop.permute.xlu0 %2487
        %2489 = vrot.lane.b32.xlu0 %v2394, 56
        %v2490 = vpop.permute.xlu0 %2489
        %v2495 = vsel %vm1665, %v2391, %v2412
        %v2496 = vsel %vm1665, %v2392, %v2414
        %v2497 = vsel %vm1665, %v2393, %v2416
        %v2498 = vsel %vm1665, %v2394, %v2418
        %v2499 = vsel %vm1670, %v2495, %v2424
        %v2500 = vsel %vm1670, %v2496, %v2426
        %v2501 = vsel %vm1670, %v2497, %v2428
        %v2502 = vsel %vm1670, %v2498, %v2430
        %v2503 = vsel %vm1675, %v2499, %v2436
        %v2504 = vsel %vm1675, %v2500, %v2438
        %v2505 = vsel %vm1675, %v2501, %v2440
        %v2506 = vsel %vm1675, %v2502, %v2442
        %v2507 = vsel %vm1406, %v2503, %v2448
        %v2508 = vsel %vm1406, %v2504, %v2450
        %v2509 = vsel %vm1406, %v2505, %v2452
        %v2510 = vsel %vm1406, %v2506, %v2454
        %v2511 = vsel %vm1684, %v2507, %v2460
        %v2512 = vsel %vm1684, %v2508, %v2462
        %v2513 = vsel %vm1684, %v2509, %v2464
        %v2514 = vsel %vm1684, %v2510, %v2466
        %v2515 = vsel %vm1689, %v2511, %v2472
        %v2516 = vsel %vm1689, %v2512, %v2474
        %v2517 = vsel %vm1689, %v2513, %v2476
        %v2518 = vsel %vm1689, %v2514, %v2478
        %v2519 = vsel %vm1694, %v2515, %v2484
        %v2520 = vsel %vm1694, %v2516, %v2486
        %v2521 = vsel %vm1694, %v2517, %v2488
        %v2522 = vsel %vm1694, %v2518, %v2490
        %v2523 = vmul.f32 %v2519, %v1346
        %v2524 = vmul.f32 %v2520, %v1347
        %v2525 = vmul.f32 %v2521, %v1348
        %v2526 = vmul.f32 %v2522, %v1349
        %v2528 = vsel %vm1406, %v2327, 0
        %2530 = vmatpush.msra.mxu0 0.0
        %2531 = vmatpush.msra.mxu0 0.0
        %2532 = vmatpush.msra.mxu0 0.0
        %2533 = vmatpush.msra.mxu0 0.0
        %2534 = vmatpush.msra.mxu0 0.0
        %2535 = vmatpush.msra.mxu0 0.0
        %2536 = vmatpush.msra.mxu0 0.0
        %2537 = vmatpush.msra.mxu0 0.0
        %2538 = vmatpush.msra.mxu0 0.0
        %2539 = vmatpush.msra.mxu0 0.0
        %2540 = vmatpush.msra.mxu0 0.0
        %2541 = vmatpush.msra.mxu0 0.0
        %2542 = vmatpush.msra.mxu0 %v2526
        %2543 = vmatpush.msra.mxu0 %v2525
        %2544 = vmatpush.msra.mxu0 %v2524
        %2545 = vmatpush.msra.mxu0 %v2523
        %2546 = vmatmul.f32.gmra.mxu0 %v2528
        %v2547 = vpop.f32.mrf.mxu0
        %v2548 = vadd.f32 0.0, %v2547
        %2549 = vdwg.mxu0
        %v2550 = vsel %vm1726, %v2548, -inf
        %2551 = vmax.xlane.f32.xlu0 %v2550
        %v2552 = vpop.xlane.xlu0 %2551
        %v2553 = vsub.f32 %v2548, %v2552
        %v2554 = vmul.f32 %v2553, 1.442695
        %v2555 = vpow.pop %v2554
        %v2557 = vsel %vm1726, %v2555, 0
        %2559 = vmatpush.msra.mxu0 0.0
        %2560 = vmatpush.msra.mxu0 0.0
        %2561 = vmatpush.msra.mxu0 0.0
        %2562 = vmatpush.msra.mxu0 0.0
        %2563 = vmatpush.msra.mxu0 0.0
        %2564 = vmatpush.msra.mxu0 0.0
        %2565 = vmatpush.msra.mxu0 0.0
        %2566 = vmatpush.msra.mxu0 0.0
        %2567 = vmatpush.msra.mxu0 %v1357
        %2568 = vmatpush.msra.mxu0 %v1356
        %2569 = vmatpush.msra.mxu0 %v1355
        %2570 = vmatpush.msra.mxu0 %v1354
        %2571 = vmatpush.msra.mxu0 %v1353
        %2572 = vmatpush.msra.mxu0 %v1352
        %2573 = vmatpush.msra.mxu0 %v1351
        %2574 = vmatpush.msra.mxu0 %v1350
        %2575 = vmatmul.f32.gmra.mxu0 %v2557
        %v2576 = vpop.f32.mrf.mxu0
        %v2577 = vadd.f32 0.0, %v2576
        %2578 = vdwg.mxu0
        %v2579 = vrcp.pop %v2577
        %v2580 = vmul.f32 %v2577, %v2579
        %v2581 = vsub.f32 1.0, %v2580
        %v2582 = vmul.f32 %v2579, %v2581
        %v2583 = vadd.f32 %v2579, %v2582
        %vm2584 = vweird.f32 %v2577
        %vm2585 = vweird.f32 %v2579
        %vm2586 = vmor %vm2584, %vm2585
        %v2587 = vsel %vm2586, %v2579, %v2583
        %v2588 = vand.u32 2147483647, %v2577
        %vm2589 = vcmp.eq.f32.partialorder %v2588, 8.507059e+37
        %v2590 = vand.u32 %v2577, 2147483648
        %v2591 = vor.u32 1.1754944e-38, %v2590
        %v2592 = vsel %vm2589, %v2591, %v2587
        %v2593 = vmul.f32 %v2555, %v2592
        %v2594 = vmul.f32 %v2373, %v1358
        %v2595 = vmul.f32 %v2373, %v1359
        %v2596 = vmul.f32 %v2373, %v1360
        %v2597 = vmul.f32 %v2373, %v1361
        %v2598 = vmul.f32 %v2373, %v1362
        %v2599 = vmul.f32 %v2373, %v1363
        %v2600 = vmul.f32 %v2373, %v1364
        %v2601 = vmul.f32 %v2373, %v1365
        %v2603 = vsel %vm1726, %v2593, 0
        %2605 = vmatpush.msra.mxu0 0.0
        %2606 = vmatpush.msra.mxu0 0.0
        %2607 = vmatpush.msra.mxu0 0.0
        %2608 = vmatpush.msra.mxu0 0.0
        %2609 = vmatpush.msra.mxu0 0.0
        %2610 = vmatpush.msra.mxu0 0.0
        %2611 = vmatpush.msra.mxu0 0.0
        %2612 = vmatpush.msra.mxu0 0.0
        %2613 = vmatpush.msra.mxu0 %v2601
        %2614 = vmatpush.msra.mxu0 %v2600
        %2615 = vmatpush.msra.mxu0 %v2599
        %2616 = vmatpush.msra.mxu0 %v2598
        %2617 = vmatpush.msra.mxu0 %v2597
        %2618 = vmatpush.msra.mxu0 %v2596
        %2619 = vmatpush.msra.mxu0 %v2595
        %2620 = vmatpush.msra.mxu0 %v2594
        %2621 = vmatmul.f32.gmra.mxu0 %v2603
        %v2622 = vpop.f32.mrf.mxu0
        %v2623 = vadd.f32 0.0, %v2622
        %2624 = vdwg.mxu0
        %v2625 = vld [vmem:[%s43] sm:$0xff]
        %v2626 = vld [vmem:[%s43 + $0x8] sm:$0xff]
        %v2627 = vld [vmem:[%s43 + $0x10] sm:$0xff]
        %v2628 = vld [vmem:[%s43 + $0x18] sm:$0xff]
        %v2629 = vld [vmem:[%s45] sm:$0x1]
        %v2631 = vperm.slane %v2629, 0
        %v2634 = vsel %vm1406, %v2623, 0
        %2636 = vmatpush.msra.mxu0 0.0
        %2637 = vmatpush.msra.mxu0 0.0
        %2638 = vmatpush.msra.mxu0 0.0
        %2639 = vmatpush.msra.mxu0 0.0
        %2640 = vmatpush.msra.mxu0 0.0
        %2641 = vmatpush.msra.mxu0 0.0
        %2642 = vmatpush.msra.mxu0 0.0
        %2643 = vmatpush.msra.mxu0 0.0
        %2644 = vmatpush.msra.mxu0 0.0
        %2645 = vmatpush.msra.mxu0 0.0
        %2646 = vmatpush.msra.mxu0 0.0
        %2647 = vmatpush.msra.mxu0 0.0
        %2648 = vmatpush.msra.mxu0 %v2628
        %2649 = vmatpush.msra.mxu0 %v2627
        %2650 = vmatpush.msra.mxu0 %v2626
        %2651 = vmatpush.msra.mxu0 %v2625
        %2652 = vmatmul.f32.gmra.mxu0 %v2634
        %v2653 = vpop.f32.mrf.mxu0
        %v2654 = vadd.f32 %v2631, %v2653
        %2655 = vdwg.mxu0
        %v2656 = vadd.f32 %v2282, %v2654
        %v2657 = vsel %vm1406, %v2656, 0.0
        %2658 = vadd.xlane.f32.xlu0 %v2657
        %v2659 = vpop.xlane.xlu0 %2658
        %v2660 = vmul.f32 %v2659, %v1843
        %v2661 = vsub.f32 %v2656, %v2660
        %v2662 = vmul.f32 %v2661, %v2661
        %v2663 = vsel %vm1406, %v2662, 0.0
        %2664 = vadd.xlane.f32.xlu0 %v2663
        %v2665 = vpop.xlane.xlu0 %2664
        %v2666 = vmul.f32 %v2665, %v1843
        %v2667 = vadd.f32 %v2666, 1e-05
        %v2668 = vrsqrt.pop %v2667
        %v2669 = vmul.f32 %v2668, %v2667
        %v2670 = vmul.f32 %v2669, %v2668
        %v2671 = vmul.f32 0.5, %v2670
        %v2672 = vsub.f32 1.5, %v2671
        %v2673 = vmul.f32 %v2668, %v2672
        %vm2674 = vweird.f32 %v2667
        %vm2675 = vweird.f32 %v2668
        %vm2676 = vmor %vm2674, %vm2675
        %v2677 = vsel %vm2676, %v2668, %v2673
        %v2678 = vmul.f32 %v2661, %v2677
        %v2679 = vld [vmem:[%s51] sm:$0x1]
        %v2681 = vperm.slane %v2679, 0
        %v2683 = vmul.f32 %v2678, %v2681
        %v2684 = vld [vmem:[%s53] sm:$0x1]
        %v2686 = vperm.slane %v2684, 0
        %v2688 = vadd.f32 %v2683, %v2686
        %v2689 = vld [vmem:[#allocation25] sm:$0xff]
        %v2690 = vld [vmem:[#allocation25 + $0x8] sm:$0xff]
        %v2691 = vld [vmem:[#allocation25 + $0x10] sm:$0xff]
        %v2692 = vld [vmem:[#allocation25 + $0x18] sm:$0xff]
        %v2693 = vld [vmem:[%s61] sm:$0x1]
        %v2695 = vperm.slane %v2693, 0
        %v2698 = vsel %vm1406, %v2688, 0
        %2700 = vmatpush.msra.mxu0 0.0
        %2701 = vmatpush.msra.mxu0 0.0
        %2702 = vmatpush.msra.mxu0 0.0
        %2703 = vmatpush.msra.mxu0 0.0
        %2704 = vmatpush.msra.mxu0 0.0
        %2705 = vmatpush.msra.mxu0 0.0
        %2706 = vmatpush.msra.mxu0 0.0
        %2707 = vmatpush.msra.mxu0 0.0
        %2708 = vmatpush.msra.mxu0 0.0
        %2709 = vmatpush.msra.mxu0 0.0
        %2710 = vmatpush.msra.mxu0 0.0
        %2711 = vmatpush.msra.mxu0 0.0
        %2712 = vmatpush.msra.mxu0 %v2692
        %2713 = vmatpush.msra.mxu0 %v2691
        %2714 = vmatpush.msra.mxu0 %v2690
        %2715 = vmatpush.msra.mxu0 %v2689
        %2716 = vmatmul.f32.gmra.mxu0 %v2698
        %v2717 = vpop.f32.mrf.mxu0
        %v2718 = vadd.f32 %v2695, %v2717
        %2719 = vdwg.mxu0
        %v2720 = vmax.f32 %v2718, 0.0
        %v2721 = vld [vmem:[#allocation27] sm:$0xff]
        %v2722 = vld [vmem:[#allocation27 + $0x8] sm:$0xff]
        %v2723 = vld [vmem:[#allocation27 + $0x10] sm:$0xff]
        %v2724 = vld [vmem:[#allocation27 + $0x18] sm:$0xff]
        %v2725 = vld [vmem:[%s65] sm:$0x1]
        %v2727 = vperm.slane %v2725, 0
        %v2730 = vsel %vm1406, %v2720, 0
        %2732 = vmatpush.msra.mxu0 0.0
        %2733 = vmatpush.msra.mxu0 0.0
        %2734 = vmatpush.msra.mxu0 0.0
        %2735 = vmatpush.msra.mxu0 0.0
        %2736 = vmatpush.msra.mxu0 0.0
        %2737 = vmatpush.msra.mxu0 0.0
        %2738 = vmatpush.msra.mxu0 0.0
        %2739 = vmatpush.msra.mxu0 0.0
        %2740 = vmatpush.msra.mxu0 0.0
        %2741 = vmatpush.msra.mxu0 0.0
        %2742 = vmatpush.msra.mxu0 0.0
        %2743 = vmatpush.msra.mxu0 0.0
        %2744 = vmatpush.msra.mxu0 %v2724
        %2745 = vmatpush.msra.mxu0 %v2723
        %2746 = vmatpush.msra.mxu0 %v2722
        %2747 = vmatpush.msra.mxu0 %v2721
        %2748 = vmatmul.f32.gmra.mxu0 %v2730
        %v2749 = vpop.f32.mrf.mxu0
        %v2750 = vadd.f32 %v2727, %v2749
        %2751 = vdwg.mxu0
        %v2752 = vadd.f32 %v2688, %v2750
        %v2753 = vsel %vm1406, %v2752, 0.0
        %2754 = vadd.xlane.f32.xlu0 %v2753
        %v2755 = vpop.xlane.xlu0 %2754
        %v2756 = vmul.f32 %v2755, %v1843
        %v2757 = vsub.f32 %v2752, %v2756
        %v2758 = vmul.f32 %v2757, %v2757
        %v2759 = vsel %vm1406, %v2758, 0.0
        %2760 = vadd.xlane.f32.xlu0 %v2759
        %v2761 = vpop.xlane.xlu0 %2760
        %v2762 = vmul.f32 %v2761, %v1843
        %v2763 = vadd.f32 %v2762, 1e-05
        %v2764 = vrsqrt.pop %v2763
        %v2765 = vmul.f32 %v2764, %v2763
        %v2766 = vmul.f32 %v2765, %v2764
        %v2767 = vmul.f32 0.5, %v2766
        %v2768 = vsub.f32 1.5, %v2767
        %v2769 = vmul.f32 %v2764, %v2768
        %vm2770 = vweird.f32 %v2763
        %vm2771 = vweird.f32 %v2764
        %vm2772 = vmor %vm2770, %vm2771
        %v2773 = vsel %vm2772, %v2764, %v2769
        %v2774 = vmul.f32 %v2757, %v2773
        %v2775 = vld [vmem:[%s55] sm:$0x1]
        %v2777 = vperm.slane %v2775, 0
        %v2779 = vmul.f32 %v2774, %v2777
        %v2780 = vld [vmem:[%s57] sm:$0x1]
        %v2782 = vperm.slane %v2780, 0
        %v2784 = vadd.f32 %v2779, %v2782
        %v2785 = vld [vmem:[%s67] sm:$0xff]
        %v2786 = vld [vmem:[%s67 + $0x8] sm:$0xff]
        %v2787 = vld [vmem:[%s67 + $0x10] sm:$0xff]
        %v2788 = vld [vmem:[%s67 + $0x18] sm:$0xff]
        %v2789 = vld [vmem:[%s69] sm:$0x1]
        %v2791 = vperm.slane %v2789, 0
        %v2794 = vsel %vm1406, %v2784, 0
        %2796 = vmatpush.msra.mxu0 0.0
        %2797 = vmatpush.msra.mxu0 0.0
        %2798 = vmatpush.msra.mxu0 0.0
        %2799 = vmatpush.msra.mxu0 0.0
        %2800 = vmatpush.msra.mxu0 0.0
        %2801 = vmatpush.msra.mxu0 0.0
        %2802 = vmatpush.msra.mxu0 0.0
        %2803 = vmatpush.msra.mxu0 0.0
        %2804 = vmatpush.msra.mxu0 0.0
        %2805 = vmatpush.msra.mxu0 0.0
        %2806 = vmatpush.msra.mxu0 0.0
        %2807 = vmatpush.msra.mxu0 0.0
        %2808 = vmatpush.msra.mxu0 %v2788
        %2809 = vmatpush.msra.mxu0 %v2787
        %2810 = vmatpush.msra.mxu0 %v2786
        %2811 = vmatpush.msra.mxu0 %v2785
        %2812 = vmatmul.f32.gmra.mxu0 %v2794
        %v2813 = vpop.f32.mrf.mxu0
        %v2814 = vadd.f32 %v2791, %v2813
        %2815 = vdwg.mxu0
        %2816 = vst.msk [vmem:[%s1345] sm:$0xff] %vm1670, %v2814
        %p2817 = scmp.lt.s32.totalorder %s91, 1
        %s2818 = scalar_select %p2817, %s91, 1
        %s2819 = smul.addr %s2818, 8
        %s2820 = scalar_lea.vmem %s71, %s2819
        // Predicated region
        $region229: #{transformer_forward_pallas.1} parent=159 // pred_check
          %p2821 = pneg %p854
        $region230: #{transformer_forward_pallas.1} parent=159 // pred_check_branch
          %2823 = sbr.rel (%p2821) target = $region232
        $region231: #{transformer_forward_pallas.1} parent=159 // pred_region
          _
        $region232: #{transformer_forward_pallas.1} parent=159 // pred_fallthru
          _
      $region160: #{transformer_forward_pallas.1} parent=5 // pred_fallthru
        _
      %p2824 = scmp.le.s32.totalorder 2, %s86
      // Predicated region
      $region233: #{transformer_forward_pallas.1} parent=5 // pred_check
        %p2825 = pneg %p2824
      $region234: #{transformer_forward_pallas.1} parent=5 // pred_check_branch
        %2827 = sbr.rel (%p2825) target = $region236
      $region235: #{transformer_forward_pallas.1} parent=5 // pred_region
        %s2828 = ssub.s32 %s86, 2
        // Predicated region
        $region237: #{transformer_forward_pallas.1} parent=235 // pred_check
          %p2829 = pneg %p860
        $region238: #{transformer_forward_pallas.1} parent=235 // pred_check_branch
          %2831 = sbr.rel (%p2829) target = $region240
        $region239: #{transformer_forward_pallas.1} parent=235 // pred_region
          %p2832 = scmp.lt.s32.totalorder %s92, 1
          %s2833 = scalar_select %p2832, %s92, 1
          %s2834 = smul.addr %s2833, 8
          %s2835 = scalar_lea.vmem %s71, %s2834
        $region240: #{transformer_forward_pallas.1} parent=235 // pred_fallthru
          _
      $region236: #{transformer_forward_pallas.1} parent=5 // pred_fallthru
        _
    $region6: #{transformer_forward_pallas.1} parent=1 // loop_footer
      %s90 = sadd.s32 1, %s86
    $region7: #{transformer_forward_pallas.1} parent=1 // loop_footer_branch
      %85 = sbr.rel target = $region3
    $region8: #{transformer_forward_pallas.1} parent=1 // loop_exit
      _
    %2836 = vsyncpa [#allocation3], 1
    %s2837 = scalar_lea.sflag [#allocation3], 1
    %2838 = vsyncpa %s2837, 1
    %2839 = vsyncpa [#allocation5], 1
    %2840 = vsyncpa [#allocation8], 1
    %2841 = vsyncpa [#allocation11], 1
    %2842 = vsyncpa [#allocation14], 1
    %2843 = vsyncpa [#allocation17], 1
    %2844 = vsyncpa [#allocation20], 1
    %2845 = vsyncpa [#allocation23], 1
    %2846 = vsyncpa [#allocation26], 1

</llo_original>
